<compile_context>
chip_gen: v6e
topology: v6e:2x2x1
jax: 0.10.0
libtpu: 0.0.40
codegen_flags: <defaults>
</compile_context>

<pallas_src>
import functools

import jax
import jax.numpy as jnp
from jax import lax
from jax.experimental import pallas as pl
from jax.experimental.pallas import tpu as pltpu

# ----------------------------------------------------------------------------
# Synthetic configuration (small shapes)
# ----------------------------------------------------------------------------
BATCH_SIZE = 2
NUM_RAW_POINTS_PER_BATCH = 64
NUM_KEYPOINTS = 32                       # model_cfg.NUM_KEYPOINTS
NUM_BEV_FEATURES = 32                    # spatial_features channels
BEV_STRIDE = 4
VOXEL_SIZE = (0.25, 0.25, 0.125)
POINT_CLOUD_RANGE = (0.0, 0.0, -2.0, 16.0, 16.0, 2.0)
BEV_H = 16
BEV_W = 16

NSAMPLE = 16
RAW_RADIUS = 2.0
CONV4_RADIUS = 4.0
CONV4_DOWNSAMPLE = 8
NUM_CONV4_VOXELS_PER_BATCH = 48
CONV4_NUM_FEATURES = 16
RAW_POINT_EXTRA_FEATURES = 1             # num_rawpoint_features - 3

SA_HIDDEN = 32
SA_OUT = 64
C_IN_FUSION = NUM_BEV_FEATURES + SA_OUT + SA_OUT   # 160 = num_point_features_before_fusion
NUM_OUTPUT_FEATURES = 128                # model_cfg.NUM_OUTPUT_FEATURES
BN_EPS = 1e-5

KEYPOINT_TILE = 32                       # keypoint tile per grid step (parallel axis)


# ----------------------------------------------------------------------------
# Fused Pallas kernel: BEV 4-corner combine + 2x SA(MLP+ReLU+maxpool) + fusion
# ----------------------------------------------------------------------------
def _vsa_fused_kernel(corners_ref, wts_ref, graw_ref, gc4_ref,
                      rw1_ref, rb1_ref, rw2_ref, rb2_ref,
                      cw1_ref, cb1_ref, cw2_ref, cb2_ref,
                      fwb_ref, fwr_ref, fwc_ref, fb_ref,
                      pbf_ref, pf_ref, *, tm, nsample):
    cbev = corners_ref.shape[-1]

    # --- 'bev' source: bilinear = 4-corner weighted sum (weights are (tm,1) VPU muls;
    #     the data-dependent row gather happened in the wrapper, not via a one-hot matmul)
    bev = (wts_ref[0] * corners_ref[0] + wts_ref[1] * corners_ref[1]
           + wts_ref[2] * corners_ref[2] + wts_ref[3] * corners_ref[3])     # (tm, Cbev)

    # --- shared PointNet MLP (1x1 conv, BN folded into w/b) + ReLU, then max over nsample
    def sa_branch(g_ref, w1_ref, b1_ref, w2_ref, b2_ref):
        x = g_ref[...]                                                      # (tm*nsample, cin)
        h = jnp.dot(x, w1_ref[...], preferred_element_type=jnp.float32) + b1_ref[...]
        h = jnp.maximum(h, 0.0)
        h = jnp.dot(h, w2_ref[...], preferred_element_type=jnp.float32) + b2_ref[...]
        h = jnp.maximum(h, 0.0)
        # pure leading-dim split -> free layout; max over neighbours
        return jnp.max(h.reshape(tm, nsample, h.shape[-1]), axis=1)         # (tm, SA_OUT)

    f_raw = sa_branch(graw_ref, rw1_ref, rb1_ref, rw2_ref, rb2_ref)
    f_c4 = sa_branch(gc4_ref, cw1_ref, cb1_ref, cw2_ref, cb2_ref)

    # --- vsa_point_feature_fusion: Linear(no bias) + BN(folded) + ReLU.
    #     Weight pre-split per source in the wrapper -> fusion consumes the register
    #     values directly (no read-back of the before-fusion slab from VMEM).
    acc = jnp.dot(bev, fwb_ref[...], preferred_element_type=jnp.float32)
    acc = acc + jnp.dot(f_raw, fwr_ref[...], preferred_element_type=jnp.float32)
    acc = acc + jnp.dot(f_c4, fwc_ref[...], preferred_element_type=jnp.float32)
    pf_ref[...] = jnp.maximum(acc + fb_ref[...], 0.0)                       # (tm, 128)

    # --- lane-dense before-fusion slab (reference column order: bev | raw_points | x_conv4);
    #     written last, off the MXU critical path.
    c_raw = f_raw.shape[-1]
    pbf_ref[:, 0:cbev] = bev
    pbf_ref[:, cbev:cbev + c_raw] = f_raw
    pbf_ref[:, cbev + c_raw:] = f_c4


def vsa_fused(corners, wts, graw_flat, gc4_flat,
              sa_raw_folded, sa_c4_folded, fusion_folded, *, tm=KEYPOINT_TILE):
    _, m, cbev = corners.shape
    mns, cin_raw = graw_flat.shape
    _, cin_c4 = gc4_flat.shape
    nsample = mns // m
    rw1, rb1, rw2, rb2 = sa_raw_folded
    cw1, cb1, cw2, cb2 = sa_c4_folded
    fw, fb = fusion_folded
    c_fused, c_out = fw.shape
    c_raw = rw2.shape[1]
    c_c4 = cw2.shape[1]
    assert c_fused == cbev + c_raw + c_c4
    assert m % tm == 0
    grid = (m // tm,)

    # split fusion weight per source (aligned, full blocks; lets the kernel fuse from registers)
    fw_bev = fw[:cbev]
    fw_raw = fw[cbev:cbev + c_raw]
    fw_c4 = fw[cbev + c_raw:]

    def full(shape):
        return pl.BlockSpec(shape, lambda i, _s=len(shape): (0,) * _s)

    flops = 2 * (mns * cin_raw * rw1.shape[1] + mns * rw1.shape[1] * rw2.shape[1]
                 + mns * cin_c4 * cw1.shape[1] + mns * cw1.shape[1] * cw2.shape[1]
                 + m * c_fused * c_out) + 8 * m * cbev
    bytes_accessed = 4 * (corners.size + wts.size + graw_flat.size + gc4_flat.size
                          + sum(int(p.size) for p in (rw1, rb1, rw2, rb2,
                                                      cw1, cb1, cw2, cb2, fw, fb))
                          + m * c_fused + m * c_out)

    pbf, pf = pl.pallas_call(
        functools.partial(_vsa_fused_kernel, tm=tm, nsample=nsample),
        out_shape=(jax.ShapeDtypeStruct((m, c_fused), jnp.float32),
                   jax.ShapeDtypeStruct((m, c_out), jnp.float32)),
        grid=grid,
        in_specs=[pl.BlockSpec((4, tm, cbev), lambda i: (0, i, 0)),
                  pl.BlockSpec((4, tm, 1), lambda i: (0, i, 0)),
                  pl.BlockSpec((tm * nsample, cin_raw), lambda i: (i, 0)),
                  pl.BlockSpec((tm * nsample, cin_c4), lambda i: (i, 0)),
                  full(rw1.shape), full(rb1.shape), full(rw2.shape), full(rb2.shape),
                  full(cw1.shape), full(cb1.shape), full(cw2.shape), full(cb2.shape),
                  full(fw_bev.shape), full(fw_raw.shape), full(fw_c4.shape), full(fb.shape)],
        out_specs=(pl.BlockSpec((tm, c_fused), lambda i: (i, 0)),
                   pl.BlockSpec((tm, c_out), lambda i: (i, 0))),
        compiler_params=pltpu.CompilerParams(
            dimension_semantics=("parallel",),
            vmem_limit_bytes=32 * 1024 * 1024),
        cost_estimate=pl.CostEstimate(flops=int(flops), transcendentals=0,
                                      bytes_accessed=int(bytes_accessed)),
    )(corners, wts, graw_flat, gc4_flat,
      rw1, rb1, rw2, rb2, cw1, cb1, cw2, cb2, fw_bev, fw_raw, fw_c4, fb)
    return pbf, pf


# ----------------------------------------------------------------------------
# JAX glue (non-Pallas): FPS, ball-query grouping, voxel centers, BEV gather, BN fold
# ----------------------------------------------------------------------------
def farthest_point_sample(points_xyz, num_samples):
    """Sequential FPS, first index = 0 (matches pointnet2 CUDA op). JAX glue."""
    n = points_xyz.shape[0]

    def body(i, state):
        idxs, dists, last = state
        d = jnp.sum((points_xyz - points_xyz[last]) ** 2, axis=1)
        dists = jnp.minimum(dists, d)
        nxt = jnp.argmax(dists).astype(jnp.int32)
        idxs = idxs.at[i].set(nxt)
        return idxs, dists, nxt

    idxs0 = jnp.zeros((num_samples,), jnp.int32)
    dists0 = jnp.full((n,), 1e10, jnp.float32)
    idxs, _, _ = lax.fori_loop(1, num_samples, body, (idxs0, dists0, jnp.int32(0)))
    return idxs


def get_voxel_centers(voxel_coords_zyx, downsample_times, voxel_size, pc_range):
    coords_xyz = voxel_coords_zyx[:, ::-1].astype(jnp.float32)
    vs = jnp.asarray(voxel_size, jnp.float32) * downsample_times
    return (coords_xyz + 0.5) * vs + jnp.asarray(pc_range[:3], jnp.float32)


def ball_group(new_xyz, new_bs, xyz, xyz_bs, features, radius, nsample):
    """Ball query (first nsample within radius, repeat first if short) + grouping.
    Returns flattened (M*nsample, 3 + C) channel-last grouped features."""
    n = xyz.shape[0]
    m = new_xyz.shape[0]
    d2 = jnp.sum((new_xyz[:, None, :] - xyz[None, :, :]) ** 2, axis=-1)      # (M, N)
    same_batch = new_bs.astype(jnp.int32)[:, None] == xyz_bs.astype(jnp.int32)[None, :]
    within = (d2 < radius * radius) & same_batch
    order = jnp.where(within, jnp.arange(n, dtype=jnp.int32)[None, :], n)
    sidx = jnp.sort(order, axis=1)[:, :nsample]
    cnt = jnp.sum(within.astype(jnp.int32), axis=1)
    slots = jnp.arange(nsample, dtype=jnp.int32)[None, :]
    idx = jnp.where(slots < cnt[:, None], sidx, sidx[:, :1])
    empty = cnt == 0
    idx = jnp.where(empty[:, None], 0, idx)
    g_xyz = xyz[idx] - new_xyz[:, None, :]                                   # (M, ns, 3)
    g_feat = features[idx]                                                   # (M, ns, C)
    grouped = jnp.concatenate([g_xyz, g_feat], axis=-1)
    grouped = jnp.where(empty[:, None, None], 0.0, grouped)                  # empty-ball -> 0
    return grouped.reshape(m * nsample, -1)


def bev_corner_gather(keypoints, spatial_features):
    """Data-dependent 4-corner row gather for bilinear interpolation (plain-JAX glue).
    Returns corners (4, M, C) and weights (4, M, 1); the weighted sum runs in-kernel.
    Matches bilinear_interpolate_torch (weights computed with clamped corner coords)."""
    B, C, H, W = spatial_features.shape
    bev = jnp.transpose(spatial_features, (0, 2, 3, 1)).reshape(B * H * W, C)
    bs = keypoints[:, 0].astype(jnp.int32)
    x = (keypoints[:, 1] - POINT_CLOUD_RANGE[0]) / VOXEL_SIZE[0] / BEV_STRIDE
    y = (keypoints[:, 2] - POINT_CLOUD_RANGE[1]) / VOXEL_SIZE[1] / BEV_STRIDE

    x0 = jnp.floor(x)
    y0 = jnp.floor(y)
    x0c = jnp.clip(x0, 0.0, W - 1.0)
    x1c = jnp.clip(x0 + 1.0, 0.0, W - 1.0)
    y0c = jnp.clip(y0, 0.0, H - 1.0)
    y1c = jnp.clip(y0 + 1.0, 0.0, H - 1.0)

    def flat_idx(yc, xc):
        return bs * (H * W) + yc.astype(jnp.int32) * W + xc.astype(jnp.int32)

    corners = jnp.stack([bev[flat_idx(y0c, x0c)],       # Ia
                         bev[flat_idx(y1c, x0c)],       # Ib
                         bev[flat_idx(y0c, x1c)],       # Ic
                         bev[flat_idx(y1c, x1c)]],      # Id
                        axis=0)                          # (4, M, C)
    wa = (x1c - x) * (y1c - y)
    wb = (x1c - x) * (y - y0c)
    wc = (x - x0c) * (y1c - y)
    wd = (x - x0c) * (y - y0c)
    wts = jnp.stack([wa, wb, wc, wd], axis=0)[..., None]   # (4, M, 1)
    return corners, wts.astype(jnp.float32)


def fold_bn(w, bn):
    """Fold eval-mode BatchNorm (gamma, beta, running mean/var) into matmul w + bias."""
    gamma, beta, rmean, rvar = bn
    scale = gamma * lax.rsqrt(rvar + BN_EPS)     # (1, C)
    return w * scale, beta - rmean * scale


def _fold_sa(p):
    w1, b1 = fold_bn(p['w1'], p['bn1'])
    w2, b2 = fold_bn(p['w2'], p['bn2'])
    return w1, b1, w2, b2


# ----------------------------------------------------------------------------
# Forward pass
# ----------------------------------------------------------------------------
def point_features_abstraction_forward(batch_dict, params):
    points = batch_dict['points']                      # (N, 5): [bs, x, y, z, intensity]
    spatial_features = batch_dict['spatial_features']  # (B, C, H, W)  NCHW
    voxel_coords = batch_dict['x_conv4_coords']        # (Nv, 4): [bs, z, y, x]
    voxel_features = batch_dict['x_conv4_features']    # (Nv, C)
    batch_size = batch_dict['batch_size']
    _h_img, _w_img = batch_dict['images'].shape[2:]    # read for parity with forward(); unused
    # TODO(synk): img_conv3/4/5 sources need calib.lidar_to_img camera projection + RoI/SPC
    # sampling paths; no clean Pallas equivalent, not translated.

    # --- get_sampled_points (POINT_SOURCE='raw_points', SAMPLE_METHOD='FPS')
    pts_xyz = points[:, 1:4].reshape(batch_size, -1, 3)
    kp_idx = jax.vmap(lambda p: farthest_point_sample(p, NUM_KEYPOINTS))(pts_xyz)
    kp_xyz = jnp.take_along_axis(pts_xyz, kp_idx[..., None], axis=1)         # (B, NK, 3)
    batch_col = jnp.repeat(jnp.arange(batch_size, dtype=jnp.float32), NUM_KEYPOINTS)[:, None]
    keypoints = jnp.concatenate([batch_col, kp_xyz.reshape(-1, 3)], axis=1)  # (M, 4)

    new_xyz = keypoints[:, 1:4]
    new_bs = keypoints[:, 0]

    # --- 'bev' source: corner gather (glue); weighted combine happens inside the fused kernel
    corners, wts = bev_corner_gather(keypoints, spatial_features)

    # --- 'raw_points' / 'x_conv4' grouping (glue), flattened to (M*nsample, cin)
    graw_flat = ball_group(new_xyz, new_bs, points[:, 1:4], points[:, 0],
                           points[:, 4:], RAW_RADIUS, NSAMPLE)
    conv4_xyz = get_voxel_centers(voxel_coords[:, 1:4], CONV4_DOWNSAMPLE,
                                  VOXEL_SIZE, POINT_CLOUD_RANGE)
    gc4_flat = ball_group(new_xyz, new_bs, conv4_xyz, voxel_coords[:, 0],
                          voxel_features, CONV4_RADIUS, NSAMPLE)

    # --- inference-mode BN folding (removes in-kernel batch-stat reductions and the
    #     cross-keypoint dependency, enabling the parallel keypoint-tile grid)
    sa_raw_f = _fold_sa(params['sa_raw'])
    sa_c4_f = _fold_sa(params['sa_conv4'])
    fusion_f = fold_bn(params['fusion']['w'], params['fusion']['bn'])

    # --- single fused Pallas kernel
    pbf, pf = vsa_fused(corners, wts, graw_flat, gc4_flat, sa_raw_f, sa_c4_f, fusion_f)

    return {
        'point_features_before_fusion': pbf,   # (M, 160)
        'point_features': pf,                  # (M, 128)
        'point_coords': keypoints,             # (M, 4)
    }


# ----------------------------------------------------------------------------
# Deterministic parameter init (synthetic, not a checkpoint)
# ----------------------------------------------------------------------------
def _bn_params(key, c):
    k1, k2, k3, k4 = jax.random.split(key, 4)
    gamma = 1.0 + 0.1 * jax.random.normal(k1, (1, c), jnp.float32)
    beta = 0.05 * jax.random.normal(k2, (1, c), jnp.float32)
    rmean = 0.1 * jax.random.normal(k3, (1, c), jnp.float32)
    rvar = jax.random.uniform(k4, (1, c), jnp.float32, minval=0.5, maxval=1.5)
    return gamma, beta, rmean, rvar


def _sa_params(key, cin):
    k1, k2, k3, k4 = jax.random.split(key, 4)
    return {
        'w1': 0.1 * jax.random.normal(k1, (cin, SA_HIDDEN), jnp.float32),
        'bn1': _bn_params(k2, SA_HIDDEN),
        'w2': 0.1 * jax.random.normal(k3, (SA_HIDDEN, SA_OUT), jnp.float32),
        'bn2': _bn_params(k4, SA_OUT),
    }


def _fusion_params(key):
    k1, k2 = jax.random.split(key)
    return {
        'w': 0.05 * jax.random.normal(k1, (C_IN_FUSION, NUM_OUTPUT_FEATURES), jnp.float32),
        'bn': _bn_params(k2, NUM_OUTPUT_FEATURES),
    }


# ----------------------------------------------------------------------------
# Main
# ----------------------------------------------------------------------------
if __name__ == "__main__":
    key = jax.random.PRNGKey(0)
    k_pts, k_int, k_bev, k_vc, k_vf, k_par = jax.random.split(key, 6)
    B = BATCH_SIZE

    # raw points: (N, 5) = [bs_idx, x, y, z, intensity]
    n_pts = B * NUM_RAW_POINTS_PER_BATCH
    xyz = jax.random.uniform(k_pts, (n_pts, 3), jnp.float32,
                             minval=jnp.array([0.5, 0.5, -1.5], jnp.float32),
                             maxval=jnp.array([15.5, 15.5, 1.5], jnp.float32))
    intensity = jax.random.uniform(k_int, (n_pts, 1), jnp.float32)
    bs_col = jnp.repeat(jnp.arange(B, dtype=jnp.float32), NUM_RAW_POINTS_PER_BATCH)[:, None]
    points = jnp.concatenate([bs_col, xyz, intensity], axis=1)

    # BEV spatial features (NCHW)
    spatial_features = jax.random.normal(k_bev, (B, NUM_BEV_FEATURES, BEV_H, BEV_W), jnp.float32)

    # x_conv4 sparse voxel coords [bs, z, y, x] at 8x downsample + features
    n_vox = B * NUM_CONV4_VOXELS_PER_BATCH
    kz, ky, kx = jax.random.split(k_vc, 3)
    vz = jax.random.randint(kz, (n_vox, 1), 0, 4, jnp.int32)
    vy = jax.random.randint(ky, (n_vox, 1), 0, 8, jnp.int32)
    vx = jax.random.randint(kx, (n_vox, 1), 0, 8, jnp.int32)
    vbs = jnp.repeat(jnp.arange(B, dtype=jnp.int32), NUM_CONV4_VOXELS_PER_BATCH)[:, None]
    x_conv4_coords = jnp.concatenate([vbs, vz, vy, vx], axis=1)
    x_conv4_features = jax.random.normal(k_vf, (n_vox, CONV4_NUM_FEATURES), jnp.float32)

    # dummy camera inputs (present in batch_dict for forward() parity; img sources unused)
    images = jnp.zeros((B, 3, 32, 32), jnp.float32)

    params = {
        'sa_raw': _sa_params(jax.random.fold_in(k_par, 0), 3 + RAW_POINT_EXTRA_FEATURES),
        'sa_conv4': _sa_params(jax.random.fold_in(k_par, 1), 3 + CONV4_NUM_FEATURES),
        'fusion': _fusion_params(jax.random.fold_in(k_par, 2)),
    }

    batch_dict = {
        'batch_size': B,
        'points': points,
        'spatial_features': spatial_features,
        'spatial_features_stride': BEV_STRIDE,
        'x_conv4_coords': x_conv4_coords,
        'x_conv4_features': x_conv4_features,
        'images': images,
    }

    out = point_features_abstraction_forward(batch_dict, params)
    jax.block_until_ready(out['point_features'])

    assert out['point_features'].shape == (B * NUM_KEYPOINTS, NUM_OUTPUT_FEATURES)
    assert out['point_features_before_fusion'].shape == (B * NUM_KEYPOINTS, C_IN_FUSION)
    assert out['point_coords'].shape == (B * NUM_KEYPOINTS, 4)
    assert bool(jnp.all(jnp.isfinite(out['point_features'])))
    assert bool(jnp.all(jnp.isfinite(out['point_features_before_fusion'])))
    print("KERNEL_OK")
</pallas_src>

<mosaic_0001>
module attributes {stable_mosaic.version = 11 : i64} {
  func.func @_vsa_fused_kernel(%arg0: i32, %arg1: memref<4x32x32xf32, #tpu.memory_space<vmem>>, %arg2: memref<4x32x1xf32, #tpu.memory_space<vmem>>, %arg3: memref<512x4xf32, #tpu.memory_space<vmem>>, %arg4: memref<512x19xf32, #tpu.memory_space<vmem>>, %arg5: memref<4x32xf32, #tpu.memory_space<vmem>>, %arg6: memref<1x32xf32, #tpu.memory_space<vmem>>, %arg7: memref<32x64xf32, #tpu.memory_space<vmem>>, %arg8: memref<1x64xf32, #tpu.memory_space<vmem>>, %arg9: memref<19x32xf32, #tpu.memory_space<vmem>>, %arg10: memref<1x32xf32, #tpu.memory_space<vmem>>, %arg11: memref<32x64xf32, #tpu.memory_space<vmem>>, %arg12: memref<1x64xf32, #tpu.memory_space<vmem>>, %arg13: memref<32x128xf32, #tpu.memory_space<vmem>>, %arg14: memref<64x128xf32, #tpu.memory_space<vmem>>, %arg15: memref<64x128xf32, #tpu.memory_space<vmem>>, %arg16: memref<1x128xf32, #tpu.memory_space<vmem>>, %arg17: memref<32x160xf32, #tpu.memory_space<vmem>>, %arg18: memref<32x128xf32, #tpu.memory_space<vmem>>) attributes {dimension_semantics = [#tpu.dimension_semantics<parallel>], iteration_bounds = array<i64: 2>, scalar_prefetch = 0 : i64, scratch_operands = 0 : i64, tpu.core_type = #tpu.core_type<tc>, window_params = [{transform_indices = @transform_0, window_bounds = array<i64: 4, 32, 32>}, {transform_indices = @transform_1, window_bounds = array<i64: 4, 32, 1>}, {transform_indices = @transform_2, window_bounds = array<i64: 512, 4>}, {transform_indices = @transform_3, window_bounds = array<i64: 512, 19>}, {pipeline_mode = #tpu.pipeline_mode<synchronous>, transform_indices = @transform_4, window_bounds = array<i64: 4, 32>}, {pipeline_mode = #tpu.pipeline_mode<synchronous>, transform_indices = @transform_5, window_bounds = array<i64: 1, 32>}, {pipeline_mode = #tpu.pipeline_mode<synchronous>, transform_indices = @transform_6, window_bounds = array<i64: 32, 64>}, {pipeline_mode = #tpu.pipeline_mode<synchronous>, transform_indices = @transform_7, window_bounds = array<i64: 1, 64>}, {pipeline_mode = #tpu.pipeline_mode<synchronous>, transform_indices = @transform_8, window_bounds = array<i64: 19, 32>}, {pipeline_mode = #tpu.pipeline_mode<synchronous>, transform_indices = @transform_9, window_bounds = array<i64: 1, 32>}, {pipeline_mode = #tpu.pipeline_mode<synchronous>, transform_indices = @transform_10, window_bounds = array<i64: 32, 64>}, {pipeline_mode = #tpu.pipeline_mode<synchronous>, transform_indices = @transform_11, window_bounds = array<i64: 1, 64>}, {pipeline_mode = #tpu.pipeline_mode<synchronous>, transform_indices = @transform_12, window_bounds = array<i64: 32, 128>}, {pipeline_mode = #tpu.pipeline_mode<synchronous>, transform_indices = @transform_13, window_bounds = array<i64: 64, 128>}, {pipeline_mode = #tpu.pipeline_mode<synchronous>, transform_indices = @transform_14, window_bounds = array<i64: 64, 128>}, {pipeline_mode = #tpu.pipeline_mode<synchronous>, transform_indices = @transform_15, window_bounds = array<i64: 1, 128>}, {transform_indices = @transform_16, window_bounds = array<i64: 32, 160>}, {transform_indices = @transform_17, window_bounds = array<i64: 32, 128>}]} {
    %c0 = arith.constant 0 : index
    %c0_0 = arith.constant 0 : index
    %c0_1 = arith.constant 0 : index
    %0 = vector.load %arg2[%c0, %c0_0, %c0_1] : memref<4x32x1xf32, #tpu.memory_space<vmem>>, vector<1x32x1xf32>
    %1 = vector.shape_cast %0 : vector<1x32x1xf32> to vector<32x1xf32>
    %c0_2 = arith.constant 0 : index
    %c0_3 = arith.constant 0 : index
    %c0_4 = arith.constant 0 : index
    %2 = vector.load %arg1[%c0_2, %c0_3, %c0_4] : memref<4x32x32xf32, #tpu.memory_space<vmem>>, vector<1x32x32xf32>
    %3 = vector.shape_cast %2 : vector<1x32x32xf32> to vector<32x32xf32>
    %4 = vector.broadcast %1 : vector<32x1xf32> to vector<32x32xf32>
    %5 = arith.mulf %4, %3 : vector<32x32xf32>
    %c1 = arith.constant 1 : index
    %c0_5 = arith.constant 0 : index
    %c0_6 = arith.constant 0 : index
    %6 = vector.load %arg2[%c1, %c0_5, %c0_6] : memref<4x32x1xf32, #tpu.memory_space<vmem>>, vector<1x32x1xf32>
    %7 = vector.shape_cast %6 : vector<1x32x1xf32> to vector<32x1xf32>
    %c1_7 = arith.constant 1 : index
    %c0_8 = arith.constant 0 : index
    %c0_9 = arith.constant 0 : index
    %8 = vector.load %arg1[%c1_7, %c0_8, %c0_9] : memref<4x32x32xf32, #tpu.memory_space<vmem>>, vector<1x32x32xf32>
    %9 = vector.shape_cast %8 : vector<1x32x32xf32> to vector<32x32xf32>
    %10 = vector.broadcast %7 : vector<32x1xf32> to vector<32x32xf32>
    %11 = arith.mulf %10, %9 : vector<32x32xf32>
    %12 = arith.addf %5, %11 : vector<32x32xf32>
    %c2 = arith.constant 2 : index
    %c0_10 = arith.constant 0 : index
    %c0_11 = arith.constant 0 : index
    %13 = vector.load %arg2[%c2, %c0_10, %c0_11] : memref<4x32x1xf32, #tpu.memory_space<vmem>>, vector<1x32x1xf32>
    %14 = vector.shape_cast %13 : vector<1x32x1xf32> to vector<32x1xf32>
    %c2_12 = arith.constant 2 : index
    %c0_13 = arith.constant 0 : index
    %c0_14 = arith.constant 0 : index
    %15 = vector.load %arg1[%c2_12, %c0_13, %c0_14] : memref<4x32x32xf32, #tpu.memory_space<vmem>>, vector<1x32x32xf32>
    %16 = vector.shape_cast %15 : vector<1x32x32xf32> to vector<32x32xf32>
    %17 = vector.broadcast %14 : vector<32x1xf32> to vector<32x32xf32>
    %18 = arith.mulf %17, %16 : vector<32x32xf32>
    %19 = arith.addf %12, %18 : vector<32x32xf32>
    %c3 = arith.constant 3 : index
    %c0_15 = arith.constant 0 : index
    %c0_16 = arith.constant 0 : index
    %20 = vector.load %arg2[%c3, %c0_15, %c0_16] : memref<4x32x1xf32, #tpu.memory_space<vmem>>, vector<1x32x1xf32>
    %21 = vector.shape_cast %20 : vector<1x32x1xf32> to vector<32x1xf32>
    %c3_17 = arith.constant 3 : index
    %c0_18 = arith.constant 0 : index
    %c0_19 = arith.constant 0 : index
    %22 = vector.load %arg1[%c3_17, %c0_18, %c0_19] : memref<4x32x32xf32, #tpu.memory_space<vmem>>, vector<1x32x32xf32>
    %23 = vector.shape_cast %22 : vector<1x32x32xf32> to vector<32x32xf32>
    %24 = vector.broadcast %21 : vector<32x1xf32> to vector<32x32xf32>
    %25 = arith.mulf %24, %23 : vector<32x32xf32>
    %26 = arith.addf %19, %25 : vector<32x32xf32>
    %c0_20 = arith.constant 0 : index
    %c0_21 = arith.constant 0 : index
    %27 = vector.load %arg3[%c0_20, %c0_21] : memref<512x4xf32, #tpu.memory_space<vmem>>, vector<512x4xf32>
    %c0_22 = arith.constant 0 : index
    %c0_23 = arith.constant 0 : index
    %28 = vector.load %arg5[%c0_22, %c0_23] : memref<4x32xf32, #tpu.memory_space<vmem>>, vector<4x32xf32>
    %cst = arith.constant dense<0.000000e+00> : vector<512x32xf32>
    %29 = tpu.matmul %27, %28, %cst {dimension_numbers = #tpu.dot_dimension_numbers<[1], [0], [0], [1], [0, 0, 1, 1], [], []>} : vector<512x4xf32>, vector<4x32xf32>, vector<512x32xf32> -> vector<512x32xf32>
    %c0_24 = arith.constant 0 : index
    %c0_25 = arith.constant 0 : index
    %30 = vector.load %arg6[%c0_24, %c0_25] : memref<1x32xf32, #tpu.memory_space<vmem>>, vector<1x32xf32>
    %31 = vector.broadcast %30 : vector<1x32xf32> to vector<512x32xf32>
    %32 = arith.addf %29, %31 : vector<512x32xf32>
    %cst_26 = arith.constant 0.000000e+00 : f32
    %33 = vector.broadcast %cst_26 : f32 to vector<512x32xf32>
    %34 = arith.maximumf %32, %33 : vector<512x32xf32>
    %c0_27 = arith.constant 0 : index
    %c0_28 = arith.constant 0 : index
    %35 = vector.load %arg7[%c0_27, %c0_28] : memref<32x64xf32, #tpu.memory_space<vmem>>, vector<32x64xf32>
    %cst_29 = arith.constant dense<0.000000e+00> : vector<512x64xf32>
    %36 = tpu.matmul %34, %35, %cst_29 {dimension_numbers = #tpu.dot_dimension_numbers<[1], [0], [0], [1], [0, 0, 1, 1], [], []>} : vector<512x32xf32>, vector<32x64xf32>, vector<512x64xf32> -> vector<512x64xf32>
    %c0_30 = arith.constant 0 : index
    %c0_31 = arith.constant 0 : index
    %37 = vector.load %arg8[%c0_30, %c0_31] : memref<1x64xf32, #tpu.memory_space<vmem>>, vector<1x64xf32>
    %38 = vector.broadcast %37 : vector<1x64xf32> to vector<512x64xf32>
    %39 = arith.addf %36, %38 : vector<512x64xf32>
    %cst_32 = arith.constant 0.000000e+00 : f32
    %40 = vector.broadcast %cst_32 : f32 to vector<512x64xf32>
    %41 = arith.maximumf %39, %40 : vector<512x64xf32>
    %42 = vector.shape_cast %41 : vector<512x64xf32> to vector<32x16x64xf32>
    %cst_33 = arith.constant dense<0xFF800000> : vector<32x64xf32>
    %43 = vector.multi_reduction <maximumf>, %42, %cst_33 [1] : vector<32x16x64xf32> to vector<32x64xf32>
    %c0_34 = arith.constant 0 : index
    %c0_35 = arith.constant 0 : index
    %44 = vector.load %arg4[%c0_34, %c0_35] : memref<512x19xf32, #tpu.memory_space<vmem>>, vector<512x19xf32>
    %c0_36 = arith.constant 0 : index
    %c0_37 = arith.constant 0 : index
    %45 = vector.load %arg9[%c0_36, %c0_37] : memref<19x32xf32, #tpu.memory_space<vmem>>, vector<19x32xf32>
    %cst_38 = arith.constant dense<0.000000e+00> : vector<512x32xf32>
    %46 = tpu.matmul %44, %45, %cst_38 {dimension_numbers = #tpu.dot_dimension_numbers<[1], [0], [0], [1], [0, 0, 1, 1], [], []>} : vector<512x19xf32>, vector<19x32xf32>, vector<512x32xf32> -> vector<512x32xf32>
    %c0_39 = arith.constant 0 : index
    %c0_40 = arith.constant 0 : index
    %47 = vector.load %arg10[%c0_39, %c0_40] : memref<1x32xf32, #tpu.memory_space<vmem>>, vector<1x32xf32>
    %48 = vector.broadcast %47 : vector<1x32xf32> to vector<512x32xf32>
    %49 = arith.addf %46, %48 : vector<512x32xf32>
    %cst_41 = arith.constant 0.000000e+00 : f32
    %50 = vector.broadcast %cst_41 : f32 to vector<512x32xf32>
    %51 = arith.maximumf %49, %50 : vector<512x32xf32>
    %c0_42 = arith.constant 0 : index
    %c0_43 = arith.constant 0 : index
    %52 = vector.load %arg11[%c0_42, %c0_43] : memref<32x64xf32, #tpu.memory_space<vmem>>, vector<32x64xf32>
    %cst_44 = arith.constant dense<0.000000e+00> : vector<512x64xf32>
    %53 = tpu.matmul %51, %52, %cst_44 {dimension_numbers = #tpu.dot_dimension_numbers<[1], [0], [0], [1], [0, 0, 1, 1], [], []>} : vector<512x32xf32>, vector<32x64xf32>, vector<512x64xf32> -> vector<512x64xf32>
    %c0_45 = arith.constant 0 : index
    %c0_46 = arith.constant 0 : index
    %54 = vector.load %arg12[%c0_45, %c0_46] : memref<1x64xf32, #tpu.memory_space<vmem>>, vector<1x64xf32>
    %55 = vector.broadcast %54 : vector<1x64xf32> to vector<512x64xf32>
    %56 = arith.addf %53, %55 : vector<512x64xf32>
    %cst_47 = arith.constant 0.000000e+00 : f32
    %57 = vector.broadcast %cst_47 : f32 to vector<512x64xf32>
    %58 = arith.maximumf %56, %57 : vector<512x64xf32>
    %59 = vector.shape_cast %58 : vector<512x64xf32> to vector<32x16x64xf32>
    %cst_48 = arith.constant dense<0xFF800000> : vector<32x64xf32>
    %60 = vector.multi_reduction <maximumf>, %59, %cst_48 [1] : vector<32x16x64xf32> to vector<32x64xf32>
    %c0_49 = arith.constant 0 : index
    %c0_50 = arith.constant 0 : index
    %61 = vector.load %arg13[%c0_49, %c0_50] : memref<32x128xf32, #tpu.memory_space<vmem>>, vector<32x128xf32>
    %cst_51 = arith.constant dense<0.000000e+00> : vector<32x128xf32>
    %62 = tpu.matmul %26, %61, %cst_51 {dimension_numbers = #tpu.dot_dimension_numbers<[1], [0], [0], [1], [0, 0, 1, 1], [], []>} : vector<32x32xf32>, vector<32x128xf32>, vector<32x128xf32> -> vector<32x128xf32>
    %c0_52 = arith.constant 0 : index
    %c0_53 = arith.constant 0 : index
    %63 = vector.load %arg14[%c0_52, %c0_53] : memref<64x128xf32, #tpu.memory_space<vmem>>, vector<64x128xf32>
    %cst_54 = arith.constant dense<0.000000e+00> : vector<32x128xf32>
    %64 = tpu.matmul %43, %63, %cst_54 {dimension_numbers = #tpu.dot_dimension_numbers<[1], [0], [0], [1], [0, 0, 1, 1], [], []>} : vector<32x64xf32>, vector<64x128xf32>, vector<32x128xf32> -> vector<32x128xf32>
    %65 = arith.addf %62, %64 : vector<32x128xf32>
    %c0_55 = arith.constant 0 : index
    %c0_56 = arith.constant 0 : index
    %66 = vector.load %arg15[%c0_55, %c0_56] : memref<64x128xf32, #tpu.memory_space<vmem>>, vector<64x128xf32>
    %cst_57 = arith.constant dense<0.000000e+00> : vector<32x128xf32>
    %67 = tpu.matmul %60, %66, %cst_57 {dimension_numbers = #tpu.dot_dimension_numbers<[1], [0], [0], [1], [0, 0, 1, 1], [], []>} : vector<32x64xf32>, vector<64x128xf32>, vector<32x128xf32> -> vector<32x128xf32>
    %68 = arith.addf %65, %67 : vector<32x128xf32>
    %c0_58 = arith.constant 0 : index
    %c0_59 = arith.constant 0 : index
    %69 = vector.load %arg16[%c0_58, %c0_59] : memref<1x128xf32, #tpu.memory_space<vmem>>, vector<1x128xf32>
    %70 = vector.broadcast %69 : vector<1x128xf32> to vector<32x128xf32>
    %71 = arith.addf %68, %70 : vector<32x128xf32>
    %cst_60 = arith.constant 0.000000e+00 : f32
    %72 = vector.broadcast %cst_60 : f32 to vector<32x128xf32>
    %73 = arith.maximumf %71, %72 : vector<32x128xf32>
    %c0_61 = arith.constant 0 : index
    %c0_62 = arith.constant 0 : index
    %74 = vector.load %arg18[%c0_61, %c0_62] : memref<32x128xf32, #tpu.memory_space<vmem>>, vector<32x128xf32>
    tpu.vector_store %arg18[%c0_61, %c0_62], %73 {strides = array<i32>} : memref<32x128xf32, #tpu.memory_space<vmem>>, vector<32x128xf32>,
    %c0_63 = arith.constant 0 : index
    %c0_64 = arith.constant 0 : index
    %75 = vector.load %arg17[%c0_63, %c0_64] : memref<32x160xf32, #tpu.memory_space<vmem>>, vector<32x32xf32>
    tpu.vector_store %arg17[%c0_63, %c0_64], %26 {strides = array<i32>} : memref<32x160xf32, #tpu.memory_space<vmem>>, vector<32x32xf32>,
    %c0_65 = arith.constant 0 : index
    %c32 = arith.constant 32 : index
    %76 = vector.load %arg17[%c0_65, %c32] : memref<32x160xf32, #tpu.memory_space<vmem>>, vector<32x64xf32>
    tpu.vector_store %arg17[%c0_65, %c32], %43 {strides = array<i32>} : memref<32x160xf32, #tpu.memory_space<vmem>>, vector<32x64xf32>,
    %c0_66 = arith.constant 0 : index
    %c96 = arith.constant 96 : index
    %77 = vector.load %arg17[%c0_66, %c96] : memref<32x160xf32, #tpu.memory_space<vmem>>, vector<32x64xf32>
    tpu.vector_store %arg17[%c0_66, %c96], %60 {strides = array<i32>} : memref<32x160xf32, #tpu.memory_space<vmem>>, vector<32x64xf32>,
    return
  }
  func.func @transform_0(%arg0: i32) -> (i32, i32, i32) {
    %c0_i32 = arith.constant 0 : i32
    %c0_i32_0 = arith.constant 0 : i32
    %c0_i32_1 = arith.constant 0 : i32
    return %c0_i32, %arg0, %c0_i32_0 : i32, i32, i32
  }
  func.func @transform_1(%arg0: i32) -> (i32, i32, i32) {
    %c0_i32 = arith.constant 0 : i32
    %c0_i32_0 = arith.constant 0 : i32
    %c0_i32_1 = arith.constant 0 : i32
    return %c0_i32, %arg0, %c0_i32_0 : i32, i32, i32
  }
  func.func @transform_2(%arg0: i32) -> (i32, i32) {
    %c0_i32 = arith.constant 0 : i32
    %c0_i32_0 = arith.constant 0 : i32
    return %arg0, %c0_i32 : i32, i32
  }
  func.func @transform_3(%arg0: i32) -> (i32, i32) {
    %c0_i32 = arith.constant 0 : i32
    %c0_i32_0 = arith.constant 0 : i32
    return %arg0, %c0_i32 : i32, i32
  }
  func.func @transform_4(%arg0: i32) -> (i32, i32) {
    %c0_i32 = arith.constant 0 : i32
    %c0_i32_0 = arith.constant 0 : i32
    %c0_i32_1 = arith.constant 0 : i32
    return %c0_i32, %c0_i32_0 : i32, i32
  }
  func.func @transform_5(%arg0: i32) -> (i32, i32) {
    %c0_i32 = arith.constant 0 : i32
    %c0_i32_0 = arith.constant 0 : i32
    %c0_i32_1 = arith.constant 0 : i32
    return %c0_i32, %c0_i32_0 : i32, i32
  }
  func.func @transform_6(%arg0: i32) -> (i32, i32) {
    %c0_i32 = arith.constant 0 : i32
    %c0_i32_0 = arith.constant 0 : i32
    %c0_i32_1 = arith.constant 0 : i32
    return %c0_i32, %c0_i32_0 : i32, i32
  }
  func.func @transform_7(%arg0: i32) -> (i32, i32) {
    %c0_i32 = arith.constant 0 : i32
    %c0_i32_0 = arith.constant 0 : i32
    %c0_i32_1 = arith.constant 0 : i32
    return %c0_i32, %c0_i32_0 : i32, i32
  }
  func.func @transform_8(%arg0: i32) -> (i32, i32) {
    %c0_i32 = arith.constant 0 : i32
    %c0_i32_0 = arith.constant 0 : i32
    %c0_i32_1 = arith.constant 0 : i32
    return %c0_i32, %c0_i32_0 : i32, i32
  }
  func.func @transform_9(%arg0: i32) -> (i32, i32) {
    %c0_i32 = arith.constant 0 : i32
    %c0_i32_0 = arith.constant 0 : i32
    %c0_i32_1 = arith.constant 0 : i32
    return %c0_i32, %c0_i32_0 : i32, i32
  }
  func.func @transform_10(%arg0: i32) -> (i32, i32) {
    %c0_i32 = arith.constant 0 : i32
    %c0_i32_0 = arith.constant 0 : i32
    %c0_i32_1 = arith.constant 0 : i32
    return %c0_i32, %c0_i32_0 : i32, i32
  }
  func.func @transform_11(%arg0: i32) -> (i32, i32) {
    %c0_i32 = arith.constant 0 : i32
    %c0_i32_0 = arith.constant 0 : i32
    %c0_i32_1 = arith.constant 0 : i32
    return %c0_i32, %c0_i32_0 : i32, i32
  }
  func.func @transform_12(%arg0: i32) -> (i32, i32) {
    %c0_i32 = arith.constant 0 : i32
    %c0_i32_0 = arith.constant 0 : i32
    %c0_i32_1 = arith.constant 0 : i32
    return %c0_i32, %c0_i32_0 : i32, i32
  }
  func.func @transform_13(%arg0: i32) -> (i32, i32) {
    %c0_i32 = arith.constant 0 : i32
    %c0_i32_0 = arith.constant 0 : i32
    %c0_i32_1 = arith.constant 0 : i32
    return %c0_i32, %c0_i32_0 : i32, i32
  }
  func.func @transform_14(%arg0: i32) -> (i32, i32) {
    %c0_i32 = arith.constant 0 : i32
    %c0_i32_0 = arith.constant 0 : i32
    %c0_i32_1 = arith.constant 0 : i32
    return %c0_i32, %c0_i32_0 : i32, i32
  }
  func.func @transform_15(%arg0: i32) -> (i32, i32) {
    %c0_i32 = arith.constant 0 : i32
    %c0_i32_0 = arith.constant 0 : i32
    %c0_i32_1 = arith.constant 0 : i32
    return %c0_i32, %c0_i32_0 : i32, i32
  }
  func.func @transform_16(%arg0: i32) -> (i32, i32) {
    %c0_i32 = arith.constant 0 : i32
    %c0_i32_0 = arith.constant 0 : i32
    return %arg0, %c0_i32 : i32, i32
  }
  func.func @transform_17(%arg0: i32) -> (i32, i32) {
    %c0_i32 = arith.constant 0 : i32
    %c0_i32_0 = arith.constant 0 : i32
    return %arg0, %c0_i32 : i32, i32
  }
}

</mosaic_0001>

<llo_original>
// kernel: tpu_custom_call.1
$region0: #{tpu_custom_call.1}
  #allocation0 [shape = 'u32[]', space=smem, size = 0x4, offset = 0x4, fixed_abs, tag = 'smem constant byte address 0x4 - core index']
  #allocation1 [shape = 'u32[144,128]{1,0:T(1,128)}', space=vmem, size = 0x12000, scoped, tag = 'internal scratch']
  %s0 = inlined_call_operand.vmem [shape: f32[4,64,32], index: 0, kind: input, shape index: {}]
  %s1 = inlined_call_operand.vmem [shape: f32[4,64,1], index: 1, kind: input, shape index: {}]
  %s2 = inlined_call_operand.vmem [shape: f32[1024,4], index: 2, kind: input, shape index: {}]
  %s3 = inlined_call_operand.vmem [shape: f32[1024,19], index: 3, kind: input, shape index: {}]
  %s4 = inlined_call_operand.vmem [shape: f32[4,32], index: 4, kind: input, shape index: {}]
  %s5 = inlined_call_operand.vmem [shape: f32[1,32], index: 5, kind: input, shape index: {}]
  %s6 = inlined_call_operand.vmem [shape: f32[32,64], index: 6, kind: input, shape index: {}]
  %s7 = inlined_call_operand.vmem [shape: f32[1,64], index: 7, kind: input, shape index: {}]
  %s8 = inlined_call_operand.vmem [shape: f32[19,32], index: 8, kind: input, shape index: {}]
  %s9 = inlined_call_operand.vmem [shape: f32[1,32], index: 9, kind: input, shape index: {}]
  %s10 = inlined_call_operand.vmem [shape: f32[32,64], index: 10, kind: input, shape index: {}]
  %s11 = inlined_call_operand.vmem [shape: f32[1,64], index: 11, kind: input, shape index: {}]
  %s12 = inlined_call_operand.vmem [shape: f32[32,128], index: 12, kind: input, shape index: {}]
  %s13 = inlined_call_operand.vmem [shape: f32[64,128], index: 13, kind: input, shape index: {}]
  %s14 = inlined_call_operand.vmem [shape: f32[64,128], index: 14, kind: input, shape index: {}]
  %s15 = inlined_call_operand.vmem [shape: f32[1,128], index: 15, kind: input, shape index: {}]
  %s16 = inlined_call_operand.hbm [shape: f32[64,160], index: 16, kind: output, shape index: {0}]
  %s17 = inlined_call_operand.hbm [shape: f32[64,128], index: 17, kind: output, shape index: {1}]
  %18 = xla_tuple %s16, %s17
  %s19 = sld [smem:[#allocation0]]
  $region181: #{tpu_custom_call.1} parent=0
    _
  %s21 = ssub.s32 1, %s19
  %s22 = scalar_select 0, %s21, %s19
  $region1: #{tpu_custom_call.1} parent=0
    #allocation2 [shape = 'u8[131072]{0}', space=vmem, size = 0x20000, scoped, tag = 'input window, operand 0']
    #allocation3 [shape = 'u8[131072]{0}', space=vmem, size = 0x20000, scoped, tag = 'input window, operand 1']
    #allocation4 [shape = 'u8[65536]{0}', space=vmem, size = 0x10000, scoped, tag = 'output window, operand 0']
    #allocation5 [shape = 's32[2]{0}', space=sflag, size = 0x8, scoped, tag = 'scoped memory for tpu_custom_call.1']
    #allocation6 [shape = 'u8[32768]{0}', space=vmem, size = 0x8000, scoped, tag = 'output window, operand 1']
    #allocation7 [shape = 's32[2]{0}', space=sflag, size = 0x8, scoped, tag = 'scoped memory for tpu_custom_call.1']
    %23 = vsyncpa [#allocation5], 0
    %s24 = scalar_lea.sflag [#allocation5], 1
    %25 = vsyncpa %s24, 0
    %26 = vsyncpa [#allocation7], 0
    %s27 = scalar_lea.sflag [#allocation7], 1
    %28 = vsyncpa %s27, 0
    loop: start=0, step=1, limit=4
    $region2: #{tpu_custom_call.1} parent=1 // loop_pre_header
      _
    $region3: #{tpu_custom_call.1} parent=1 // loop_header
      %s30 = sphi 0, %s34
      %p31 = scmp.ge.s32.totalorder %s30, 4
      %s40 = sphi 0, %s42
      %s43 = sphi 0, %s40
      %s44 = sphi 0, %s43
      %s60 = sphi 0, %s44
      %s66 = sphi 0, %s68
      %s69 = sphi 0, %s66
      %s70 = sphi 0, %s69
      %s86 = sphi 0, %s70
      %s92 = sphi 0, %s94
      %s95 = sphi 0, %s92
      %s96 = sphi 0, %s95
      %s112 = sphi 0, %s96
      %s118 = sphi 0, %s120
      %s121 = sphi 0, %s118
      %s122 = sphi 0, %s121
      %s138 = sphi 0, %s122
      %s142 = sphi 0, %s142
      %s144 = sphi 0, %s142
      %s145 = sphi 0, %s144
      %s159 = sphi 0, %s145
      %s163 = sphi 0, %s163
      %s165 = sphi 0, %s163
      %s166 = sphi 0, %s165
      %s180 = sphi 0, %s166
      %s184 = sphi 0, %s184
      %s186 = sphi 0, %s184
      %s187 = sphi 0, %s186
      %s201 = sphi 0, %s187
      %s205 = sphi 0, %s205
      %s207 = sphi 0, %s205
      %s208 = sphi 0, %s207
      %s222 = sphi 0, %s208
      %s226 = sphi 0, %s226
      %s228 = sphi 0, %s226
      %s229 = sphi 0, %s228
      %s243 = sphi 0, %s229
      %s247 = sphi 0, %s247
      %s249 = sphi 0, %s247
      %s250 = sphi 0, %s249
      %s264 = sphi 0, %s250
      %s268 = sphi 0, %s268
      %s270 = sphi 0, %s268
      %s271 = sphi 0, %s270
      %s285 = sphi 0, %s271
      %s289 = sphi 0, %s289
      %s291 = sphi 0, %s289
      %s292 = sphi 0, %s291
      %s306 = sphi 0, %s292
      %s310 = sphi 0, %s310
      %s312 = sphi 0, %s310
      %s313 = sphi 0, %s312
      %s327 = sphi 0, %s313
      %s331 = sphi 0, %s331
      %s333 = sphi 0, %s331
      %s334 = sphi 0, %s333
      %s348 = sphi 0, %s334
      %s352 = sphi 0, %s352
      %s354 = sphi 0, %s352
      %s355 = sphi 0, %s354
      %s369 = sphi 0, %s355
      %s373 = sphi 0, %s373
      %s375 = sphi 0, %s373
      %s376 = sphi 0, %s375
      %s390 = sphi 0, %s376
      %s396 = sphi 0, %s398
      %s399 = sphi 0, %s396
      %s400 = sphi 0, %s399
      %s416 = sphi 0, %s400
      %s422 = sphi 0, %s424
      %s425 = sphi 0, %s422
      %s426 = sphi 0, %s425
      %s442 = sphi 0, %s426
    $region4: #{tpu_custom_call.1} parent=1 // loop_header_branch
      %33 = sbr.rel (%p31) target = $region8
    $region5: #{tpu_custom_call.1} parent=1 // loop_body
      %s35 = ssub.s32 %s30, 1
      %s36 = ssub.s32 %s30, 2
      %s37 = sadd.s32 %s30, 1
      %s38 = ssub.s32 %s30, %s37
      %p39 = scmp.eq.s32.totalorder %s38, 0
      %s41 = sadd.s32 %s40, 1
      %s42 = scalar_select %p39, %s40, %s41
      %p45 = pneg %p39
      %p46 = scmp.eq.s32.totalorder %s30, 1
      %p47 = por %p45, %p46
      %p48 = scmp.ne.s32.totalorder %s40, %s43
      %p49 = scmp.eq.s32.totalorder %s30, 0
      %p50 = por %p48, %p49
      %p51 = scmp.ne.s32.totalorder %s40, %s43
      %p52 = scmp.eq.s32.totalorder %s35, 1
      %p53 = por %p51, %p52
      %p54 = scmp.ne.s32.totalorder %s43, %s44
      %p55 = scmp.eq.s32.totalorder %s35, 0
      %p56 = por %p54, %p55
      %p57 = scmp.ne.s32.totalorder %s43, %s44
      %p58 = scmp.eq.s32.totalorder %s36, 1
      %p59 = por %p57, %p58
      %p61 = scmp.ne.s32.totalorder %s44, %s60
      %p62 = scmp.eq.s32.totalorder %s36, 0
      %p63 = por %p61, %p62
      %s64 = ssub.s32 %s30, %s37
      %p65 = scmp.eq.s32.totalorder %s64, 0
      %s67 = sadd.s32 %s66, 1
      %s68 = scalar_select %p65, %s66, %s67
      %p71 = pneg %p65
      %p72 = scmp.eq.s32.totalorder %s30, 1
      %p73 = por %p71, %p72
      %p74 = scmp.ne.s32.totalorder %s66, %s69
      %p75 = scmp.eq.s32.totalorder %s30, 0
      %p76 = por %p74, %p75
      %p77 = scmp.ne.s32.totalorder %s66, %s69
      %p78 = scmp.eq.s32.totalorder %s35, 1
      %p79 = por %p77, %p78
      %p80 = scmp.ne.s32.totalorder %s69, %s70
      %p81 = scmp.eq.s32.totalorder %s35, 0
      %p82 = por %p80, %p81
      %p83 = scmp.ne.s32.totalorder %s69, %s70
      %p84 = scmp.eq.s32.totalorder %s36, 1
      %p85 = por %p83, %p84
      %p87 = scmp.ne.s32.totalorder %s70, %s86
      %p88 = scmp.eq.s32.totalorder %s36, 0
      %p89 = por %p87, %p88
      %s90 = ssub.s32 %s30, %s37
      %p91 = scmp.eq.s32.totalorder %s90, 0
      %s93 = sadd.s32 %s92, 1
      %s94 = scalar_select %p91, %s92, %s93
      %p97 = pneg %p91
      %p98 = scmp.eq.s32.totalorder %s30, 1
      %p99 = por %p97, %p98
      %p100 = scmp.ne.s32.totalorder %s92, %s95
      %p101 = scmp.eq.s32.totalorder %s30, 0
      %p102 = por %p100, %p101
      %p103 = scmp.ne.s32.totalorder %s92, %s95
      %p104 = scmp.eq.s32.totalorder %s35, 1
      %p105 = por %p103, %p104
      %p106 = scmp.ne.s32.totalorder %s95, %s96
      %p107 = scmp.eq.s32.totalorder %s35, 0
      %p108 = por %p106, %p107
      %p109 = scmp.ne.s32.totalorder %s95, %s96
      %p110 = scmp.eq.s32.totalorder %s36, 1
      %p111 = por %p109, %p110
      %p113 = scmp.ne.s32.totalorder %s96, %s112
      %p114 = scmp.eq.s32.totalorder %s36, 0
      %p115 = por %p113, %p114
      %s116 = ssub.s32 %s30, %s37
      %p117 = scmp.eq.s32.totalorder %s116, 0
      %s119 = sadd.s32 %s118, 1
      %s120 = scalar_select %p117, %s118, %s119
      %p123 = pneg %p117
      %p124 = scmp.eq.s32.totalorder %s30, 1
      %p125 = por %p123, %p124
      %p126 = scmp.ne.s32.totalorder %s118, %s121
      %p127 = scmp.eq.s32.totalorder %s30, 0
      %p128 = por %p126, %p127
      %p129 = scmp.ne.s32.totalorder %s118, %s121
      %p130 = scmp.eq.s32.totalorder %s35, 1
      %p131 = por %p129, %p130
      %p132 = scmp.ne.s32.totalorder %s121, %s122
      %p133 = scmp.eq.s32.totalorder %s35, 0
      %p134 = por %p132, %p133
      %p135 = scmp.ne.s32.totalorder %s121, %s122
      %p136 = scmp.eq.s32.totalorder %s36, 1
      %p137 = por %p135, %p136
      %p139 = scmp.ne.s32.totalorder %s122, %s138
      %p140 = scmp.eq.s32.totalorder %s36, 0
      %p141 = por %p139, %p140
      %s143 = sadd.s32 %s142, 1
      %p146 = scmp.eq.s32.totalorder %s30, 1
      %p147 = scmp.ne.s32.totalorder %s142, %s144
      %p148 = scmp.eq.s32.totalorder %s30, 0
      %p149 = por %p147, %p148
      %p150 = scmp.ne.s32.totalorder %s142, %s144
      %p151 = scmp.eq.s32.totalorder %s35, 1
      %p152 = por %p150, %p151
      %p153 = scmp.ne.s32.totalorder %s144, %s145
      %p154 = scmp.eq.s32.totalorder %s35, 0
      %p155 = por %p153, %p154
      %p156 = scmp.ne.s32.totalorder %s144, %s145
      %p157 = scmp.eq.s32.totalorder %s36, 1
      %p158 = por %p156, %p157
      %p160 = scmp.ne.s32.totalorder %s145, %s159
      %p161 = scmp.eq.s32.totalorder %s36, 0
      %p162 = por %p160, %p161
      %s164 = sadd.s32 %s163, 1
      %p167 = scmp.eq.s32.totalorder %s30, 1
      %p168 = scmp.ne.s32.totalorder %s163, %s165
      %p169 = scmp.eq.s32.totalorder %s30, 0
      %p170 = por %p168, %p169
      %p171 = scmp.ne.s32.totalorder %s163, %s165
      %p172 = scmp.eq.s32.totalorder %s35, 1
      %p173 = por %p171, %p172
      %p174 = scmp.ne.s32.totalorder %s165, %s166
      %p175 = scmp.eq.s32.totalorder %s35, 0
      %p176 = por %p174, %p175
      %p177 = scmp.ne.s32.totalorder %s165, %s166
      %p178 = scmp.eq.s32.totalorder %s36, 1
      %p179 = por %p177, %p178
      %p181 = scmp.ne.s32.totalorder %s166, %s180
      %p182 = scmp.eq.s32.totalorder %s36, 0
      %p183 = por %p181, %p182
      %s185 = sadd.s32 %s184, 1
      %p188 = scmp.eq.s32.totalorder %s30, 1
      %p189 = scmp.ne.s32.totalorder %s184, %s186
      %p190 = scmp.eq.s32.totalorder %s30, 0
      %p191 = por %p189, %p190
      %p192 = scmp.ne.s32.totalorder %s184, %s186
      %p193 = scmp.eq.s32.totalorder %s35, 1
      %p194 = por %p192, %p193
      %p195 = scmp.ne.s32.totalorder %s186, %s187
      %p196 = scmp.eq.s32.totalorder %s35, 0
      %p197 = por %p195, %p196
      %p198 = scmp.ne.s32.totalorder %s186, %s187
      %p199 = scmp.eq.s32.totalorder %s36, 1
      %p200 = por %p198, %p199
      %p202 = scmp.ne.s32.totalorder %s187, %s201
      %p203 = scmp.eq.s32.totalorder %s36, 0
      %p204 = por %p202, %p203
      %s206 = sadd.s32 %s205, 1
      %p209 = scmp.eq.s32.totalorder %s30, 1
      %p210 = scmp.ne.s32.totalorder %s205, %s207
      %p211 = scmp.eq.s32.totalorder %s30, 0
      %p212 = por %p210, %p211
      %p213 = scmp.ne.s32.totalorder %s205, %s207
      %p214 = scmp.eq.s32.totalorder %s35, 1
      %p215 = por %p213, %p214
      %p216 = scmp.ne.s32.totalorder %s207, %s208
      %p217 = scmp.eq.s32.totalorder %s35, 0
      %p218 = por %p216, %p217
      %p219 = scmp.ne.s32.totalorder %s207, %s208
      %p220 = scmp.eq.s32.totalorder %s36, 1
      %p221 = por %p219, %p220
      %p223 = scmp.ne.s32.totalorder %s208, %s222
      %p224 = scmp.eq.s32.totalorder %s36, 0
      %p225 = por %p223, %p224
      %s227 = sadd.s32 %s226, 1
      %p230 = scmp.eq.s32.totalorder %s30, 1
      %p231 = scmp.ne.s32.totalorder %s226, %s228
      %p232 = scmp.eq.s32.totalorder %s30, 0
      %p233 = por %p231, %p232
      %p234 = scmp.ne.s32.totalorder %s226, %s228
      %p235 = scmp.eq.s32.totalorder %s35, 1
      %p236 = por %p234, %p235
      %p237 = scmp.ne.s32.totalorder %s228, %s229
      %p238 = scmp.eq.s32.totalorder %s35, 0
      %p239 = por %p237, %p238
      %p240 = scmp.ne.s32.totalorder %s228, %s229
      %p241 = scmp.eq.s32.totalorder %s36, 1
      %p242 = por %p240, %p241
      %p244 = scmp.ne.s32.totalorder %s229, %s243
      %p245 = scmp.eq.s32.totalorder %s36, 0
      %p246 = por %p244, %p245
      %s248 = sadd.s32 %s247, 1
      %p251 = scmp.eq.s32.totalorder %s30, 1
      %p252 = scmp.ne.s32.totalorder %s247, %s249
      %p253 = scmp.eq.s32.totalorder %s30, 0
      %p254 = por %p252, %p253
      %p255 = scmp.ne.s32.totalorder %s247, %s249
      %p256 = scmp.eq.s32.totalorder %s35, 1
      %p257 = por %p255, %p256
      %p258 = scmp.ne.s32.totalorder %s249, %s250
      %p259 = scmp.eq.s32.totalorder %s35, 0
      %p260 = por %p258, %p259
      %p261 = scmp.ne.s32.totalorder %s249, %s250
      %p262 = scmp.eq.s32.totalorder %s36, 1
      %p263 = por %p261, %p262
      %p265 = scmp.ne.s32.totalorder %s250, %s264
      %p266 = scmp.eq.s32.totalorder %s36, 0
      %p267 = por %p265, %p266
      %s269 = sadd.s32 %s268, 1
      %p272 = scmp.eq.s32.totalorder %s30, 1
      %p273 = scmp.ne.s32.totalorder %s268, %s270
      %p274 = scmp.eq.s32.totalorder %s30, 0
      %p275 = por %p273, %p274
      %p276 = scmp.ne.s32.totalorder %s268, %s270
      %p277 = scmp.eq.s32.totalorder %s35, 1
      %p278 = por %p276, %p277
      %p279 = scmp.ne.s32.totalorder %s270, %s271
      %p280 = scmp.eq.s32.totalorder %s35, 0
      %p281 = por %p279, %p280
      %p282 = scmp.ne.s32.totalorder %s270, %s271
      %p283 = scmp.eq.s32.totalorder %s36, 1
      %p284 = por %p282, %p283
      %p286 = scmp.ne.s32.totalorder %s271, %s285
      %p287 = scmp.eq.s32.totalorder %s36, 0
      %p288 = por %p286, %p287
      %s290 = sadd.s32 %s289, 1
      %p293 = scmp.eq.s32.totalorder %s30, 1
      %p294 = scmp.ne.s32.totalorder %s289, %s291
      %p295 = scmp.eq.s32.totalorder %s30, 0
      %p296 = por %p294, %p295
      %p297 = scmp.ne.s32.totalorder %s289, %s291
      %p298 = scmp.eq.s32.totalorder %s35, 1
      %p299 = por %p297, %p298
      %p300 = scmp.ne.s32.totalorder %s291, %s292
      %p301 = scmp.eq.s32.totalorder %s35, 0
      %p302 = por %p300, %p301
      %p303 = scmp.ne.s32.totalorder %s291, %s292
      %p304 = scmp.eq.s32.totalorder %s36, 1
      %p305 = por %p303, %p304
      %p307 = scmp.ne.s32.totalorder %s292, %s306
      %p308 = scmp.eq.s32.totalorder %s36, 0
      %p309 = por %p307, %p308
      %s311 = sadd.s32 %s310, 1
      %p314 = scmp.eq.s32.totalorder %s30, 1
      %p315 = scmp.ne.s32.totalorder %s310, %s312
      %p316 = scmp.eq.s32.totalorder %s30, 0
      %p317 = por %p315, %p316
      %p318 = scmp.ne.s32.totalorder %s310, %s312
      %p319 = scmp.eq.s32.totalorder %s35, 1
      %p320 = por %p318, %p319
      %p321 = scmp.ne.s32.totalorder %s312, %s313
      %p322 = scmp.eq.s32.totalorder %s35, 0
      %p323 = por %p321, %p322
      %p324 = scmp.ne.s32.totalorder %s312, %s313
      %p325 = scmp.eq.s32.totalorder %s36, 1
      %p326 = por %p324, %p325
      %p328 = scmp.ne.s32.totalorder %s313, %s327
      %p329 = scmp.eq.s32.totalorder %s36, 0
      %p330 = por %p328, %p329
      %s332 = sadd.s32 %s331, 1
      %p335 = scmp.eq.s32.totalorder %s30, 1
      %p336 = scmp.ne.s32.totalorder %s331, %s333
      %p337 = scmp.eq.s32.totalorder %s30, 0
      %p338 = por %p336, %p337
      %p339 = scmp.ne.s32.totalorder %s331, %s333
      %p340 = scmp.eq.s32.totalorder %s35, 1
      %p341 = por %p339, %p340
      %p342 = scmp.ne.s32.totalorder %s333, %s334
      %p343 = scmp.eq.s32.totalorder %s35, 0
      %p344 = por %p342, %p343
      %p345 = scmp.ne.s32.totalorder %s333, %s334
      %p346 = scmp.eq.s32.totalorder %s36, 1
      %p347 = por %p345, %p346
      %p349 = scmp.ne.s32.totalorder %s334, %s348
      %p350 = scmp.eq.s32.totalorder %s36, 0
      %p351 = por %p349, %p350
      %s353 = sadd.s32 %s352, 1
      %p356 = scmp.eq.s32.totalorder %s30, 1
      %p357 = scmp.ne.s32.totalorder %s352, %s354
      %p358 = scmp.eq.s32.totalorder %s30, 0
      %p359 = por %p357, %p358
      %p360 = scmp.ne.s32.totalorder %s352, %s354
      %p361 = scmp.eq.s32.totalorder %s35, 1
      %p362 = por %p360, %p361
      %p363 = scmp.ne.s32.totalorder %s354, %s355
      %p364 = scmp.eq.s32.totalorder %s35, 0
      %p365 = por %p363, %p364
      %p366 = scmp.ne.s32.totalorder %s354, %s355
      %p367 = scmp.eq.s32.totalorder %s36, 1
      %p368 = por %p366, %p367
      %p370 = scmp.ne.s32.totalorder %s355, %s369
      %p371 = scmp.eq.s32.totalorder %s36, 0
      %p372 = por %p370, %p371
      %s374 = sadd.s32 %s373, 1
      %p377 = scmp.eq.s32.totalorder %s30, 1
      %p378 = scmp.ne.s32.totalorder %s373, %s375
      %p379 = scmp.eq.s32.totalorder %s30, 0
      %p380 = por %p378, %p379
      %p381 = scmp.ne.s32.totalorder %s373, %s375
      %p382 = scmp.eq.s32.totalorder %s35, 1
      %p383 = por %p381, %p382
      %p384 = scmp.ne.s32.totalorder %s375, %s376
      %p385 = scmp.eq.s32.totalorder %s35, 0
      %p386 = por %p384, %p385
      %p387 = scmp.ne.s32.totalorder %s375, %s376
      %p388 = scmp.eq.s32.totalorder %s36, 1
      %p389 = por %p387, %p388
      %p391 = scmp.ne.s32.totalorder %s376, %s390
      %p392 = scmp.eq.s32.totalorder %s36, 0
      %p393 = por %p391, %p392
      %s394 = ssub.s32 %s30, %s37
      %p395 = scmp.eq.s32.totalorder %s394, 0
      %s397 = sadd.s32 %s396, 1
      %s398 = scalar_select %p395, %s396, %s397
      %p401 = pneg %p395
      %p402 = scmp.eq.s32.totalorder %s30, 1
      %p403 = por %p401, %p402
      %p404 = scmp.ne.s32.totalorder %s396, %s399
      %p405 = scmp.eq.s32.totalorder %s30, 0
      %p406 = por %p404, %p405
      %p407 = scmp.ne.s32.totalorder %s396, %s399
      %p408 = scmp.eq.s32.totalorder %s35, 1
      %p409 = por %p407, %p408
      %p410 = scmp.ne.s32.totalorder %s399, %s400
      %p411 = scmp.eq.s32.totalorder %s35, 0
      %p412 = por %p410, %p411
      %p413 = scmp.ne.s32.totalorder %s399, %s400
      %p414 = scmp.eq.s32.totalorder %s36, 1
      %p415 = por %p413, %p414
      %p417 = scmp.ne.s32.totalorder %s400, %s416
      %p418 = scmp.eq.s32.totalorder %s36, 0
      %p419 = por %p417, %p418
      %s420 = ssub.s32 %s30, %s37
      %p421 = scmp.eq.s32.totalorder %s420, 0
      %s423 = sadd.s32 %s422, 1
      %s424 = scalar_select %p421, %s422, %s423
      %p427 = pneg %p421
      %p428 = scmp.eq.s32.totalorder %s30, 1
      %p429 = por %p427, %p428
      %p430 = scmp.ne.s32.totalorder %s422, %s425
      %p431 = scmp.eq.s32.totalorder %s30, 0
      %p432 = por %p430, %p431
      %p433 = scmp.ne.s32.totalorder %s422, %s425
      %p434 = scmp.eq.s32.totalorder %s35, 1
      %p435 = por %p433, %p434
      %p436 = scmp.ne.s32.totalorder %s425, %s426
      %p437 = scmp.eq.s32.totalorder %s35, 0
      %p438 = por %p436, %p437
      %p439 = scmp.ne.s32.totalorder %s425, %s426
      %p440 = scmp.eq.s32.totalorder %s36, 1
      %p441 = por %p439, %p440
      %p443 = scmp.ne.s32.totalorder %s426, %s442
      %p444 = scmp.eq.s32.totalorder %s36, 0
      %p445 = por %p443, %p444
      %p446 = scmp.le.s32.totalorder 1, %s30
      %p447 = scmp.lt.s32.totalorder %s30, 3
      %p448 = pnand %p446, %p447
      %p449 = pneg %p448
      // Predicated region
      $region9: #{tpu_custom_call.1} parent=5 // pred_check
        _
      $region10: #{tpu_custom_call.1} parent=5 // pred_check_branch
        %451 = sbr.rel (%p448) target = $region12
      $region11: #{tpu_custom_call.1} parent=5 // pred_region
        %s452 = ssub.s32 %s30, 1
        // Predicated region
        $region13: #{tpu_custom_call.1} parent=11 // pred_check
          %p453 = pneg %p155
        $region14: #{tpu_custom_call.1} parent=11 // pred_check_branch
          %455 = sbr.rel (%p453) target = $region16
        $region15: #{tpu_custom_call.1} parent=11 // pred_region
          _
        $region16: #{tpu_custom_call.1} parent=11 // pred_fallthru
          _
        // Predicated region
        $region17: #{tpu_custom_call.1} parent=11 // pred_check
          %p456 = pneg %p176
        $region18: #{tpu_custom_call.1} parent=11 // pred_check_branch
          %458 = sbr.rel (%p456) target = $region20
        $region19: #{tpu_custom_call.1} parent=11 // pred_region
          _
        $region20: #{tpu_custom_call.1} parent=11 // pred_fallthru
          _
        // Predicated region
        $region21: #{tpu_custom_call.1} parent=11 // pred_check
          %p459 = pneg %p197
        $region22: #{tpu_custom_call.1} parent=11 // pred_check_branch
          %461 = sbr.rel (%p459) target = $region24
        $region23: #{tpu_custom_call.1} parent=11 // pred_region
          _
        $region24: #{tpu_custom_call.1} parent=11 // pred_fallthru
          _
        // Predicated region
        $region25: #{tpu_custom_call.1} parent=11 // pred_check
          %p462 = pneg %p218
        $region26: #{tpu_custom_call.1} parent=11 // pred_check_branch
          %464 = sbr.rel (%p462) target = $region28
        $region27: #{tpu_custom_call.1} parent=11 // pred_region
          _
        $region28: #{tpu_custom_call.1} parent=11 // pred_fallthru
          _
        // Predicated region
        $region29: #{tpu_custom_call.1} parent=11 // pred_check
          %p465 = pneg %p239
        $region30: #{tpu_custom_call.1} parent=11 // pred_check_branch
          %467 = sbr.rel (%p465) target = $region32
        $region31: #{tpu_custom_call.1} parent=11 // pred_region
          _
        $region32: #{tpu_custom_call.1} parent=11 // pred_fallthru
          _
        // Predicated region
        $region33: #{tpu_custom_call.1} parent=11 // pred_check
          %p468 = pneg %p260
        $region34: #{tpu_custom_call.1} parent=11 // pred_check_branch
          %470 = sbr.rel (%p468) target = $region36
        $region35: #{tpu_custom_call.1} parent=11 // pred_region
          _
        $region36: #{tpu_custom_call.1} parent=11 // pred_fallthru
          _
        // Predicated region
        $region37: #{tpu_custom_call.1} parent=11 // pred_check
          %p471 = pneg %p281
        $region38: #{tpu_custom_call.1} parent=11 // pred_check_branch
          %473 = sbr.rel (%p471) target = $region40
        $region39: #{tpu_custom_call.1} parent=11 // pred_region
          _
        $region40: #{tpu_custom_call.1} parent=11 // pred_fallthru
          _
        // Predicated region
        $region41: #{tpu_custom_call.1} parent=11 // pred_check
          %p474 = pneg %p302
        $region42: #{tpu_custom_call.1} parent=11 // pred_check_branch
          %476 = sbr.rel (%p474) target = $region44
        $region43: #{tpu_custom_call.1} parent=11 // pred_region
          _
        $region44: #{tpu_custom_call.1} parent=11 // pred_fallthru
          _
        // Predicated region
        $region45: #{tpu_custom_call.1} parent=11 // pred_check
          %p477 = pneg %p323
        $region46: #{tpu_custom_call.1} parent=11 // pred_check_branch
          %479 = sbr.rel (%p477) target = $region48
        $region47: #{tpu_custom_call.1} parent=11 // pred_region
          _
        $region48: #{tpu_custom_call.1} parent=11 // pred_fallthru
          _
        // Predicated region
        $region49: #{tpu_custom_call.1} parent=11 // pred_check
          %p480 = pneg %p344
        $region50: #{tpu_custom_call.1} parent=11 // pred_check_branch
          %482 = sbr.rel (%p480) target = $region52
        $region51: #{tpu_custom_call.1} parent=11 // pred_region
          _
        $region52: #{tpu_custom_call.1} parent=11 // pred_fallthru
          _
        // Predicated region
        $region53: #{tpu_custom_call.1} parent=11 // pred_check
          %p483 = pneg %p365
        $region54: #{tpu_custom_call.1} parent=11 // pred_check_branch
          %485 = sbr.rel (%p483) target = $region56
        $region55: #{tpu_custom_call.1} parent=11 // pred_region
          _
        $region56: #{tpu_custom_call.1} parent=11 // pred_fallthru
          _
        // Predicated region
        $region57: #{tpu_custom_call.1} parent=11 // pred_check
          %p486 = pneg %p386
        $region58: #{tpu_custom_call.1} parent=11 // pred_check_branch
          %488 = sbr.rel (%p486) target = $region60
        $region59: #{tpu_custom_call.1} parent=11 // pred_region
          _
        $region60: #{tpu_custom_call.1} parent=11 // pred_fallthru
          _
      $region12: #{tpu_custom_call.1} parent=5 // pred_fallthru
        _
      %p489 = scmp.lt.s32.totalorder %s30, 2
      // Predicated region
      $region61: #{tpu_custom_call.1} parent=5 // pred_check
        %p490 = pneg %p489
      $region62: #{tpu_custom_call.1} parent=5 // pred_check_branch
        %492 = sbr.rel (%p490) target = $region64
      $region63: #{tpu_custom_call.1} parent=5 // pred_region
        // Predicated region
        $region65: #{tpu_custom_call.1} parent=63 // pred_check
          %p493 = pneg %p50
        $region66: #{tpu_custom_call.1} parent=63 // pred_check_branch
          %495 = sbr.rel (%p493) target = $region68
        $region67: #{tpu_custom_call.1} parent=63 // pred_region
          %s496 = sand.u32 %s40, 1
          %s497 = sand.u32 %s40, 1
          %s498 = smul.addr %s497, 128
          %s499 = scalar_lea.vmem [#allocation2], %s498
          %s500 = smul.u32 4, %s30
          %s501 = smul.addr %s500, 8
          %s502 = scalar_lea.vmem %s0, %s501
          // Predicated region
          $region69: #{tpu_custom_call.1} parent=67 // pred_check
            _
          $region70: #{tpu_custom_call.1} parent=67 // pred_check_branch
            %504 = sbr.rel (0) target = $region72
          $region71: #{tpu_custom_call.1} parent=67 // pred_region
            // Predicated region
            $region73: #{tpu_custom_call.1} parent=71 // pred_check
              _
            $region74: #{tpu_custom_call.1} parent=71 // pred_check_branch
              %506 = sbr.rel (0) target = $region76
            $region75: #{tpu_custom_call.1} parent=71 // pred_region
              // Predicated region
              $region88: #{tpu_custom_call.1} parent=75 // pred_check
                _
              $region89: #{tpu_custom_call.1} parent=75 // pred_check_branch
                %552 = sbr.rel (0) target = $region91
              $region90: #{tpu_custom_call.1} parent=75 // pred_region
                loop: start=0, step=1, limit=1
                $region92: #{tpu_custom_call.1} parent=90 // loop_pre_header
                  _
                $region93: #{tpu_custom_call.1} parent=90 // loop_header
                  %s554 = sphi 0, %s558
                  %p555 = scmp.ge.s32.totalorder %s554, 1
                  %s559 = sphi %s502, %s502
                  %s560 = sphi %s499, %s499
                $region94: #{tpu_custom_call.1} parent=90 // loop_header_branch
                  %557 = sbr.rel (%p555) target = $region98
                $region95: #{tpu_custom_call.1} parent=90 // loop_body
                  %v561 = vld [vmem:[%s559] sm:$0xff]
                  %562 = vst [vmem:[%s560] sm:$0xff] %v561
                  %v563 = vld [vmem:[%s559 + $0x8] sm:$0xff]
                  %564 = vst [vmem:[%s560 + $0x8] sm:$0xff] %v563
                  %v565 = vld [vmem:[%s559 + $0x10] sm:$0xff]
                  %566 = vst [vmem:[%s560 + $0x10] sm:$0xff] %v565
                  %v567 = vld [vmem:[%s559 + $0x18] sm:$0xff]
                  %568 = vst [vmem:[%s560 + $0x18] sm:$0xff] %v567
                  %v569 = vld [vmem:[%s559 + $0x40] sm:$0xff]
                  %570 = vst [vmem:[%s560 + $0x20] sm:$0xff] %v569
                  %v571 = vld [vmem:[%s559 + $0x48] sm:$0xff]
                  %572 = vst [vmem:[%s560 + $0x28] sm:$0xff] %v571
                  %v573 = vld [vmem:[%s559 + $0x50] sm:$0xff]
                  %574 = vst [vmem:[%s560 + $0x30] sm:$0xff] %v573
                  %v575 = vld [vmem:[%s559 + $0x58] sm:$0xff]
                  %576 = vst [vmem:[%s560 + $0x38] sm:$0xff] %v575
                  %v577 = vld [vmem:[%s559 + $0x80] sm:$0xff]
                  %578 = vst [vmem:[%s560 + $0x40] sm:$0xff] %v577
                  %v579 = vld [vmem:[%s559 + $0x88] sm:$0xff]
                  %580 = vst [vmem:[%s560 + $0x48] sm:$0xff] %v579
                  %v581 = vld [vmem:[%s559 + $0x90] sm:$0xff]
                  %582 = vst [vmem:[%s560 + $0x50] sm:$0xff] %v581
                  %v583 = vld [vmem:[%s559 + $0x98] sm:$0xff]
                  %584 = vst [vmem:[%s560 + $0x58] sm:$0xff] %v583
                  %v585 = vld [vmem:[%s559 + $0xc0] sm:$0xff]
                  %586 = vst [vmem:[%s560 + $0x60] sm:$0xff] %v585
                  %v587 = vld [vmem:[%s559 + $0xc8] sm:$0xff]
                  %588 = vst [vmem:[%s560 + $0x68] sm:$0xff] %v587
                  %v589 = vld [vmem:[%s559 + $0xd0] sm:$0xff]
                  %590 = vst [vmem:[%s560 + $0x70] sm:$0xff] %v589
                  %v591 = vld [vmem:[%s559 + $0xd8] sm:$0xff]
                  %592 = vst [vmem:[%s560 + $0x78] sm:$0xff] %v591
                $region96: #{tpu_custom_call.1} parent=90 // loop_footer
                  %s558 = sadd.s32 1, %s554
                $region97: #{tpu_custom_call.1} parent=90 // loop_footer_branch
                  %553 = sbr.rel target = $region93
                $region98: #{tpu_custom_call.1} parent=90 // loop_exit
                  _
              $region91: #{tpu_custom_call.1} parent=75 // pred_fallthru
                _
              // Predicated region
              $region99: #{tpu_custom_call.1} parent=75 // pred_check
                _
              $region100: #{tpu_custom_call.1} parent=75 // pred_check_branch
                %594 = sbr.rel target = $region102
              $region101: #{tpu_custom_call.1} parent=75 // pred_region
                _
              $region102: #{tpu_custom_call.1} parent=75 // pred_fallthru
                _
            $region76: #{tpu_custom_call.1} parent=71 // pred_fallthru
              _
            // Predicated region
            $region77: #{tpu_custom_call.1} parent=71 // pred_check
              _
            $region78: #{tpu_custom_call.1} parent=71 // pred_check_branch
              %508 = sbr.rel target = $region80
            $region79: #{tpu_custom_call.1} parent=71 // pred_region
              %s510 = ssub.s32 256, 1
              loop: start=0, step=1, limit=1
              $region81: #{tpu_custom_call.1} parent=79 // loop_pre_header
                _
              $region82: #{tpu_custom_call.1} parent=79 // loop_header
                %s512 = sphi 0, %s516
                %p513 = scmp.ge.s32.totalorder %s512, 1
                %s517 = sphi %s502, %s502
                %s518 = sphi %s499, %s499
              $region83: #{tpu_custom_call.1} parent=79 // loop_header_branch
                %515 = sbr.rel (%p513) target = $region87
              $region84: #{tpu_custom_call.1} parent=79 // loop_body
                %v519 = vld [vmem:[%s517] sm:%s510]
                %520 = vst [vmem:[%s518] sm:%s510] %v519
                %v521 = vld [vmem:[%s517 + $0x8] sm:%s510]
                %522 = vst [vmem:[%s518 + $0x8] sm:%s510] %v521
                %v523 = vld [vmem:[%s517 + $0x10] sm:%s510]
                %524 = vst [vmem:[%s518 + $0x10] sm:%s510] %v523
                %v525 = vld [vmem:[%s517 + $0x18] sm:%s510]
                %526 = vst [vmem:[%s518 + $0x18] sm:%s510] %v525
                %v527 = vld [vmem:[%s517 + $0x40] sm:%s510]
                %528 = vst [vmem:[%s518 + $0x20] sm:%s510] %v527
                %v529 = vld [vmem:[%s517 + $0x48] sm:%s510]
                %530 = vst [vmem:[%s518 + $0x28] sm:%s510] %v529
                %v531 = vld [vmem:[%s517 + $0x50] sm:%s510]
                %532 = vst [vmem:[%s518 + $0x30] sm:%s510] %v531
                %v533 = vld [vmem:[%s517 + $0x58] sm:%s510]
                %534 = vst [vmem:[%s518 + $0x38] sm:%s510] %v533
                %v535 = vld [vmem:[%s517 + $0x80] sm:%s510]
                %536 = vst [vmem:[%s518 + $0x40] sm:%s510] %v535
                %v537 = vld [vmem:[%s517 + $0x88] sm:%s510]
                %538 = vst [vmem:[%s518 + $0x48] sm:%s510] %v537
                %v539 = vld [vmem:[%s517 + $0x90] sm:%s510]
                %540 = vst [vmem:[%s518 + $0x50] sm:%s510] %v539
                %v541 = vld [vmem:[%s517 + $0x98] sm:%s510]
                %542 = vst [vmem:[%s518 + $0x58] sm:%s510] %v541
                %v543 = vld [vmem:[%s517 + $0xc0] sm:%s510]
                %544 = vst [vmem:[%s518 + $0x60] sm:%s510] %v543
                %v545 = vld [vmem:[%s517 + $0xc8] sm:%s510]
                %546 = vst [vmem:[%s518 + $0x68] sm:%s510] %v545
                %v547 = vld [vmem:[%s517 + $0xd0] sm:%s510]
                %548 = vst [vmem:[%s518 + $0x70] sm:%s510] %v547
                %v549 = vld [vmem:[%s517 + $0xd8] sm:%s510]
                %550 = vst [vmem:[%s518 + $0x78] sm:%s510] %v549
              $region85: #{tpu_custom_call.1} parent=79 // loop_footer
                %s516 = sadd.s32 1, %s512
              $region86: #{tpu_custom_call.1} parent=79 // loop_footer_branch
                %511 = sbr.rel target = $region82
              $region87: #{tpu_custom_call.1} parent=79 // loop_exit
                _
            $region80: #{tpu_custom_call.1} parent=71 // pred_fallthru
              _
          $region72: #{tpu_custom_call.1} parent=67 // pred_fallthru
            _
          %595 = vnop
        $region68: #{tpu_custom_call.1} parent=63 // pred_fallthru
          _
        // Predicated region
        $region103: #{tpu_custom_call.1} parent=63 // pred_check
          %p596 = pneg %p76
        $region104: #{tpu_custom_call.1} parent=63 // pred_check_branch
          %598 = sbr.rel (%p596) target = $region106
        $region105: #{tpu_custom_call.1} parent=63 // pred_region
          %s599 = sand.u32 %s66, 1
          %s600 = sand.u32 %s66, 1
          %s601 = smul.addr %s600, 128
          %s602 = scalar_lea.vmem [#allocation3], %s601
          %s603 = smul.u32 4, %s30
          %s604 = smul.addr %s603, 8
          %s605 = scalar_lea.vmem %s1, %s604
          // Predicated region
          $region107: #{tpu_custom_call.1} parent=105 // pred_check
            _
          $region108: #{tpu_custom_call.1} parent=105 // pred_check_branch
            %607 = sbr.rel (0) target = $region110
          $region109: #{tpu_custom_call.1} parent=105 // pred_region
            // Predicated region
            $region111: #{tpu_custom_call.1} parent=109 // pred_check
              _
            $region112: #{tpu_custom_call.1} parent=109 // pred_check_branch
              %609 = sbr.rel (0) target = $region114
            $region113: #{tpu_custom_call.1} parent=109 // pred_region
              // Predicated region
              $region126: #{tpu_custom_call.1} parent=113 // pred_check
                _
              $region127: #{tpu_custom_call.1} parent=113 // pred_check_branch
                %655 = sbr.rel (0) target = $region129
              $region128: #{tpu_custom_call.1} parent=113 // pred_region
                loop: start=0, step=1, limit=1
                $region130: #{tpu_custom_call.1} parent=128 // loop_pre_header
                  _
                $region131: #{tpu_custom_call.1} parent=128 // loop_header
                  %s657 = sphi 0, %s661
                  %p658 = scmp.ge.s32.totalorder %s657, 1
                  %s662 = sphi %s605, %s605
                  %s663 = sphi %s602, %s602
                $region132: #{tpu_custom_call.1} parent=128 // loop_header_branch
                  %660 = sbr.rel (%p658) target = $region136
                $region133: #{tpu_custom_call.1} parent=128 // loop_body
                  %v664 = vld [vmem:[%s662] sm:$0xff]
                  %665 = vst [vmem:[%s663] sm:$0xff] %v664
                  %v666 = vld [vmem:[%s662 + $0x8] sm:$0xff]
                  %667 = vst [vmem:[%s663 + $0x8] sm:$0xff] %v666
                  %v668 = vld [vmem:[%s662 + $0x10] sm:$0xff]
                  %669 = vst [vmem:[%s663 + $0x10] sm:$0xff] %v668
                  %v670 = vld [vmem:[%s662 + $0x18] sm:$0xff]
                  %671 = vst [vmem:[%s663 + $0x18] sm:$0xff] %v670
                  %v672 = vld [vmem:[%s662 + $0x40] sm:$0xff]
                  %673 = vst [vmem:[%s663 + $0x20] sm:$0xff] %v672
                  %v674 = vld [vmem:[%s662 + $0x48] sm:$0xff]
                  %675 = vst [vmem:[%s663 + $0x28] sm:$0xff] %v674
                  %v676 = vld [vmem:[%s662 + $0x50] sm:$0xff]
                  %677 = vst [vmem:[%s663 + $0x30] sm:$0xff] %v676
                  %v678 = vld [vmem:[%s662 + $0x58] sm:$0xff]
                  %679 = vst [vmem:[%s663 + $0x38] sm:$0xff] %v678
                  %v680 = vld [vmem:[%s662 + $0x80] sm:$0xff]
                  %681 = vst [vmem:[%s663 + $0x40] sm:$0xff] %v680
                  %v682 = vld [vmem:[%s662 + $0x88] sm:$0xff]
                  %683 = vst [vmem:[%s663 + $0x48] sm:$0xff] %v682
                  %v684 = vld [vmem:[%s662 + $0x90] sm:$0xff]
                  %685 = vst [vmem:[%s663 + $0x50] sm:$0xff] %v684
                  %v686 = vld [vmem:[%s662 + $0x98] sm:$0xff]
                  %687 = vst [vmem:[%s663 + $0x58] sm:$0xff] %v686
                  %v688 = vld [vmem:[%s662 + $0xc0] sm:$0xff]
                  %689 = vst [vmem:[%s663 + $0x60] sm:$0xff] %v688
                  %v690 = vld [vmem:[%s662 + $0xc8] sm:$0xff]
                  %691 = vst [vmem:[%s663 + $0x68] sm:$0xff] %v690
                  %v692 = vld [vmem:[%s662 + $0xd0] sm:$0xff]
                  %693 = vst [vmem:[%s663 + $0x70] sm:$0xff] %v692
                  %v694 = vld [vmem:[%s662 + $0xd8] sm:$0xff]
                  %695 = vst [vmem:[%s663 + $0x78] sm:$0xff] %v694
                $region134: #{tpu_custom_call.1} parent=128 // loop_footer
                  %s661 = sadd.s32 1, %s657
                $region135: #{tpu_custom_call.1} parent=128 // loop_footer_branch
                  %656 = sbr.rel target = $region131
                $region136: #{tpu_custom_call.1} parent=128 // loop_exit
                  _
              $region129: #{tpu_custom_call.1} parent=113 // pred_fallthru
                _
              // Predicated region
              $region137: #{tpu_custom_call.1} parent=113 // pred_check
                _
              $region138: #{tpu_custom_call.1} parent=113 // pred_check_branch
                %697 = sbr.rel target = $region140
              $region139: #{tpu_custom_call.1} parent=113 // pred_region
                _
              $region140: #{tpu_custom_call.1} parent=113 // pred_fallthru
                _
            $region114: #{tpu_custom_call.1} parent=109 // pred_fallthru
              _
            // Predicated region
            $region115: #{tpu_custom_call.1} parent=109 // pred_check
              _
            $region116: #{tpu_custom_call.1} parent=109 // pred_check_branch
              %611 = sbr.rel target = $region118
            $region117: #{tpu_custom_call.1} parent=109 // pred_region
              %s613 = ssub.s32 256, 1
              loop: start=0, step=1, limit=1
              $region119: #{tpu_custom_call.1} parent=117 // loop_pre_header
                _
              $region120: #{tpu_custom_call.1} parent=117 // loop_header
                %s615 = sphi 0, %s619
                %p616 = scmp.ge.s32.totalorder %s615, 1
                %s620 = sphi %s605, %s605
                %s621 = sphi %s602, %s602
              $region121: #{tpu_custom_call.1} parent=117 // loop_header_branch
                %618 = sbr.rel (%p616) target = $region125
              $region122: #{tpu_custom_call.1} parent=117 // loop_body
                %v622 = vld [vmem:[%s620] sm:%s613]
                %623 = vst [vmem:[%s621] sm:%s613] %v622
                %v624 = vld [vmem:[%s620 + $0x8] sm:%s613]
                %625 = vst [vmem:[%s621 + $0x8] sm:%s613] %v624
                %v626 = vld [vmem:[%s620 + $0x10] sm:%s613]
                %627 = vst [vmem:[%s621 + $0x10] sm:%s613] %v626
                %v628 = vld [vmem:[%s620 + $0x18] sm:%s613]
                %629 = vst [vmem:[%s621 + $0x18] sm:%s613] %v628
                %v630 = vld [vmem:[%s620 + $0x40] sm:%s613]
                %631 = vst [vmem:[%s621 + $0x20] sm:%s613] %v630
                %v632 = vld [vmem:[%s620 + $0x48] sm:%s613]
                %633 = vst [vmem:[%s621 + $0x28] sm:%s613] %v632
                %v634 = vld [vmem:[%s620 + $0x50] sm:%s613]
                %635 = vst [vmem:[%s621 + $0x30] sm:%s613] %v634
                %v636 = vld [vmem:[%s620 + $0x58] sm:%s613]
                %637 = vst [vmem:[%s621 + $0x38] sm:%s613] %v636
                %v638 = vld [vmem:[%s620 + $0x80] sm:%s613]
                %639 = vst [vmem:[%s621 + $0x40] sm:%s613] %v638
                %v640 = vld [vmem:[%s620 + $0x88] sm:%s613]
                %641 = vst [vmem:[%s621 + $0x48] sm:%s613] %v640
                %v642 = vld [vmem:[%s620 + $0x90] sm:%s613]
                %643 = vst [vmem:[%s621 + $0x50] sm:%s613] %v642
                %v644 = vld [vmem:[%s620 + $0x98] sm:%s613]
                %645 = vst [vmem:[%s621 + $0x58] sm:%s613] %v644
                %v646 = vld [vmem:[%s620 + $0xc0] sm:%s613]
                %647 = vst [vmem:[%s621 + $0x60] sm:%s613] %v646
                %v648 = vld [vmem:[%s620 + $0xc8] sm:%s613]
                %649 = vst [vmem:[%s621 + $0x68] sm:%s613] %v648
                %v650 = vld [vmem:[%s620 + $0xd0] sm:%s613]
                %651 = vst [vmem:[%s621 + $0x70] sm:%s613] %v650
                %v652 = vld [vmem:[%s620 + $0xd8] sm:%s613]
                %653 = vst [vmem:[%s621 + $0x78] sm:%s613] %v652
              $region123: #{tpu_custom_call.1} parent=117 // loop_footer
                %s619 = sadd.s32 1, %s615
              $region124: #{tpu_custom_call.1} parent=117 // loop_footer_branch
                %614 = sbr.rel target = $region120
              $region125: #{tpu_custom_call.1} parent=117 // loop_exit
                _
            $region118: #{tpu_custom_call.1} parent=109 // pred_fallthru
              _
          $region110: #{tpu_custom_call.1} parent=105 // pred_fallthru
            _
          %698 = vnop
        $region106: #{tpu_custom_call.1} parent=63 // pred_fallthru
          _
        // Predicated region
        $region141: #{tpu_custom_call.1} parent=63 // pred_check
          %p699 = pneg %p102
        $region142: #{tpu_custom_call.1} parent=63 // pred_check_branch
          %701 = sbr.rel (%p699) target = $region144
        $region143: #{tpu_custom_call.1} parent=63 // pred_region
          %s702 = smul.u32 64, %s30
          %p703 = scmp.lt.s32.totalorder %s702, 127
          %s704 = scalar_select %p703, %s702, 127
          %s705 = smul.addr %s704, 8
          %s706 = scalar_lea.vmem %s2, %s705
          %s707 = smul.u32 64, %s30
        $region144: #{tpu_custom_call.1} parent=63 // pred_fallthru
          _
        // Predicated region
        $region145: #{tpu_custom_call.1} parent=63 // pred_check
          %p708 = pneg %p128
        $region146: #{tpu_custom_call.1} parent=63 // pred_check_branch
          %710 = sbr.rel (%p708) target = $region148
        $region147: #{tpu_custom_call.1} parent=63 // pred_region
          %s711 = smul.u32 64, %s30
          %p712 = scmp.lt.s32.totalorder %s711, 127
          %s713 = scalar_select %p712, %s711, 127
          %s714 = smul.addr %s713, 8
          %s715 = scalar_lea.vmem %s3, %s714
          %s716 = smul.u32 64, %s30
        $region148: #{tpu_custom_call.1} parent=63 // pred_fallthru
          _
      $region64: #{tpu_custom_call.1} parent=5 // pred_fallthru
        _
      %p717 = scmp.le.s32.totalorder 1, %s30
      %p718 = scmp.lt.s32.totalorder %s30, 3
      %p719 = pnand %p717, %p718
      %p720 = pneg %p719
      // Predicated region
      $region149: #{tpu_custom_call.1} parent=5 // pred_check
        _
      $region150: #{tpu_custom_call.1} parent=5 // pred_check_branch
        %722 = sbr.rel (%p719) target = $region152
      $region151: #{tpu_custom_call.1} parent=5 // pred_region
        %s723 = ssub.s32 %s30, 1
        %s724 = sand.u32 %s43, 1
        %s725 = sand.u32 %s43, 1
        %s726 = smul.addr %s725, 128
        %s727 = scalar_lea.vmem [#allocation2], %s726
        // Predicated region
        $region153: #{tpu_custom_call.1} parent=151 // pred_check
          %p728 = pneg %p56
        $region154: #{tpu_custom_call.1} parent=151 // pred_check_branch
          %730 = sbr.rel (%p728) target = $region156
        $region155: #{tpu_custom_call.1} parent=151 // pred_region
          _
        $region156: #{tpu_custom_call.1} parent=151 // pred_fallthru
          _
        %s731 = sand.u32 %s69, 1
        %s732 = sand.u32 %s69, 1
        %s733 = smul.addr %s732, 128
        %s734 = scalar_lea.vmem [#allocation3], %s733
        // Predicated region
        $region157: #{tpu_custom_call.1} parent=151 // pred_check
          %p735 = pneg %p82
        $region158: #{tpu_custom_call.1} parent=151 // pred_check_branch
          %737 = sbr.rel (%p735) target = $region160
        $region159: #{tpu_custom_call.1} parent=151 // pred_region
          _
        $region160: #{tpu_custom_call.1} parent=151 // pred_fallthru
          _
        %s738 = sand.u32 %s43, 1
        %s739 = sand.u32 %s43, 1
        %s740 = smul.addr %s739, 128
        %s741 = scalar_lea.vmem [#allocation2], %s740
        %p742 = pneg %p56
        %p743 = pneg %p53
        %s744 = sand.u32 %s69, 1
        %s745 = sand.u32 %s69, 1
        %s746 = smul.addr %s745, 128
        %s747 = scalar_lea.vmem [#allocation3], %s746
        %p748 = pneg %p82
        %p749 = pneg %p79
        %s750 = smul.u32 64, %s35
        %p751 = scmp.lt.s32.totalorder %s750, 127
        %s752 = scalar_select %p751, %s750, 127
        %s753 = smul.addr %s752, 8
        %s754 = scalar_lea.vmem %s2, %s753
        %p755 = pneg %p108
        %p756 = pneg %p105
        %s757 = smul.u32 64, %s35
        %p758 = scmp.lt.s32.totalorder %s757, 127
        %s759 = scalar_select %p758, %s757, 127
        %s760 = smul.addr %s759, 8
        %s761 = scalar_lea.vmem %s3, %s760
        %p762 = pneg %p134
        %p763 = pneg %p131
        %p764 = pneg %p155
        %p765 = pneg %p152
        %p766 = pneg %p176
        %p767 = pneg %p173
        %p768 = pneg %p197
        %p769 = pneg %p194
        %p770 = pneg %p218
        %p771 = pneg %p215
        %p772 = pneg %p239
        %p773 = pneg %p236
        %p774 = pneg %p260
        %p775 = pneg %p257
        %p776 = pneg %p281
        %p777 = pneg %p278
        %p778 = pneg %p302
        %p779 = pneg %p299
        %p780 = pneg %p323
        %p781 = pneg %p320
        %p782 = pneg %p344
        %p783 = pneg %p341
        %p784 = pneg %p365
        %p785 = pneg %p362
        %p786 = pneg %p386
        %p787 = pneg %p383
        %p788 = pneg %p412
        %p789 = pneg %p409
        %s790 = sand.u32 %s399, 1
        %s791 = scalar_lea.sflag [#allocation5], %s790
        %s792 = sand.u32 %s399, 1
        %s793 = smul.addr %s792, 64
        %s794 = scalar_lea.vmem [#allocation4], %s793
        %p795 = pneg %p438
        %p796 = pneg %p435
        %s797 = sand.u32 %s425, 1
        %s798 = scalar_lea.sflag [#allocation7], %s797
        %s799 = sand.u32 %s425, 1
        %s800 = smul.addr %s799, 32
        %s801 = scalar_lea.vmem [#allocation6], %s800
        %s802 = smul.u32 4, %s35
        %s803 = smul.u32 4, %s35
        %s804 = smul.u32 64, %s35
        %p805 = scmp.lt.s32.totalorder %s804, 127
        %s806 = scalar_select %p805, %s804, 127
        %s807 = smul.addr %s806, 8
        %s808 = scalar_lea.vmem %s2, %s807
        %s809 = smul.u32 64, %s35
        %s810 = smul.u32 64, %s35
        %p811 = scmp.lt.s32.totalorder %s810, 127
        %s812 = scalar_select %p811, %s810, 127
        %s813 = smul.addr %s812, 8
        %s814 = scalar_lea.vmem %s3, %s813
        %s815 = smul.u32 64, %s35
        %s816 = smul.u32 4, %s35
        %s817 = smul.u32 4, %s35
        %v818 = vld [vmem:[%s734] sm:$0xff]
        %v819 = vld [vmem:[%s734 + $0x8] sm:$0xff]
        %v820 = vld [vmem:[%s734 + $0x10] sm:$0xff]
        %v821 = vld [vmem:[%s734 + $0x18] sm:$0xff]
        %v822 = vld [vmem:[%s727] sm:$0xff]
        %v823 = vld [vmem:[%s727 + $0x8] sm:$0xff]
        %v824 = vld [vmem:[%s727 + $0x10] sm:$0xff]
        %v825 = vld [vmem:[%s727 + $0x18] sm:$0xff]
        %827 = vset.pattern.permute.xlu0 0
        %828 = vperm.xlu0 %827, %v818
        %v829 = vpop.permute.xlu0 %828
        %832 = vset.pattern.permute.xlu0 0
        %833 = vperm.xlu0 %832, %v819
        %v834 = vpop.permute.xlu0 %833
        %837 = vset.pattern.permute.xlu0 0
        %838 = vperm.xlu0 %837, %v820
        %v839 = vpop.permute.xlu0 %838
        %842 = vset.pattern.permute.xlu0 0
        %843 = vperm.xlu0 %842, %v821
        %v844 = vpop.permute.xlu0 %843
        %v846 = vmul.f32 %v829, %v822
        %v847 = vmul.f32 %v834, %v823
        %v848 = vmul.f32 %v839, %v824
        %v849 = vmul.f32 %v844, %v825
        %s850 = scalar_lea.vmem %s734, 32 [#allocation3]
        %v851 = vld [vmem:[%s850] sm:$0xff]
        %v852 = vld [vmem:[%s850 + $0x8] sm:$0xff]
        %v853 = vld [vmem:[%s850 + $0x10] sm:$0xff]
        %v854 = vld [vmem:[%s850 + $0x18] sm:$0xff]
        %s855 = scalar_lea.vmem %s727, 32 [#allocation2]
        %v856 = vld [vmem:[%s855] sm:$0xff]
        %v857 = vld [vmem:[%s855 + $0x8] sm:$0xff]
        %v858 = vld [vmem:[%s855 + $0x10] sm:$0xff]
        %v859 = vld [vmem:[%s855 + $0x18] sm:$0xff]
        %861 = vset.pattern.permute.xlu0 0
        %862 = vperm.xlu0 %861, %v851
        %v863 = vpop.permute.xlu0 %862
        %866 = vset.pattern.permute.xlu0 0
        %867 = vperm.xlu0 %866, %v852
        %v868 = vpop.permute.xlu0 %867
        %871 = vset.pattern.permute.xlu0 0
        %872 = vperm.xlu0 %871, %v853
        %v873 = vpop.permute.xlu0 %872
        %876 = vset.pattern.permute.xlu0 0
        %877 = vperm.xlu0 %876, %v854
        %v878 = vpop.permute.xlu0 %877
        %v880 = vmul.f32 %v863, %v856
        %v881 = vmul.f32 %v868, %v857
        %v882 = vmul.f32 %v873, %v858
        %v883 = vmul.f32 %v878, %v859
        %v884 = vadd.f32 %v846, %v880
        %v885 = vadd.f32 %v847, %v881
        %v886 = vadd.f32 %v848, %v882
        %v887 = vadd.f32 %v849, %v883
        %s888 = scalar_lea.vmem %s734, 64 [#allocation3]
        %v889 = vld [vmem:[%s888] sm:$0xff]
        %v890 = vld [vmem:[%s888 + $0x8] sm:$0xff]
        %v891 = vld [vmem:[%s888 + $0x10] sm:$0xff]
        %v892 = vld [vmem:[%s888 + $0x18] sm:$0xff]
        %s893 = scalar_lea.vmem %s727, 64 [#allocation2]
        %v894 = vld [vmem:[%s893] sm:$0xff]
        %v895 = vld [vmem:[%s893 + $0x8] sm:$0xff]
        %v896 = vld [vmem:[%s893 + $0x10] sm:$0xff]
        %v897 = vld [vmem:[%s893 + $0x18] sm:$0xff]
        %899 = vset.pattern.permute.xlu0 0
        %900 = vperm.xlu0 %899, %v889
        %v901 = vpop.permute.xlu0 %900
        %904 = vset.pattern.permute.xlu0 0
        %905 = vperm.xlu0 %904, %v890
        %v906 = vpop.permute.xlu0 %905
        %909 = vset.pattern.permute.xlu0 0
        %910 = vperm.xlu0 %909, %v891
        %v911 = vpop.permute.xlu0 %910
        %914 = vset.pattern.permute.xlu0 0
        %915 = vperm.xlu0 %914, %v892
        %v916 = vpop.permute.xlu0 %915
        %v918 = vmul.f32 %v901, %v894
        %v919 = vmul.f32 %v906, %v895
        %v920 = vmul.f32 %v911, %v896
        %v921 = vmul.f32 %v916, %v897
        %v922 = vadd.f32 %v884, %v918
        %v923 = vadd.f32 %v885, %v919
        %v924 = vadd.f32 %v886, %v920
        %v925 = vadd.f32 %v887, %v921
        %s926 = scalar_lea.vmem %s734, 96 [#allocation3]
        %v927 = vld [vmem:[%s926] sm:$0xff]
        %v928 = vld [vmem:[%s926 + $0x8] sm:$0xff]
        %v929 = vld [vmem:[%s926 + $0x10] sm:$0xff]
        %v930 = vld [vmem:[%s926 + $0x18] sm:$0xff]
        %s931 = scalar_lea.vmem %s727, 96 [#allocation2]
        %v932 = vld [vmem:[%s931] sm:$0xff]
        %v933 = vld [vmem:[%s931 + $0x8] sm:$0xff]
        %v934 = vld [vmem:[%s931 + $0x10] sm:$0xff]
        %v935 = vld [vmem:[%s931 + $0x18] sm:$0xff]
        %937 = vset.pattern.permute.xlu0 0
        %938 = vperm.xlu0 %937, %v927
        %v939 = vpop.permute.xlu0 %938
        %942 = vset.pattern.permute.xlu0 0
        %943 = vperm.xlu0 %942, %v928
        %v944 = vpop.permute.xlu0 %943
        %947 = vset.pattern.permute.xlu0 0
        %948 = vperm.xlu0 %947, %v929
        %v949 = vpop.permute.xlu0 %948
        %952 = vset.pattern.permute.xlu0 0
        %953 = vperm.xlu0 %952, %v930
        %v954 = vpop.permute.xlu0 %953
        %v956 = vmul.f32 %v939, %v932
        %v957 = vmul.f32 %v944, %v933
        %v958 = vmul.f32 %v949, %v934
        %v959 = vmul.f32 %v954, %v935
        %v960 = vadd.f32 %v922, %v956
        %v961 = vadd.f32 %v923, %v957
        %v962 = vadd.f32 %v924, %v958
        %v963 = vadd.f32 %v925, %v959
        %v964 = vld [vmem:[%s808] sm:$0xff]
        %v965 = vld [vmem:[%s808 + $0x8] sm:$0xff]
        %v966 = vld [vmem:[%s808 + $0x10] sm:$0xff]
        %v967 = vld [vmem:[%s808 + $0x18] sm:$0xff]
        %v968 = vld [vmem:[%s808 + $0x20] sm:$0xff]
        %v969 = vld [vmem:[%s808 + $0x28] sm:$0xff]
        %v970 = vld [vmem:[%s808 + $0x30] sm:$0xff]
        %v971 = vld [vmem:[%s808 + $0x38] sm:$0xff]
        %v972 = vld [vmem:[%s808 + $0x40] sm:$0xff]
        %v973 = vld [vmem:[%s808 + $0x48] sm:$0xff]
        %v974 = vld [vmem:[%s808 + $0x50] sm:$0xff]
        %v975 = vld [vmem:[%s808 + $0x58] sm:$0xff]
        %v976 = vld [vmem:[%s808 + $0x60] sm:$0xff]
        %v977 = vld [vmem:[%s808 + $0x68] sm:$0xff]
        %v978 = vld [vmem:[%s808 + $0x70] sm:$0xff]
        %v979 = vld [vmem:[%s808 + $0x78] sm:$0xff]
        %v980 = vld [vmem:[%s808 + $0x80] sm:$0xff]
        %v981 = vld [vmem:[%s808 + $0x88] sm:$0xff]
        %v982 = vld [vmem:[%s808 + $0x90] sm:$0xff]
        %v983 = vld [vmem:[%s808 + $0x98] sm:$0xff]
        %v984 = vld [vmem:[%s808 + $0xa0] sm:$0xff]
        %v985 = vld [vmem:[%s808 + $0xa8] sm:$0xff]
        %v986 = vld [vmem:[%s808 + $0xb0] sm:$0xff]
        %v987 = vld [vmem:[%s808 + $0xb8] sm:$0xff]
        %v988 = vld [vmem:[%s808 + $0xc0] sm:$0xff]
        %v989 = vld [vmem:[%s808 + $0xc8] sm:$0xff]
        %v990 = vld [vmem:[%s808 + $0xd0] sm:$0xff]
        %v991 = vld [vmem:[%s808 + $0xd8] sm:$0xff]
        %v992 = vld [vmem:[%s808 + $0xe0] sm:$0xff]
        %v993 = vld [vmem:[%s808 + $0xe8] sm:$0xff]
        %v994 = vld [vmem:[%s808 + $0xf0] sm:$0xff]
        %v995 = vld [vmem:[%s808 + $0xf8] sm:$0xff]
        %v996 = vld [vmem:[%s808 + $0x100] sm:$0xff]
        %v997 = vld [vmem:[%s808 + $0x108] sm:$0xff]
        %v998 = vld [vmem:[%s808 + $0x110] sm:$0xff]
        %v999 = vld [vmem:[%s808 + $0x118] sm:$0xff]
        %v1000 = vld [vmem:[%s808 + $0x120] sm:$0xff]
        %v1001 = vld [vmem:[%s808 + $0x128] sm:$0xff]
        %v1002 = vld [vmem:[%s808 + $0x130] sm:$0xff]
        %v1003 = vld [vmem:[%s808 + $0x138] sm:$0xff]
        %v1004 = vld [vmem:[%s808 + $0x140] sm:$0xff]
        %v1005 = vld [vmem:[%s808 + $0x148] sm:$0xff]
        %v1006 = vld [vmem:[%s808 + $0x150] sm:$0xff]
        %v1007 = vld [vmem:[%s808 + $0x158] sm:$0xff]
        %v1008 = vld [vmem:[%s808 + $0x160] sm:$0xff]
        %v1009 = vld [vmem:[%s808 + $0x168] sm:$0xff]
        %v1010 = vld [vmem:[%s808 + $0x170] sm:$0xff]
        %v1011 = vld [vmem:[%s808 + $0x178] sm:$0xff]
        %v1012 = vld [vmem:[%s808 + $0x180] sm:$0xff]
        %v1013 = vld [vmem:[%s808 + $0x188] sm:$0xff]
        %v1014 = vld [vmem:[%s808 + $0x190] sm:$0xff]
        %v1015 = vld [vmem:[%s808 + $0x198] sm:$0xff]
        %v1016 = vld [vmem:[%s808 + $0x1a0] sm:$0xff]
        %v1017 = vld [vmem:[%s808 + $0x1a8] sm:$0xff]
        %v1018 = vld [vmem:[%s808 + $0x1b0] sm:$0xff]
        %v1019 = vld [vmem:[%s808 + $0x1b8] sm:$0xff]
        %v1020 = vld [vmem:[%s808 + $0x1c0] sm:$0xff]
        %v1021 = vld [vmem:[%s808 + $0x1c8] sm:$0xff]
        %v1022 = vld [vmem:[%s808 + $0x1d0] sm:$0xff]
        %v1023 = vld [vmem:[%s808 + $0x1d8] sm:$0xff]
        %v1024 = vld [vmem:[%s808 + $0x1e0] sm:$0xff]
        %v1025 = vld [vmem:[%s808 + $0x1e8] sm:$0xff]
        %v1026 = vld [vmem:[%s808 + $0x1f0] sm:$0xff]
        %v1027 = vld [vmem:[%s808 + $0x1f8] sm:$0xff]
        %v1028 = vld [vmem:[%s4] sm:$0xf]
        %v1029 = vld [vmem:[%s5] sm:$0x1]
        %v1031 = vlaneseq
        %v1032 = vshrl.u32 %v1031, 7
        %v1033 = vsub.s32 0, %v1032
        %v1034 = vrot.slane %v1029, %v1033
        %vm1036 = vcmask 31744
        %v1038 = vsel %vm1036, %v964, 0
        %v1041 = vsel %vm1036, %v965, 0
        %v1044 = vsel %vm1036, %v966, 0
        %v1047 = vsel %vm1036, %v967, 0
        %v1050 = vsel %vm1036, %v968, 0
        %v1053 = vsel %vm1036, %v969, 0
        %v1056 = vsel %vm1036, %v970, 0
        %v1059 = vsel %vm1036, %v971, 0
        %v1062 = vsel %vm1036, %v972, 0
        %v1065 = vsel %vm1036, %v973, 0
        %v1068 = vsel %vm1036, %v974, 0
        %v1071 = vsel %vm1036, %v975, 0
        %v1074 = vsel %vm1036, %v976, 0
        %v1077 = vsel %vm1036, %v977, 0
        %v1080 = vsel %vm1036, %v978, 0
        %v1083 = vsel %vm1036, %v979, 0
        %v1086 = vsel %vm1036, %v980, 0
        %v1089 = vsel %vm1036, %v981, 0
        %v1092 = vsel %vm1036, %v982, 0
        %v1095 = vsel %vm1036, %v983, 0
        %v1098 = vsel %vm1036, %v984, 0
        %v1101 = vsel %vm1036, %v985, 0
        %v1104 = vsel %vm1036, %v986, 0
        %v1107 = vsel %vm1036, %v987, 0
        %v1110 = vsel %vm1036, %v988, 0
        %v1113 = vsel %vm1036, %v989, 0
        %v1116 = vsel %vm1036, %v990, 0
        %v1119 = vsel %vm1036, %v991, 0
        %v1122 = vsel %vm1036, %v992, 0
        %v1125 = vsel %vm1036, %v993, 0
        %v1128 = vsel %vm1036, %v994, 0
        %v1131 = vsel %vm1036, %v995, 0
        %v1134 = vsel %vm1036, %v996, 0
        %v1137 = vsel %vm1036, %v997, 0
        %v1140 = vsel %vm1036, %v998, 0
        %v1143 = vsel %vm1036, %v999, 0
        %v1146 = vsel %vm1036, %v1000, 0
        %v1149 = vsel %vm1036, %v1001, 0
        %v1152 = vsel %vm1036, %v1002, 0
        %v1155 = vsel %vm1036, %v1003, 0
        %v1158 = vsel %vm1036, %v1004, 0
        %v1161 = vsel %vm1036, %v1005, 0
        %v1164 = vsel %vm1036, %v1006, 0
        %v1167 = vsel %vm1036, %v1007, 0
        %v1170 = vsel %vm1036, %v1008, 0
        %v1173 = vsel %vm1036, %v1009, 0
        %v1176 = vsel %vm1036, %v1010, 0
        %v1179 = vsel %vm1036, %v1011, 0
        %v1182 = vsel %vm1036, %v1012, 0
        %v1185 = vsel %vm1036, %v1013, 0
        %v1188 = vsel %vm1036, %v1014, 0
        %v1191 = vsel %vm1036, %v1015, 0
        %v1194 = vsel %vm1036, %v1016, 0
        %v1197 = vsel %vm1036, %v1017, 0
        %v1200 = vsel %vm1036, %v1018, 0
        %v1203 = vsel %vm1036, %v1019, 0
        %v1206 = vsel %vm1036, %v1020, 0
        %v1209 = vsel %vm1036, %v1021, 0
        %v1212 = vsel %vm1036, %v1022, 0
        %v1215 = vsel %vm1036, %v1023, 0
        %v1218 = vsel %vm1036, %v1024, 0
        %v1221 = vsel %vm1036, %v1025, 0
        %v1224 = vsel %vm1036, %v1026, 0
        %v1227 = vsel %vm1036, %v1027, 0
        %vm1229 = vcmask 1043456
        %v1231 = vsel %vm1229, %v1028, 0
        %1233 = vmatprep.subr.mxu0 0.0
        %1234 = vmatpush1.msra.mxu0 0.0
        %1235 = vmatprep.subr.mxu0 0.0
        %1236 = vmatpush1.msra.mxu0 0.0
        %1237 = vmatprep.subr.mxu0 0.0
        %1238 = vmatpush1.msra.mxu0 0.0
        %1239 = vmatprep.subr.mxu0 0.0
        %1240 = vmatpush1.msra.mxu0 0.0
        %1241 = vmatprep.subr.mxu0 0.0
        %1242 = vmatpush1.msra.mxu0 0.0
        %1243 = vmatprep.subr.mxu0 0.0
        %1244 = vmatpush1.msra.mxu0 0.0
        %1245 = vmatprep.subr.mxu0 0.0
        %1246 = vmatpush1.msra.mxu0 0.0
        %1247 = vmatprep.subr.mxu0 0.0
        %1248 = vmatpush1.msra.mxu0 0.0
        %1249 = vmatprep.subr.mxu0 0.0
        %1250 = vmatpush1.msra.mxu0 0.0
        %1251 = vmatprep.subr.mxu0 0.0
        %1252 = vmatpush1.msra.mxu0 0.0
        %1253 = vmatprep.subr.mxu0 0.0
        %1254 = vmatpush1.msra.mxu0 0.0
        %1255 = vmatprep.subr.mxu0 0.0
        %1256 = vmatpush1.msra.mxu0 0.0
        %1257 = vmatprep.subr.mxu0 0.0
        %1258 = vmatpush1.msra.mxu0 0.0
        %1259 = vmatprep.subr.mxu0 0.0
        %1260 = vmatpush1.msra.mxu0 0.0
        %1261 = vmatprep.subr.mxu0 0.0
        %1262 = vmatpush1.msra.mxu0 0.0
        %1263 = vmatprep.subr.mxu0 0.0
        %1264 = vmatpush1.msra.mxu0 %v1231
        %1265 = vmatprep.subr.mxu0 0.0
        %1266 = vmatpush2.msra.mxu0 0.0
        %1267 = vmatprep.subr.mxu0 0.0
        %1268 = vmatpush2.msra.mxu0 0.0
        %1269 = vmatprep.subr.mxu0 0.0
        %1270 = vmatpush2.msra.mxu0 0.0
        %1271 = vmatprep.subr.mxu0 0.0
        %1272 = vmatpush2.msra.mxu0 0.0
        %1273 = vmatprep.subr.mxu0 0.0
        %1274 = vmatpush2.msra.mxu0 0.0
        %1275 = vmatprep.subr.mxu0 0.0
        %1276 = vmatpush2.msra.mxu0 0.0
        %1277 = vmatprep.subr.mxu0 0.0
        %1278 = vmatpush2.msra.mxu0 0.0
        %1279 = vmatprep.subr.mxu0 0.0
        %1280 = vmatpush2.msra.mxu0 0.0
        %1281 = vmatprep.subr.mxu0 0.0
        %1282 = vmatpush2.msra.mxu0 0.0
        %1283 = vmatprep.subr.mxu0 0.0
        %1284 = vmatpush2.msra.mxu0 0.0
        %1285 = vmatprep.subr.mxu0 0.0
        %1286 = vmatpush2.msra.mxu0 0.0
        %1287 = vmatprep.subr.mxu0 0.0
        %1288 = vmatpush2.msra.mxu0 0.0
        %1289 = vmatprep.subr.mxu0 0.0
        %1290 = vmatpush2.msra.mxu0 0.0
        %1291 = vmatprep.subr.mxu0 0.0
        %1292 = vmatpush2.msra.mxu0 0.0
        %1293 = vmatprep.subr.mxu0 0.0
        %1294 = vmatpush2.msra.mxu0 0.0
        %1295 = vmatprep.subr.mxu0 0.0
        %1296 = vmatpush2.msra.mxu0 0.0
        %1297 = vmatprep.mubr.f32.mxu0 0.0
        %1298 = vmatmul.mubr.f32.gmra.mxu0 %v1038
        %v1299 = vpop.f32.mrf.mxu0
        %v1300 = vadd.f32 %v1034, %v1299
        %v1301 = vpop.f32.mrf.mxu0
        %1302 = vmatprep.mubr.f32.mxu0 0.0
        %1303 = vmatmul.mubr.f32.gmra.mxu0 %v1041
        %v1304 = vpop.f32.mrf.mxu0
        %v1305 = vadd.f32 %v1034, %v1304
        %v1306 = vpop.f32.mrf.mxu0
        %1307 = vmatprep.mubr.f32.mxu0 0.0
        %1308 = vmatmul.mubr.f32.gmra.mxu0 %v1044
        %v1309 = vpop.f32.mrf.mxu0
        %v1310 = vadd.f32 %v1034, %v1309
        %v1311 = vpop.f32.mrf.mxu0
        %1312 = vmatprep.mubr.f32.mxu0 0.0
        %1313 = vmatmul.mubr.f32.gmra.mxu0 %v1047
        %v1314 = vpop.f32.mrf.mxu0
        %v1315 = vadd.f32 %v1034, %v1314
        %v1316 = vpop.f32.mrf.mxu0
        %1317 = vmatprep.mubr.f32.mxu0 0.0
        %1318 = vmatmul.mubr.f32.gmra.mxu0 %v1050
        %v1319 = vpop.f32.mrf.mxu0
        %v1320 = vadd.f32 %v1034, %v1319
        %v1321 = vpop.f32.mrf.mxu0
        %1322 = vmatprep.mubr.f32.mxu0 0.0
        %1323 = vmatmul.mubr.f32.gmra.mxu0 %v1053
        %v1324 = vpop.f32.mrf.mxu0
        %v1325 = vadd.f32 %v1034, %v1324
        %v1326 = vpop.f32.mrf.mxu0
        %1327 = vmatprep.mubr.f32.mxu0 0.0
        %1328 = vmatmul.mubr.f32.gmra.mxu0 %v1056
        %v1329 = vpop.f32.mrf.mxu0
        %v1330 = vadd.f32 %v1034, %v1329
        %v1331 = vpop.f32.mrf.mxu0
        %1332 = vmatprep.mubr.f32.mxu0 0.0
        %1333 = vmatmul.mubr.f32.gmra.mxu0 %v1059
        %v1334 = vpop.f32.mrf.mxu0
        %v1335 = vadd.f32 %v1034, %v1334
        %v1336 = vpop.f32.mrf.mxu0
        %1337 = vmatprep.mubr.f32.mxu0 0.0
        %1338 = vmatmul.mubr.f32.gmra.mxu0 %v1062
        %v1339 = vpop.f32.mrf.mxu0
        %v1340 = vadd.f32 %v1034, %v1339
        %v1341 = vpop.f32.mrf.mxu0
        %1342 = vmatprep.mubr.f32.mxu0 0.0
        %1343 = vmatmul.mubr.f32.gmra.mxu0 %v1065
        %v1344 = vpop.f32.mrf.mxu0
        %v1345 = vadd.f32 %v1034, %v1344
        %v1346 = vpop.f32.mrf.mxu0
        %1347 = vmatprep.mubr.f32.mxu0 0.0
        %1348 = vmatmul.mubr.f32.gmra.mxu0 %v1068
        %v1349 = vpop.f32.mrf.mxu0
        %v1350 = vadd.f32 %v1034, %v1349
        %v1351 = vpop.f32.mrf.mxu0
        %1352 = vmatprep.mubr.f32.mxu0 0.0
        %1353 = vmatmul.mubr.f32.gmra.mxu0 %v1071
        %v1354 = vpop.f32.mrf.mxu0
        %v1355 = vadd.f32 %v1034, %v1354
        %v1356 = vpop.f32.mrf.mxu0
        %1357 = vmatprep.mubr.f32.mxu0 0.0
        %1358 = vmatmul.mubr.f32.gmra.mxu0 %v1074
        %v1359 = vpop.f32.mrf.mxu0
        %v1360 = vadd.f32 %v1034, %v1359
        %v1361 = vpop.f32.mrf.mxu0
        %1362 = vmatprep.mubr.f32.mxu0 0.0
        %1363 = vmatmul.mubr.f32.gmra.mxu0 %v1077
        %v1364 = vpop.f32.mrf.mxu0
        %v1365 = vadd.f32 %v1034, %v1364
        %v1366 = vpop.f32.mrf.mxu0
        %1367 = vmatprep.mubr.f32.mxu0 0.0
        %1368 = vmatmul.mubr.f32.gmra.mxu0 %v1080
        %v1369 = vpop.f32.mrf.mxu0
        %v1370 = vadd.f32 %v1034, %v1369
        %v1371 = vpop.f32.mrf.mxu0
        %1372 = vmatprep.mubr.f32.mxu0 0.0
        %1373 = vmatmul.mubr.f32.gmra.mxu0 %v1083
        %v1374 = vpop.f32.mrf.mxu0
        %v1375 = vadd.f32 %v1034, %v1374
        %v1376 = vpop.f32.mrf.mxu0
        %1377 = vmatprep.mubr.f32.mxu0 0.0
        %1378 = vmatmul.mubr.f32.gmra.mxu0 %v1086
        %v1379 = vpop.f32.mrf.mxu0
        %v1380 = vadd.f32 %v1034, %v1379
        %v1381 = vpop.f32.mrf.mxu0
        %1382 = vmatprep.mubr.f32.mxu0 0.0
        %1383 = vmatmul.mubr.f32.gmra.mxu0 %v1089
        %v1384 = vpop.f32.mrf.mxu0
        %v1385 = vadd.f32 %v1034, %v1384
        %v1386 = vpop.f32.mrf.mxu0
        %1387 = vmatprep.mubr.f32.mxu0 0.0
        %1388 = vmatmul.mubr.f32.gmra.mxu0 %v1092
        %v1389 = vpop.f32.mrf.mxu0
        %v1390 = vadd.f32 %v1034, %v1389
        %v1391 = vpop.f32.mrf.mxu0
        %1392 = vmatprep.mubr.f32.mxu0 0.0
        %1393 = vmatmul.mubr.f32.gmra.mxu0 %v1095
        %v1394 = vpop.f32.mrf.mxu0
        %v1395 = vadd.f32 %v1034, %v1394
        %v1396 = vpop.f32.mrf.mxu0
        %1397 = vmatprep.mubr.f32.mxu0 0.0
        %1398 = vmatmul.mubr.f32.gmra.mxu0 %v1098
        %v1399 = vpop.f32.mrf.mxu0
        %v1400 = vadd.f32 %v1034, %v1399
        %v1401 = vpop.f32.mrf.mxu0
        %1402 = vmatprep.mubr.f32.mxu0 0.0
        %1403 = vmatmul.mubr.f32.gmra.mxu0 %v1101
        %v1404 = vpop.f32.mrf.mxu0
        %v1405 = vadd.f32 %v1034, %v1404
        %v1406 = vpop.f32.mrf.mxu0
        %1407 = vmatprep.mubr.f32.mxu0 0.0
        %1408 = vmatmul.mubr.f32.gmra.mxu0 %v1104
        %v1409 = vpop.f32.mrf.mxu0
        %v1410 = vadd.f32 %v1034, %v1409
        %v1411 = vpop.f32.mrf.mxu0
        %1412 = vmatprep.mubr.f32.mxu0 0.0
        %1413 = vmatmul.mubr.f32.gmra.mxu0 %v1107
        %v1414 = vpop.f32.mrf.mxu0
        %v1415 = vadd.f32 %v1034, %v1414
        %v1416 = vpop.f32.mrf.mxu0
        %1417 = vmatprep.mubr.f32.mxu0 0.0
        %1418 = vmatmul.mubr.f32.gmra.mxu0 %v1110
        %v1419 = vpop.f32.mrf.mxu0
        %v1420 = vadd.f32 %v1034, %v1419
        %v1421 = vpop.f32.mrf.mxu0
        %1422 = vmatprep.mubr.f32.mxu0 0.0
        %1423 = vmatmul.mubr.f32.gmra.mxu0 %v1113
        %v1424 = vpop.f32.mrf.mxu0
        %v1425 = vadd.f32 %v1034, %v1424
        %v1426 = vpop.f32.mrf.mxu0
        %1427 = vmatprep.mubr.f32.mxu0 0.0
        %1428 = vmatmul.mubr.f32.gmra.mxu0 %v1116
        %v1429 = vpop.f32.mrf.mxu0
        %v1430 = vadd.f32 %v1034, %v1429
        %v1431 = vpop.f32.mrf.mxu0
        %1432 = vmatprep.mubr.f32.mxu0 0.0
        %1433 = vmatmul.mubr.f32.gmra.mxu0 %v1119
        %v1434 = vpop.f32.mrf.mxu0
        %v1435 = vadd.f32 %v1034, %v1434
        %v1436 = vpop.f32.mrf.mxu0
        %1437 = vmatprep.mubr.f32.mxu0 0.0
        %1438 = vmatmul.mubr.f32.gmra.mxu0 %v1122
        %v1439 = vpop.f32.mrf.mxu0
        %v1440 = vadd.f32 %v1034, %v1439
        %v1441 = vpop.f32.mrf.mxu0
        %1442 = vmatprep.mubr.f32.mxu0 0.0
        %1443 = vmatmul.mubr.f32.gmra.mxu0 %v1125
        %v1444 = vpop.f32.mrf.mxu0
        %v1445 = vadd.f32 %v1034, %v1444
        %v1446 = vpop.f32.mrf.mxu0
        %1447 = vmatprep.mubr.f32.mxu0 0.0
        %1448 = vmatmul.mubr.f32.gmra.mxu0 %v1128
        %v1449 = vpop.f32.mrf.mxu0
        %v1450 = vadd.f32 %v1034, %v1449
        %v1451 = vpop.f32.mrf.mxu0
        %1452 = vmatprep.mubr.f32.mxu0 0.0
        %1453 = vmatmul.mubr.f32.gmra.mxu0 %v1131
        %v1454 = vpop.f32.mrf.mxu0
        %v1455 = vadd.f32 %v1034, %v1454
        %v1456 = vpop.f32.mrf.mxu0
        %1457 = vmatprep.mubr.f32.mxu0 0.0
        %1458 = vmatmul.mubr.f32.gmra.mxu0 %v1134
        %v1459 = vpop.f32.mrf.mxu0
        %v1460 = vadd.f32 %v1034, %v1459
        %v1461 = vpop.f32.mrf.mxu0
        %1462 = vmatprep.mubr.f32.mxu0 0.0
        %1463 = vmatmul.mubr.f32.gmra.mxu0 %v1137
        %v1464 = vpop.f32.mrf.mxu0
        %v1465 = vadd.f32 %v1034, %v1464
        %v1466 = vpop.f32.mrf.mxu0
        %1467 = vmatprep.mubr.f32.mxu0 0.0
        %1468 = vmatmul.mubr.f32.gmra.mxu0 %v1140
        %v1469 = vpop.f32.mrf.mxu0
        %v1470 = vadd.f32 %v1034, %v1469
        %v1471 = vpop.f32.mrf.mxu0
        %1472 = vmatprep.mubr.f32.mxu0 0.0
        %1473 = vmatmul.mubr.f32.gmra.mxu0 %v1143
        %v1474 = vpop.f32.mrf.mxu0
        %v1475 = vadd.f32 %v1034, %v1474
        %v1476 = vpop.f32.mrf.mxu0
        %1477 = vmatprep.mubr.f32.mxu0 0.0
        %1478 = vmatmul.mubr.f32.gmra.mxu0 %v1146
        %v1479 = vpop.f32.mrf.mxu0
        %v1480 = vadd.f32 %v1034, %v1479
        %v1481 = vpop.f32.mrf.mxu0
        %1482 = vmatprep.mubr.f32.mxu0 0.0
        %1483 = vmatmul.mubr.f32.gmra.mxu0 %v1149
        %v1484 = vpop.f32.mrf.mxu0
        %v1485 = vadd.f32 %v1034, %v1484
        %v1486 = vpop.f32.mrf.mxu0
        %1487 = vmatprep.mubr.f32.mxu0 0.0
        %1488 = vmatmul.mubr.f32.gmra.mxu0 %v1152
        %v1489 = vpop.f32.mrf.mxu0
        %v1490 = vadd.f32 %v1034, %v1489
        %v1491 = vpop.f32.mrf.mxu0
        %1492 = vmatprep.mubr.f32.mxu0 0.0
        %1493 = vmatmul.mubr.f32.gmra.mxu0 %v1155
        %v1494 = vpop.f32.mrf.mxu0
        %v1495 = vadd.f32 %v1034, %v1494
        %v1496 = vpop.f32.mrf.mxu0
        %1497 = vmatprep.mubr.f32.mxu0 0.0
        %1498 = vmatmul.mubr.f32.gmra.mxu0 %v1158
        %v1499 = vpop.f32.mrf.mxu0
        %v1500 = vadd.f32 %v1034, %v1499
        %v1501 = vpop.f32.mrf.mxu0
        %1502 = vmatprep.mubr.f32.mxu0 0.0
        %1503 = vmatmul.mubr.f32.gmra.mxu0 %v1161
        %v1504 = vpop.f32.mrf.mxu0
        %v1505 = vadd.f32 %v1034, %v1504
        %v1506 = vpop.f32.mrf.mxu0
        %1507 = vmatprep.mubr.f32.mxu0 0.0
        %1508 = vmatmul.mubr.f32.gmra.mxu0 %v1164
        %v1509 = vpop.f32.mrf.mxu0
        %v1510 = vadd.f32 %v1034, %v1509
        %v1511 = vpop.f32.mrf.mxu0
        %1512 = vmatprep.mubr.f32.mxu0 0.0
        %1513 = vmatmul.mubr.f32.gmra.mxu0 %v1167
        %v1514 = vpop.f32.mrf.mxu0
        %v1515 = vadd.f32 %v1034, %v1514
        %v1516 = vpop.f32.mrf.mxu0
        %1517 = vmatprep.mubr.f32.mxu0 0.0
        %1518 = vmatmul.mubr.f32.gmra.mxu0 %v1170
        %v1519 = vpop.f32.mrf.mxu0
        %v1520 = vadd.f32 %v1034, %v1519
        %v1521 = vpop.f32.mrf.mxu0
        %1522 = vmatprep.mubr.f32.mxu0 0.0
        %1523 = vmatmul.mubr.f32.gmra.mxu0 %v1173
        %v1524 = vpop.f32.mrf.mxu0
        %v1525 = vadd.f32 %v1034, %v1524
        %v1526 = vpop.f32.mrf.mxu0
        %1527 = vmatprep.mubr.f32.mxu0 0.0
        %1528 = vmatmul.mubr.f32.gmra.mxu0 %v1176
        %v1529 = vpop.f32.mrf.mxu0
        %v1530 = vadd.f32 %v1034, %v1529
        %v1531 = vpop.f32.mrf.mxu0
        %1532 = vmatprep.mubr.f32.mxu0 0.0
        %1533 = vmatmul.mubr.f32.gmra.mxu0 %v1179
        %v1534 = vpop.f32.mrf.mxu0
        %v1535 = vadd.f32 %v1034, %v1534
        %v1536 = vpop.f32.mrf.mxu0
        %1537 = vmatprep.mubr.f32.mxu0 0.0
        %1538 = vmatmul.mubr.f32.gmra.mxu0 %v1182
        %v1539 = vpop.f32.mrf.mxu0
        %v1540 = vadd.f32 %v1034, %v1539
        %v1541 = vpop.f32.mrf.mxu0
        %1542 = vmatprep.mubr.f32.mxu0 0.0
        %1543 = vmatmul.mubr.f32.gmra.mxu0 %v1185
        %v1544 = vpop.f32.mrf.mxu0
        %v1545 = vadd.f32 %v1034, %v1544
        %v1546 = vpop.f32.mrf.mxu0
        %1547 = vmatprep.mubr.f32.mxu0 0.0
        %1548 = vmatmul.mubr.f32.gmra.mxu0 %v1188
        %v1549 = vpop.f32.mrf.mxu0
        %v1550 = vadd.f32 %v1034, %v1549
        %v1551 = vpop.f32.mrf.mxu0
        %1552 = vmatprep.mubr.f32.mxu0 0.0
        %1553 = vmatmul.mubr.f32.gmra.mxu0 %v1191
        %v1554 = vpop.f32.mrf.mxu0
        %v1555 = vadd.f32 %v1034, %v1554
        %v1556 = vpop.f32.mrf.mxu0
        %1557 = vmatprep.mubr.f32.mxu0 0.0
        %1558 = vmatmul.mubr.f32.gmra.mxu0 %v1194
        %v1559 = vpop.f32.mrf.mxu0
        %v1560 = vadd.f32 %v1034, %v1559
        %v1561 = vpop.f32.mrf.mxu0
        %1562 = vmatprep.mubr.f32.mxu0 0.0
        %1563 = vmatmul.mubr.f32.gmra.mxu0 %v1197
        %v1564 = vpop.f32.mrf.mxu0
        %v1565 = vadd.f32 %v1034, %v1564
        %v1566 = vpop.f32.mrf.mxu0
        %1567 = vmatprep.mubr.f32.mxu0 0.0
        %1568 = vmatmul.mubr.f32.gmra.mxu0 %v1200
        %v1569 = vpop.f32.mrf.mxu0
        %v1570 = vadd.f32 %v1034, %v1569
        %v1571 = vpop.f32.mrf.mxu0
        %1572 = vmatprep.mubr.f32.mxu0 0.0
        %1573 = vmatmul.mubr.f32.gmra.mxu0 %v1203
        %v1574 = vpop.f32.mrf.mxu0
        %v1575 = vadd.f32 %v1034, %v1574
        %v1576 = vpop.f32.mrf.mxu0
        %1577 = vmatprep.mubr.f32.mxu0 0.0
        %1578 = vmatmul.mubr.f32.gmra.mxu0 %v1206
        %v1579 = vpop.f32.mrf.mxu0
        %v1580 = vadd.f32 %v1034, %v1579
        %v1581 = vpop.f32.mrf.mxu0
        %1582 = vmatprep.mubr.f32.mxu0 0.0
        %1583 = vmatmul.mubr.f32.gmra.mxu0 %v1209
        %v1584 = vpop.f32.mrf.mxu0
        %v1585 = vadd.f32 %v1034, %v1584
        %v1586 = vpop.f32.mrf.mxu0
        %1587 = vmatprep.mubr.f32.mxu0 0.0
        %1588 = vmatmul.mubr.f32.gmra.mxu0 %v1212
        %v1589 = vpop.f32.mrf.mxu0
        %v1590 = vadd.f32 %v1034, %v1589
        %v1591 = vpop.f32.mrf.mxu0
        %1592 = vmatprep.mubr.f32.mxu0 0.0
        %1593 = vmatmul.mubr.f32.gmra.mxu0 %v1215
        %v1594 = vpop.f32.mrf.mxu0
        %v1595 = vadd.f32 %v1034, %v1594
        %v1596 = vpop.f32.mrf.mxu0
        %1597 = vmatprep.mubr.f32.mxu0 0.0
        %1598 = vmatmul.mubr.f32.gmra.mxu0 %v1218
        %v1599 = vpop.f32.mrf.mxu0
        %v1600 = vadd.f32 %v1034, %v1599
        %v1601 = vpop.f32.mrf.mxu0
        %1602 = vmatprep.mubr.f32.mxu0 0.0
        %1603 = vmatmul.mubr.f32.gmra.mxu0 %v1221
        %v1604 = vpop.f32.mrf.mxu0
        %v1605 = vadd.f32 %v1034, %v1604
        %v1606 = vpop.f32.mrf.mxu0
        %1607 = vmatprep.mubr.f32.mxu0 0.0
        %1608 = vmatmul.mubr.f32.gmra.mxu0 %v1224
        %v1609 = vpop.f32.mrf.mxu0
        %v1610 = vadd.f32 %v1034, %v1609
        %v1611 = vpop.f32.mrf.mxu0
        %1612 = vmatprep.mubr.f32.mxu0 0.0
        %1613 = vmatmul.mubr.f32.gmra.mxu0 %v1227
        %v1614 = vpop.f32.mrf.mxu0
        %v1615 = vadd.f32 %v1034, %v1614
        %v1616 = vpop.f32.mrf.mxu0
        %1617 = vdwg.mxu0
        %v1618 = vmax.f32 %v1300, 0.0
        %v1619 = vmax.f32 %v1305, 0.0
        %v1620 = vmax.f32 %v1310, 0.0
        %v1621 = vmax.f32 %v1315, 0.0
        %v1622 = vmax.f32 %v1320, 0.0
        %v1623 = vmax.f32 %v1325, 0.0
        %v1624 = vmax.f32 %v1330, 0.0
        %v1625 = vmax.f32 %v1335, 0.0
        %v1626 = vmax.f32 %v1340, 0.0
        %v1627 = vmax.f32 %v1345, 0.0
        %v1628 = vmax.f32 %v1350, 0.0
        %v1629 = vmax.f32 %v1355, 0.0
        %v1630 = vmax.f32 %v1360, 0.0
        %v1631 = vmax.f32 %v1365, 0.0
        %v1632 = vmax.f32 %v1370, 0.0
        %v1633 = vmax.f32 %v1375, 0.0
        %v1634 = vmax.f32 %v1380, 0.0
        %v1635 = vmax.f32 %v1385, 0.0
        %v1636 = vmax.f32 %v1390, 0.0
        %v1637 = vmax.f32 %v1395, 0.0
        %v1638 = vmax.f32 %v1400, 0.0
        %v1639 = vmax.f32 %v1405, 0.0
        %v1640 = vmax.f32 %v1410, 0.0
        %v1641 = vmax.f32 %v1415, 0.0
        %v1642 = vmax.f32 %v1420, 0.0
        %v1643 = vmax.f32 %v1425, 0.0
        %v1644 = vmax.f32 %v1430, 0.0
        %v1645 = vmax.f32 %v1435, 0.0
        %v1646 = vmax.f32 %v1440, 0.0
        %v1647 = vmax.f32 %v1445, 0.0
        %v1648 = vmax.f32 %v1450, 0.0
        %v1649 = vmax.f32 %v1455, 0.0
        %v1650 = vmax.f32 %v1460, 0.0
        %v1651 = vmax.f32 %v1465, 0.0
        %v1652 = vmax.f32 %v1470, 0.0
        %v1653 = vmax.f32 %v1475, 0.0
        %v1654 = vmax.f32 %v1480, 0.0
        %v1655 = vmax.f32 %v1485, 0.0
        %v1656 = vmax.f32 %v1490, 0.0
        %v1657 = vmax.f32 %v1495, 0.0
        %v1658 = vmax.f32 %v1500, 0.0
        %v1659 = vmax.f32 %v1505, 0.0
        %v1660 = vmax.f32 %v1510, 0.0
        %v1661 = vmax.f32 %v1515, 0.0
        %v1662 = vmax.f32 %v1520, 0.0
        %v1663 = vmax.f32 %v1525, 0.0
        %v1664 = vmax.f32 %v1530, 0.0
        %v1665 = vmax.f32 %v1535, 0.0
        %v1666 = vmax.f32 %v1540, 0.0
        %v1667 = vmax.f32 %v1545, 0.0
        %v1668 = vmax.f32 %v1550, 0.0
        %v1669 = vmax.f32 %v1555, 0.0
        %v1670 = vmax.f32 %v1560, 0.0
        %v1671 = vmax.f32 %v1565, 0.0
        %v1672 = vmax.f32 %v1570, 0.0
        %v1673 = vmax.f32 %v1575, 0.0
        %v1674 = vmax.f32 %v1580, 0.0
        %v1675 = vmax.f32 %v1585, 0.0
        %v1676 = vmax.f32 %v1590, 0.0
        %v1677 = vmax.f32 %v1595, 0.0
        %v1678 = vmax.f32 %v1600, 0.0
        %v1679 = vmax.f32 %v1605, 0.0
        %v1680 = vmax.f32 %v1610, 0.0
        %v1681 = vmax.f32 %v1615, 0.0
        %v1682 = vld [vmem:[%s6] sm:$0xff]
        %v1683 = vld [vmem:[%s6 + $0x8] sm:$0xff]
        %v1684 = vld [vmem:[%s6 + $0x10] sm:$0xff]
        %v1685 = vld [vmem:[%s6 + $0x18] sm:$0xff]
        %v1686 = vld [vmem:[%s7] sm:$0x1]
        %v1688 = vlaneseq
        %v1689 = vshrl.u32 %v1688, 7
        %v1690 = vsub.s32 0, %v1689
        %v1691 = vrot.slane %v1686, %v1690
        %vm1693 = vcmask 261120
        %v1695 = vsel %vm1693, %v1618, 0
        %v1698 = vsel %vm1693, %v1619, 0
        %v1701 = vsel %vm1693, %v1620, 0
        %v1704 = vsel %vm1693, %v1621, 0
        %v1707 = vsel %vm1693, %v1622, 0
        %v1710 = vsel %vm1693, %v1623, 0
        %v1713 = vsel %vm1693, %v1624, 0
        %v1716 = vsel %vm1693, %v1625, 0
        %v1719 = vsel %vm1693, %v1626, 0
        %v1722 = vsel %vm1693, %v1627, 0
        %v1725 = vsel %vm1693, %v1628, 0
        %v1728 = vsel %vm1693, %v1629, 0
        %v1731 = vsel %vm1693, %v1630, 0
        %v1734 = vsel %vm1693, %v1631, 0
        %v1737 = vsel %vm1693, %v1632, 0
        %v1740 = vsel %vm1693, %v1633, 0
        %v1743 = vsel %vm1693, %v1634, 0
        %v1746 = vsel %vm1693, %v1635, 0
        %v1749 = vsel %vm1693, %v1636, 0
        %v1752 = vsel %vm1693, %v1637, 0
        %v1755 = vsel %vm1693, %v1638, 0
        %v1758 = vsel %vm1693, %v1639, 0
        %v1761 = vsel %vm1693, %v1640, 0
        %v1764 = vsel %vm1693, %v1641, 0
        %v1767 = vsel %vm1693, %v1642, 0
        %v1770 = vsel %vm1693, %v1643, 0
        %v1773 = vsel %vm1693, %v1644, 0
        %v1776 = vsel %vm1693, %v1645, 0
        %v1779 = vsel %vm1693, %v1646, 0
        %v1782 = vsel %vm1693, %v1647, 0
        %v1785 = vsel %vm1693, %v1648, 0
        %v1788 = vsel %vm1693, %v1649, 0
        %v1791 = vsel %vm1693, %v1650, 0
        %v1794 = vsel %vm1693, %v1651, 0
        %v1797 = vsel %vm1693, %v1652, 0
        %v1800 = vsel %vm1693, %v1653, 0
        %v1803 = vsel %vm1693, %v1654, 0
        %v1806 = vsel %vm1693, %v1655, 0
        %v1809 = vsel %vm1693, %v1656, 0
        %v1812 = vsel %vm1693, %v1657, 0
        %v1815 = vsel %vm1693, %v1658, 0
        %v1818 = vsel %vm1693, %v1659, 0
        %v1821 = vsel %vm1693, %v1660, 0
        %v1824 = vsel %vm1693, %v1661, 0
        %v1827 = vsel %vm1693, %v1662, 0
        %v1830 = vsel %vm1693, %v1663, 0
        %v1833 = vsel %vm1693, %v1664, 0
        %v1836 = vsel %vm1693, %v1665, 0
        %v1839 = vsel %vm1693, %v1666, 0
        %v1842 = vsel %vm1693, %v1667, 0
        %v1845 = vsel %vm1693, %v1668, 0
        %v1848 = vsel %vm1693, %v1669, 0
        %v1851 = vsel %vm1693, %v1670, 0
        %v1854 = vsel %vm1693, %v1671, 0
        %v1857 = vsel %vm1693, %v1672, 0
        %v1860 = vsel %vm1693, %v1673, 0
        %v1863 = vsel %vm1693, %v1674, 0
        %v1866 = vsel %vm1693, %v1675, 0
        %v1869 = vsel %vm1693, %v1676, 0
        %v1872 = vsel %vm1693, %v1677, 0
        %v1875 = vsel %vm1693, %v1678, 0
        %v1878 = vsel %vm1693, %v1679, 0
        %v1881 = vsel %vm1693, %v1680, 0
        %v1884 = vsel %vm1693, %v1681, 0
        %1886 = vmatprep.subr.mxu0 0.0
        %1887 = vmatpush1.msra.mxu0 0.0
        %1888 = vmatprep.subr.mxu0 0.0
        %1889 = vmatpush1.msra.mxu0 0.0
        %1890 = vmatprep.subr.mxu0 0.0
        %1891 = vmatpush1.msra.mxu0 0.0
        %1892 = vmatprep.subr.mxu0 0.0
        %1893 = vmatpush1.msra.mxu0 0.0
        %1894 = vmatprep.subr.mxu0 0.0
        %1895 = vmatpush1.msra.mxu0 0.0
        %1896 = vmatprep.subr.mxu0 0.0
        %1897 = vmatpush1.msra.mxu0 0.0
        %1898 = vmatprep.subr.mxu0 0.0
        %1899 = vmatpush1.msra.mxu0 0.0
        %1900 = vmatprep.subr.mxu0 0.0
        %1901 = vmatpush1.msra.mxu0 0.0
        %1902 = vmatprep.subr.mxu0 0.0
        %1903 = vmatpush1.msra.mxu0 0.0
        %1904 = vmatprep.subr.mxu0 0.0
        %1905 = vmatpush1.msra.mxu0 0.0
        %1906 = vmatprep.subr.mxu0 0.0
        %1907 = vmatpush1.msra.mxu0 0.0
        %1908 = vmatprep.subr.mxu0 0.0
        %1909 = vmatpush1.msra.mxu0 0.0
        %1910 = vmatprep.subr.mxu0 0.0
        %1911 = vmatpush1.msra.mxu0 %v1685
        %1912 = vmatprep.subr.mxu0 0.0
        %1913 = vmatpush1.msra.mxu0 %v1684
        %1914 = vmatprep.subr.mxu0 0.0
        %1915 = vmatpush1.msra.mxu0 %v1683
        %1916 = vmatprep.subr.mxu0 0.0
        %1917 = vmatpush1.msra.mxu0 %v1682
        %1918 = vmatprep.subr.mxu0 0.0
        %1919 = vmatpush2.msra.mxu0 0.0
        %1920 = vmatprep.subr.mxu0 0.0
        %1921 = vmatpush2.msra.mxu0 0.0
        %1922 = vmatprep.subr.mxu0 0.0
        %1923 = vmatpush2.msra.mxu0 0.0
        %1924 = vmatprep.subr.mxu0 0.0
        %1925 = vmatpush2.msra.mxu0 0.0
        %1926 = vmatprep.subr.mxu0 0.0
        %1927 = vmatpush2.msra.mxu0 0.0
        %1928 = vmatprep.subr.mxu0 0.0
        %1929 = vmatpush2.msra.mxu0 0.0
        %1930 = vmatprep.subr.mxu0 0.0
        %1931 = vmatpush2.msra.mxu0 0.0
        %1932 = vmatprep.subr.mxu0 0.0
        %1933 = vmatpush2.msra.mxu0 0.0
        %1934 = vmatprep.subr.mxu0 0.0
        %1935 = vmatpush2.msra.mxu0 0.0
        %1936 = vmatprep.subr.mxu0 0.0
        %1937 = vmatpush2.msra.mxu0 0.0
        %1938 = vmatprep.subr.mxu0 0.0
        %1939 = vmatpush2.msra.mxu0 0.0
        %1940 = vmatprep.subr.mxu0 0.0
        %1941 = vmatpush2.msra.mxu0 0.0
        %1942 = vmatprep.subr.mxu0 0.0
        %1943 = vmatpush2.msra.mxu0 0.0
        %1944 = vmatprep.subr.mxu0 0.0
        %1945 = vmatpush2.msra.mxu0 0.0
        %1946 = vmatprep.subr.mxu0 0.0
        %1947 = vmatpush2.msra.mxu0 0.0
        %1948 = vmatprep.subr.mxu0 0.0
        %1949 = vmatpush2.msra.mxu0 0.0
        %1950 = vmatprep.mubr.f32.mxu0 0.0
        %1951 = vmatmul.mubr.f32.gmra.mxu0 %v1695
        %v1952 = vpop.f32.mrf.mxu0
        %v1953 = vadd.f32 %v1691, %v1952
        %v1954 = vpop.f32.mrf.mxu0
        %1955 = vmatprep.mubr.f32.mxu0 0.0
        %1956 = vmatmul.mubr.f32.gmra.mxu0 %v1698
        %v1957 = vpop.f32.mrf.mxu0
        %v1958 = vadd.f32 %v1691, %v1957
        %v1959 = vpop.f32.mrf.mxu0
        %1960 = vmatprep.mubr.f32.mxu0 0.0
        %1961 = vmatmul.mubr.f32.gmra.mxu0 %v1701
        %v1962 = vpop.f32.mrf.mxu0
        %v1963 = vadd.f32 %v1691, %v1962
        %v1964 = vpop.f32.mrf.mxu0
        %1965 = vmatprep.mubr.f32.mxu0 0.0
        %1966 = vmatmul.mubr.f32.gmra.mxu0 %v1704
        %v1967 = vpop.f32.mrf.mxu0
        %v1968 = vadd.f32 %v1691, %v1967
        %v1969 = vpop.f32.mrf.mxu0
        %1970 = vmatprep.mubr.f32.mxu0 0.0
        %1971 = vmatmul.mubr.f32.gmra.mxu0 %v1707
        %v1972 = vpop.f32.mrf.mxu0
        %v1973 = vadd.f32 %v1691, %v1972
        %v1974 = vpop.f32.mrf.mxu0
        %1975 = vmatprep.mubr.f32.mxu0 0.0
        %1976 = vmatmul.mubr.f32.gmra.mxu0 %v1710
        %v1977 = vpop.f32.mrf.mxu0
        %v1978 = vadd.f32 %v1691, %v1977
        %v1979 = vpop.f32.mrf.mxu0
        %1980 = vmatprep.mubr.f32.mxu0 0.0
        %1981 = vmatmul.mubr.f32.gmra.mxu0 %v1713
        %v1982 = vpop.f32.mrf.mxu0
        %v1983 = vadd.f32 %v1691, %v1982
        %v1984 = vpop.f32.mrf.mxu0
        %1985 = vmatprep.mubr.f32.mxu0 0.0
        %1986 = vmatmul.mubr.f32.gmra.mxu0 %v1716
        %v1987 = vpop.f32.mrf.mxu0
        %v1988 = vadd.f32 %v1691, %v1987
        %v1989 = vpop.f32.mrf.mxu0
        %1990 = vmatprep.mubr.f32.mxu0 0.0
        %1991 = vmatmul.mubr.f32.gmra.mxu0 %v1719
        %v1992 = vpop.f32.mrf.mxu0
        %v1993 = vadd.f32 %v1691, %v1992
        %v1994 = vpop.f32.mrf.mxu0
        %1995 = vmatprep.mubr.f32.mxu0 0.0
        %1996 = vmatmul.mubr.f32.gmra.mxu0 %v1722
        %v1997 = vpop.f32.mrf.mxu0
        %v1998 = vadd.f32 %v1691, %v1997
        %v1999 = vpop.f32.mrf.mxu0
        %2000 = vmatprep.mubr.f32.mxu0 0.0
        %2001 = vmatmul.mubr.f32.gmra.mxu0 %v1725
        %v2002 = vpop.f32.mrf.mxu0
        %v2003 = vadd.f32 %v1691, %v2002
        %v2004 = vpop.f32.mrf.mxu0
        %2005 = vmatprep.mubr.f32.mxu0 0.0
        %2006 = vmatmul.mubr.f32.gmra.mxu0 %v1728
        %v2007 = vpop.f32.mrf.mxu0
        %v2008 = vadd.f32 %v1691, %v2007
        %v2009 = vpop.f32.mrf.mxu0
        %2010 = vmatprep.mubr.f32.mxu0 0.0
        %2011 = vmatmul.mubr.f32.gmra.mxu0 %v1731
        %v2012 = vpop.f32.mrf.mxu0
        %v2013 = vadd.f32 %v1691, %v2012
        %v2014 = vpop.f32.mrf.mxu0
        %2015 = vmatprep.mubr.f32.mxu0 0.0
        %2016 = vmatmul.mubr.f32.gmra.mxu0 %v1734
        %v2017 = vpop.f32.mrf.mxu0
        %v2018 = vadd.f32 %v1691, %v2017
        %v2019 = vpop.f32.mrf.mxu0
        %2020 = vmatprep.mubr.f32.mxu0 0.0
        %2021 = vmatmul.mubr.f32.gmra.mxu0 %v1737
        %v2022 = vpop.f32.mrf.mxu0
        %v2023 = vadd.f32 %v1691, %v2022
        %v2024 = vpop.f32.mrf.mxu0
        %2025 = vmatprep.mubr.f32.mxu0 0.0
        %2026 = vmatmul.mubr.f32.gmra.mxu0 %v1740
        %v2027 = vpop.f32.mrf.mxu0
        %v2028 = vadd.f32 %v1691, %v2027
        %v2029 = vpop.f32.mrf.mxu0
        %2030 = vmatprep.mubr.f32.mxu0 0.0
        %2031 = vmatmul.mubr.f32.gmra.mxu0 %v1743
        %v2032 = vpop.f32.mrf.mxu0
        %v2033 = vadd.f32 %v1691, %v2032
        %v2034 = vpop.f32.mrf.mxu0
        %2035 = vmatprep.mubr.f32.mxu0 0.0
        %2036 = vmatmul.mubr.f32.gmra.mxu0 %v1746
        %v2037 = vpop.f32.mrf.mxu0
        %v2038 = vadd.f32 %v1691, %v2037
        %v2039 = vpop.f32.mrf.mxu0
        %2040 = vmatprep.mubr.f32.mxu0 0.0
        %2041 = vmatmul.mubr.f32.gmra.mxu0 %v1749
        %v2042 = vpop.f32.mrf.mxu0
        %v2043 = vadd.f32 %v1691, %v2042
        %v2044 = vpop.f32.mrf.mxu0
        %2045 = vmatprep.mubr.f32.mxu0 0.0
        %2046 = vmatmul.mubr.f32.gmra.mxu0 %v1752
        %v2047 = vpop.f32.mrf.mxu0
        %v2048 = vadd.f32 %v1691, %v2047
        %v2049 = vpop.f32.mrf.mxu0
        %2050 = vmatprep.mubr.f32.mxu0 0.0
        %2051 = vmatmul.mubr.f32.gmra.mxu0 %v1755
        %v2052 = vpop.f32.mrf.mxu0
        %v2053 = vadd.f32 %v1691, %v2052
        %v2054 = vpop.f32.mrf.mxu0
        %2055 = vmatprep.mubr.f32.mxu0 0.0
        %2056 = vmatmul.mubr.f32.gmra.mxu0 %v1758
        %v2057 = vpop.f32.mrf.mxu0
        %v2058 = vadd.f32 %v1691, %v2057
        %v2059 = vpop.f32.mrf.mxu0
        %2060 = vmatprep.mubr.f32.mxu0 0.0
        %2061 = vmatmul.mubr.f32.gmra.mxu0 %v1761
        %v2062 = vpop.f32.mrf.mxu0
        %v2063 = vadd.f32 %v1691, %v2062
        %v2064 = vpop.f32.mrf.mxu0
        %2065 = vmatprep.mubr.f32.mxu0 0.0
        %2066 = vmatmul.mubr.f32.gmra.mxu0 %v1764
        %v2067 = vpop.f32.mrf.mxu0
        %v2068 = vadd.f32 %v1691, %v2067
        %v2069 = vpop.f32.mrf.mxu0
        %2070 = vmatprep.mubr.f32.mxu0 0.0
        %2071 = vmatmul.mubr.f32.gmra.mxu0 %v1767
        %v2072 = vpop.f32.mrf.mxu0
        %v2073 = vadd.f32 %v1691, %v2072
        %v2074 = vpop.f32.mrf.mxu0
        %2075 = vmatprep.mubr.f32.mxu0 0.0
        %2076 = vmatmul.mubr.f32.gmra.mxu0 %v1770
        %v2077 = vpop.f32.mrf.mxu0
        %v2078 = vadd.f32 %v1691, %v2077
        %v2079 = vpop.f32.mrf.mxu0
        %2080 = vmatprep.mubr.f32.mxu0 0.0
        %2081 = vmatmul.mubr.f32.gmra.mxu0 %v1773
        %v2082 = vpop.f32.mrf.mxu0
        %v2083 = vadd.f32 %v1691, %v2082
        %v2084 = vpop.f32.mrf.mxu0
        %2085 = vmatprep.mubr.f32.mxu0 0.0
        %2086 = vmatmul.mubr.f32.gmra.mxu0 %v1776
        %v2087 = vpop.f32.mrf.mxu0
        %v2088 = vadd.f32 %v1691, %v2087
        %v2089 = vpop.f32.mrf.mxu0
        %2090 = vmatprep.mubr.f32.mxu0 0.0
        %2091 = vmatmul.mubr.f32.gmra.mxu0 %v1779
        %v2092 = vpop.f32.mrf.mxu0
        %v2093 = vadd.f32 %v1691, %v2092
        %v2094 = vpop.f32.mrf.mxu0
        %2095 = vmatprep.mubr.f32.mxu0 0.0
        %2096 = vmatmul.mubr.f32.gmra.mxu0 %v1782
        %v2097 = vpop.f32.mrf.mxu0
        %v2098 = vadd.f32 %v1691, %v2097
        %v2099 = vpop.f32.mrf.mxu0
        %2100 = vmatprep.mubr.f32.mxu0 0.0
        %2101 = vmatmul.mubr.f32.gmra.mxu0 %v1785
        %v2102 = vpop.f32.mrf.mxu0
        %v2103 = vadd.f32 %v1691, %v2102
        %v2104 = vpop.f32.mrf.mxu0
        %2105 = vmatprep.mubr.f32.mxu0 0.0
        %2106 = vmatmul.mubr.f32.gmra.mxu0 %v1788
        %v2107 = vpop.f32.mrf.mxu0
        %v2108 = vadd.f32 %v1691, %v2107
        %v2109 = vpop.f32.mrf.mxu0
        %2110 = vmatprep.mubr.f32.mxu0 0.0
        %2111 = vmatmul.mubr.f32.gmra.mxu0 %v1791
        %v2112 = vpop.f32.mrf.mxu0
        %v2113 = vadd.f32 %v1691, %v2112
        %v2114 = vpop.f32.mrf.mxu0
        %2115 = vmatprep.mubr.f32.mxu0 0.0
        %2116 = vmatmul.mubr.f32.gmra.mxu0 %v1794
        %v2117 = vpop.f32.mrf.mxu0
        %v2118 = vadd.f32 %v1691, %v2117
        %v2119 = vpop.f32.mrf.mxu0
        %2120 = vmatprep.mubr.f32.mxu0 0.0
        %2121 = vmatmul.mubr.f32.gmra.mxu0 %v1797
        %v2122 = vpop.f32.mrf.mxu0
        %v2123 = vadd.f32 %v1691, %v2122
        %v2124 = vpop.f32.mrf.mxu0
        %2125 = vmatprep.mubr.f32.mxu0 0.0
        %2126 = vmatmul.mubr.f32.gmra.mxu0 %v1800
        %v2127 = vpop.f32.mrf.mxu0
        %v2128 = vadd.f32 %v1691, %v2127
        %v2129 = vpop.f32.mrf.mxu0
        %2130 = vmatprep.mubr.f32.mxu0 0.0
        %2131 = vmatmul.mubr.f32.gmra.mxu0 %v1803
        %v2132 = vpop.f32.mrf.mxu0
        %v2133 = vadd.f32 %v1691, %v2132
        %v2134 = vpop.f32.mrf.mxu0
        %2135 = vmatprep.mubr.f32.mxu0 0.0
        %2136 = vmatmul.mubr.f32.gmra.mxu0 %v1806
        %v2137 = vpop.f32.mrf.mxu0
        %v2138 = vadd.f32 %v1691, %v2137
        %v2139 = vpop.f32.mrf.mxu0
        %2140 = vmatprep.mubr.f32.mxu0 0.0
        %2141 = vmatmul.mubr.f32.gmra.mxu0 %v1809
        %v2142 = vpop.f32.mrf.mxu0
        %v2143 = vadd.f32 %v1691, %v2142
        %v2144 = vpop.f32.mrf.mxu0
        %2145 = vmatprep.mubr.f32.mxu0 0.0
        %2146 = vmatmul.mubr.f32.gmra.mxu0 %v1812
        %v2147 = vpop.f32.mrf.mxu0
        %v2148 = vadd.f32 %v1691, %v2147
        %v2149 = vpop.f32.mrf.mxu0
        %2150 = vmatprep.mubr.f32.mxu0 0.0
        %2151 = vmatmul.mubr.f32.gmra.mxu0 %v1815
        %v2152 = vpop.f32.mrf.mxu0
        %v2153 = vadd.f32 %v1691, %v2152
        %v2154 = vpop.f32.mrf.mxu0
        %2155 = vmatprep.mubr.f32.mxu0 0.0
        %2156 = vmatmul.mubr.f32.gmra.mxu0 %v1818
        %v2157 = vpop.f32.mrf.mxu0
        %v2158 = vadd.f32 %v1691, %v2157
        %v2159 = vpop.f32.mrf.mxu0
        %2160 = vmatprep.mubr.f32.mxu0 0.0
        %2161 = vmatmul.mubr.f32.gmra.mxu0 %v1821
        %v2162 = vpop.f32.mrf.mxu0
        %v2163 = vadd.f32 %v1691, %v2162
        %v2164 = vpop.f32.mrf.mxu0
        %2165 = vmatprep.mubr.f32.mxu0 0.0
        %2166 = vmatmul.mubr.f32.gmra.mxu0 %v1824
        %v2167 = vpop.f32.mrf.mxu0
        %v2168 = vadd.f32 %v1691, %v2167
        %v2169 = vpop.f32.mrf.mxu0
        %2170 = vmatprep.mubr.f32.mxu0 0.0
        %2171 = vmatmul.mubr.f32.gmra.mxu0 %v1827
        %v2172 = vpop.f32.mrf.mxu0
        %v2173 = vadd.f32 %v1691, %v2172
        %v2174 = vpop.f32.mrf.mxu0
        %2175 = vmatprep.mubr.f32.mxu0 0.0
        %2176 = vmatmul.mubr.f32.gmra.mxu0 %v1830
        %v2177 = vpop.f32.mrf.mxu0
        %v2178 = vadd.f32 %v1691, %v2177
        %v2179 = vpop.f32.mrf.mxu0
        %2180 = vmatprep.mubr.f32.mxu0 0.0
        %2181 = vmatmul.mubr.f32.gmra.mxu0 %v1833
        %v2182 = vpop.f32.mrf.mxu0
        %v2183 = vadd.f32 %v1691, %v2182
        %v2184 = vpop.f32.mrf.mxu0
        %2185 = vmatprep.mubr.f32.mxu0 0.0
        %2186 = vmatmul.mubr.f32.gmra.mxu0 %v1836
        %v2187 = vpop.f32.mrf.mxu0
        %v2188 = vadd.f32 %v1691, %v2187
        %v2189 = vpop.f32.mrf.mxu0
        %2190 = vmatprep.mubr.f32.mxu0 0.0
        %2191 = vmatmul.mubr.f32.gmra.mxu0 %v1839
        %v2192 = vpop.f32.mrf.mxu0
        %v2193 = vadd.f32 %v1691, %v2192
        %v2194 = vpop.f32.mrf.mxu0
        %2195 = vmatprep.mubr.f32.mxu0 0.0
        %2196 = vmatmul.mubr.f32.gmra.mxu0 %v1842
        %v2197 = vpop.f32.mrf.mxu0
        %v2198 = vadd.f32 %v1691, %v2197
        %v2199 = vpop.f32.mrf.mxu0
        %2200 = vmatprep.mubr.f32.mxu0 0.0
        %2201 = vmatmul.mubr.f32.gmra.mxu0 %v1845
        %v2202 = vpop.f32.mrf.mxu0
        %v2203 = vadd.f32 %v1691, %v2202
        %v2204 = vpop.f32.mrf.mxu0
        %2205 = vmatprep.mubr.f32.mxu0 0.0
        %2206 = vmatmul.mubr.f32.gmra.mxu0 %v1848
        %v2207 = vpop.f32.mrf.mxu0
        %v2208 = vadd.f32 %v1691, %v2207
        %v2209 = vpop.f32.mrf.mxu0
        %2210 = vmatprep.mubr.f32.mxu0 0.0
        %2211 = vmatmul.mubr.f32.gmra.mxu0 %v1851
        %v2212 = vpop.f32.mrf.mxu0
        %v2213 = vadd.f32 %v1691, %v2212
        %v2214 = vpop.f32.mrf.mxu0
        %2215 = vmatprep.mubr.f32.mxu0 0.0
        %2216 = vmatmul.mubr.f32.gmra.mxu0 %v1854
        %v2217 = vpop.f32.mrf.mxu0
        %v2218 = vadd.f32 %v1691, %v2217
        %v2219 = vpop.f32.mrf.mxu0
        %2220 = vmatprep.mubr.f32.mxu0 0.0
        %2221 = vmatmul.mubr.f32.gmra.mxu0 %v1857
        %v2222 = vpop.f32.mrf.mxu0
        %v2223 = vadd.f32 %v1691, %v2222
        %v2224 = vpop.f32.mrf.mxu0
        %2225 = vmatprep.mubr.f32.mxu0 0.0
        %2226 = vmatmul.mubr.f32.gmra.mxu0 %v1860
        %v2227 = vpop.f32.mrf.mxu0
        %v2228 = vadd.f32 %v1691, %v2227
        %v2229 = vpop.f32.mrf.mxu0
        %2230 = vmatprep.mubr.f32.mxu0 0.0
        %2231 = vmatmul.mubr.f32.gmra.mxu0 %v1863
        %v2232 = vpop.f32.mrf.mxu0
        %v2233 = vadd.f32 %v1691, %v2232
        %v2234 = vpop.f32.mrf.mxu0
        %2235 = vmatprep.mubr.f32.mxu0 0.0
        %2236 = vmatmul.mubr.f32.gmra.mxu0 %v1866
        %v2237 = vpop.f32.mrf.mxu0
        %v2238 = vadd.f32 %v1691, %v2237
        %v2239 = vpop.f32.mrf.mxu0
        %2240 = vmatprep.mubr.f32.mxu0 0.0
        %2241 = vmatmul.mubr.f32.gmra.mxu0 %v1869
        %v2242 = vpop.f32.mrf.mxu0
        %v2243 = vadd.f32 %v1691, %v2242
        %v2244 = vpop.f32.mrf.mxu0
        %2245 = vmatprep.mubr.f32.mxu0 0.0
        %2246 = vmatmul.mubr.f32.gmra.mxu0 %v1872
        %v2247 = vpop.f32.mrf.mxu0
        %v2248 = vadd.f32 %v1691, %v2247
        %v2249 = vpop.f32.mrf.mxu0
        %2250 = vmatprep.mubr.f32.mxu0 0.0
        %2251 = vmatmul.mubr.f32.gmra.mxu0 %v1875
        %v2252 = vpop.f32.mrf.mxu0
        %v2253 = vadd.f32 %v1691, %v2252
        %v2254 = vpop.f32.mrf.mxu0
        %2255 = vmatprep.mubr.f32.mxu0 0.0
        %2256 = vmatmul.mubr.f32.gmra.mxu0 %v1878
        %v2257 = vpop.f32.mrf.mxu0
        %v2258 = vadd.f32 %v1691, %v2257
        %v2259 = vpop.f32.mrf.mxu0
        %2260 = vmatprep.mubr.f32.mxu0 0.0
        %2261 = vmatmul.mubr.f32.gmra.mxu0 %v1881
        %v2262 = vpop.f32.mrf.mxu0
        %v2263 = vadd.f32 %v1691, %v2262
        %v2264 = vpop.f32.mrf.mxu0
        %2265 = vmatprep.mubr.f32.mxu0 0.0
        %2266 = vmatmul.mubr.f32.gmra.mxu0 %v1884
        %v2267 = vpop.f32.mrf.mxu0
        %v2268 = vadd.f32 %v1691, %v2267
        %v2269 = vpop.f32.mrf.mxu0
        %2270 = vdwg.mxu0
        %v2271 = vmax.f32 %v1953, 0.0
        %v2272 = vmax.f32 %v1958, 0.0
        %v2273 = vmax.f32 %v1963, 0.0
        %v2274 = vmax.f32 %v1968, 0.0
        %v2275 = vmax.f32 %v1973, 0.0
        %v2276 = vmax.f32 %v1978, 0.0
        %v2277 = vmax.f32 %v1983, 0.0
        %v2278 = vmax.f32 %v1988, 0.0
        %v2279 = vmax.f32 %v1993, 0.0
        %v2280 = vmax.f32 %v1998, 0.0
        %v2281 = vmax.f32 %v2003, 0.0
        %v2282 = vmax.f32 %v2008, 0.0
        %v2283 = vmax.f32 %v2013, 0.0
        %v2284 = vmax.f32 %v2018, 0.0
        %v2285 = vmax.f32 %v2023, 0.0
        %v2286 = vmax.f32 %v2028, 0.0
        %v2287 = vmax.f32 %v2033, 0.0
        %v2288 = vmax.f32 %v2038, 0.0
        %v2289 = vmax.f32 %v2043, 0.0
        %v2290 = vmax.f32 %v2048, 0.0
        %v2291 = vmax.f32 %v2053, 0.0
        %v2292 = vmax.f32 %v2058, 0.0
        %v2293 = vmax.f32 %v2063, 0.0
        %v2294 = vmax.f32 %v2068, 0.0
        %v2295 = vmax.f32 %v2073, 0.0
        %v2296 = vmax.f32 %v2078, 0.0
        %v2297 = vmax.f32 %v2083, 0.0
        %v2298 = vmax.f32 %v2088, 0.0
        %v2299 = vmax.f32 %v2093, 0.0
        %v2300 = vmax.f32 %v2098, 0.0
        %v2301 = vmax.f32 %v2103, 0.0
        %v2302 = vmax.f32 %v2108, 0.0
        %v2303 = vmax.f32 %v2113, 0.0
        %v2304 = vmax.f32 %v2118, 0.0
        %v2305 = vmax.f32 %v2123, 0.0
        %v2306 = vmax.f32 %v2128, 0.0
        %v2307 = vmax.f32 %v2133, 0.0
        %v2308 = vmax.f32 %v2138, 0.0
        %v2309 = vmax.f32 %v2143, 0.0
        %v2310 = vmax.f32 %v2148, 0.0
        %v2311 = vmax.f32 %v2153, 0.0
        %v2312 = vmax.f32 %v2158, 0.0
        %v2313 = vmax.f32 %v2163, 0.0
        %v2314 = vmax.f32 %v2168, 0.0
        %v2315 = vmax.f32 %v2173, 0.0
        %v2316 = vmax.f32 %v2178, 0.0
        %v2317 = vmax.f32 %v2183, 0.0
        %v2318 = vmax.f32 %v2188, 0.0
        %v2319 = vmax.f32 %v2193, 0.0
        %v2320 = vmax.f32 %v2198, 0.0
        %v2321 = vmax.f32 %v2203, 0.0
        %v2322 = vmax.f32 %v2208, 0.0
        %v2323 = vmax.f32 %v2213, 0.0
        %v2324 = vmax.f32 %v2218, 0.0
        %v2325 = vmax.f32 %v2223, 0.0
        %v2326 = vmax.f32 %v2228, 0.0
        %v2327 = vmax.f32 %v2233, 0.0
        %v2328 = vmax.f32 %v2238, 0.0
        %v2329 = vmax.f32 %v2243, 0.0
        %v2330 = vmax.f32 %v2248, 0.0
        %v2331 = vmax.f32 %v2253, 0.0
        %v2332 = vmax.f32 %v2258, 0.0
        %v2333 = vmax.f32 %v2263, 0.0
        %v2334 = vmax.f32 %v2268, 0.0
        %vm2335 = vcmask 523264
        %v2336 = vsel %vm2335, %v2271, -inf
        %v2337 = vsel %vm2335, %v2272, -inf
        %v2338 = vmax.f32 %v2336, %v2337
        %v2339 = vrot.slane %v2338, 4
        %v2340 = vmax.f32 %v2338, %v2339
        %v2341 = vrot.slane %v2340, 2
        %v2342 = vmax.f32 %v2340, %v2341
        %v2343 = vrot.slane %v2342, 1
        %v2344 = vmax.f32 %v2342, %v2343
        %v2345 = vsel %vm2335, %v2273, -inf
        %v2346 = vsel %vm2335, %v2274, -inf
        %v2347 = vmax.f32 %v2345, %v2346
        %v2348 = vrot.slane %v2347, 4
        %v2349 = vmax.f32 %v2347, %v2348
        %v2350 = vrot.slane %v2349, 2
        %v2351 = vmax.f32 %v2349, %v2350
        %v2352 = vrot.slane %v2351, 1
        %v2353 = vmax.f32 %v2351, %v2352
        %v2354 = vsel %vm2335, %v2275, -inf
        %v2355 = vsel %vm2335, %v2276, -inf
        %v2356 = vmax.f32 %v2354, %v2355
        %v2357 = vrot.slane %v2356, 4
        %v2358 = vmax.f32 %v2356, %v2357
        %v2359 = vrot.slane %v2358, 2
        %v2360 = vmax.f32 %v2358, %v2359
        %v2361 = vrot.slane %v2360, 1
        %v2362 = vmax.f32 %v2360, %v2361
        %v2363 = vsel %vm2335, %v2277, -inf
        %v2364 = vsel %vm2335, %v2278, -inf
        %v2365 = vmax.f32 %v2363, %v2364
        %v2366 = vrot.slane %v2365, 4
        %v2367 = vmax.f32 %v2365, %v2366
        %v2368 = vrot.slane %v2367, 2
        %v2369 = vmax.f32 %v2367, %v2368
        %v2370 = vrot.slane %v2369, 1
        %v2371 = vmax.f32 %v2369, %v2370
        %v2372 = vsel %vm2335, %v2279, -inf
        %v2373 = vsel %vm2335, %v2280, -inf
        %v2374 = vmax.f32 %v2372, %v2373
        %v2375 = vrot.slane %v2374, 4
        %v2376 = vmax.f32 %v2374, %v2375
        %v2377 = vrot.slane %v2376, 2
        %v2378 = vmax.f32 %v2376, %v2377
        %v2379 = vrot.slane %v2378, 1
        %v2380 = vmax.f32 %v2378, %v2379
        %v2381 = vsel %vm2335, %v2281, -inf
        %v2382 = vsel %vm2335, %v2282, -inf
        %v2383 = vmax.f32 %v2381, %v2382
        %v2384 = vrot.slane %v2383, 4
        %v2385 = vmax.f32 %v2383, %v2384
        %v2386 = vrot.slane %v2385, 2
        %v2387 = vmax.f32 %v2385, %v2386
        %v2388 = vrot.slane %v2387, 1
        %v2389 = vmax.f32 %v2387, %v2388
        %v2390 = vsel %vm2335, %v2283, -inf
        %v2391 = vsel %vm2335, %v2284, -inf
        %v2392 = vmax.f32 %v2390, %v2391
        %v2393 = vrot.slane %v2392, 4
        %v2394 = vmax.f32 %v2392, %v2393
        %v2395 = vrot.slane %v2394, 2
        %v2396 = vmax.f32 %v2394, %v2395
        %v2397 = vrot.slane %v2396, 1
        %v2398 = vmax.f32 %v2396, %v2397
        %v2399 = vsel %vm2335, %v2285, -inf
        %v2400 = vsel %vm2335, %v2286, -inf
        %v2401 = vmax.f32 %v2399, %v2400
        %v2402 = vrot.slane %v2401, 4
        %v2403 = vmax.f32 %v2401, %v2402
        %v2404 = vrot.slane %v2403, 2
        %v2405 = vmax.f32 %v2403, %v2404
        %v2406 = vrot.slane %v2405, 1
        %v2407 = vmax.f32 %v2405, %v2406
        %v2408 = vsel %vm2335, %v2287, -inf
        %v2409 = vsel %vm2335, %v2288, -inf
        %v2410 = vmax.f32 %v2408, %v2409
        %v2411 = vrot.slane %v2410, 4
        %v2412 = vmax.f32 %v2410, %v2411
        %v2413 = vrot.slane %v2412, 2
        %v2414 = vmax.f32 %v2412, %v2413
        %v2415 = vrot.slane %v2414, 1
        %v2416 = vmax.f32 %v2414, %v2415
        %v2417 = vsel %vm2335, %v2289, -inf
        %v2418 = vsel %vm2335, %v2290, -inf
        %v2419 = vmax.f32 %v2417, %v2418
        %v2420 = vrot.slane %v2419, 4
        %v2421 = vmax.f32 %v2419, %v2420
        %v2422 = vrot.slane %v2421, 2
        %v2423 = vmax.f32 %v2421, %v2422
        %v2424 = vrot.slane %v2423, 1
        %v2425 = vmax.f32 %v2423, %v2424
        %v2426 = vsel %vm2335, %v2291, -inf
        %v2427 = vsel %vm2335, %v2292, -inf
        %v2428 = vmax.f32 %v2426, %v2427
        %v2429 = vrot.slane %v2428, 4
        %v2430 = vmax.f32 %v2428, %v2429
        %v2431 = vrot.slane %v2430, 2
        %v2432 = vmax.f32 %v2430, %v2431
        %v2433 = vrot.slane %v2432, 1
        %v2434 = vmax.f32 %v2432, %v2433
        %v2435 = vsel %vm2335, %v2293, -inf
        %v2436 = vsel %vm2335, %v2294, -inf
        %v2437 = vmax.f32 %v2435, %v2436
        %v2438 = vrot.slane %v2437, 4
        %v2439 = vmax.f32 %v2437, %v2438
        %v2440 = vrot.slane %v2439, 2
        %v2441 = vmax.f32 %v2439, %v2440
        %v2442 = vrot.slane %v2441, 1
        %v2443 = vmax.f32 %v2441, %v2442
        %v2444 = vsel %vm2335, %v2295, -inf
        %v2445 = vsel %vm2335, %v2296, -inf
        %v2446 = vmax.f32 %v2444, %v2445
        %v2447 = vrot.slane %v2446, 4
        %v2448 = vmax.f32 %v2446, %v2447
        %v2449 = vrot.slane %v2448, 2
        %v2450 = vmax.f32 %v2448, %v2449
        %v2451 = vrot.slane %v2450, 1
        %v2452 = vmax.f32 %v2450, %v2451
        %v2453 = vsel %vm2335, %v2297, -inf
        %v2454 = vsel %vm2335, %v2298, -inf
        %v2455 = vmax.f32 %v2453, %v2454
        %v2456 = vrot.slane %v2455, 4
        %v2457 = vmax.f32 %v2455, %v2456
        %v2458 = vrot.slane %v2457, 2
        %v2459 = vmax.f32 %v2457, %v2458
        %v2460 = vrot.slane %v2459, 1
        %v2461 = vmax.f32 %v2459, %v2460
        %v2462 = vsel %vm2335, %v2299, -inf
        %v2463 = vsel %vm2335, %v2300, -inf
        %v2464 = vmax.f32 %v2462, %v2463
        %v2465 = vrot.slane %v2464, 4
        %v2466 = vmax.f32 %v2464, %v2465
        %v2467 = vrot.slane %v2466, 2
        %v2468 = vmax.f32 %v2466, %v2467
        %v2469 = vrot.slane %v2468, 1
        %v2470 = vmax.f32 %v2468, %v2469
        %v2471 = vsel %vm2335, %v2301, -inf
        %v2472 = vsel %vm2335, %v2302, -inf
        %v2473 = vmax.f32 %v2471, %v2472
        %v2474 = vrot.slane %v2473, 4
        %v2475 = vmax.f32 %v2473, %v2474
        %v2476 = vrot.slane %v2475, 2
        %v2477 = vmax.f32 %v2475, %v2476
        %v2478 = vrot.slane %v2477, 1
        %v2479 = vmax.f32 %v2477, %v2478
        %v2480 = vsel %vm2335, %v2303, -inf
        %v2481 = vsel %vm2335, %v2304, -inf
        %v2482 = vmax.f32 %v2480, %v2481
        %v2483 = vrot.slane %v2482, 4
        %v2484 = vmax.f32 %v2482, %v2483
        %v2485 = vrot.slane %v2484, 2
        %v2486 = vmax.f32 %v2484, %v2485
        %v2487 = vrot.slane %v2486, 1
        %v2488 = vmax.f32 %v2486, %v2487
        %v2489 = vsel %vm2335, %v2305, -inf
        %v2490 = vsel %vm2335, %v2306, -inf
        %v2491 = vmax.f32 %v2489, %v2490
        %v2492 = vrot.slane %v2491, 4
        %v2493 = vmax.f32 %v2491, %v2492
        %v2494 = vrot.slane %v2493, 2
        %v2495 = vmax.f32 %v2493, %v2494
        %v2496 = vrot.slane %v2495, 1
        %v2497 = vmax.f32 %v2495, %v2496
        %v2498 = vsel %vm2335, %v2307, -inf
        %v2499 = vsel %vm2335, %v2308, -inf
        %v2500 = vmax.f32 %v2498, %v2499
        %v2501 = vrot.slane %v2500, 4
        %v2502 = vmax.f32 %v2500, %v2501
        %v2503 = vrot.slane %v2502, 2
        %v2504 = vmax.f32 %v2502, %v2503
        %v2505 = vrot.slane %v2504, 1
        %v2506 = vmax.f32 %v2504, %v2505
        %v2507 = vsel %vm2335, %v2309, -inf
        %v2508 = vsel %vm2335, %v2310, -inf
        %v2509 = vmax.f32 %v2507, %v2508
        %v2510 = vrot.slane %v2509, 4
        %v2511 = vmax.f32 %v2509, %v2510
        %v2512 = vrot.slane %v2511, 2
        %v2513 = vmax.f32 %v2511, %v2512
        %v2514 = vrot.slane %v2513, 1
        %v2515 = vmax.f32 %v2513, %v2514
        %v2516 = vsel %vm2335, %v2311, -inf
        %v2517 = vsel %vm2335, %v2312, -inf
        %v2518 = vmax.f32 %v2516, %v2517
        %v2519 = vrot.slane %v2518, 4
        %v2520 = vmax.f32 %v2518, %v2519
        %v2521 = vrot.slane %v2520, 2
        %v2522 = vmax.f32 %v2520, %v2521
        %v2523 = vrot.slane %v2522, 1
        %v2524 = vmax.f32 %v2522, %v2523
        %v2525 = vsel %vm2335, %v2313, -inf
        %v2526 = vsel %vm2335, %v2314, -inf
        %v2527 = vmax.f32 %v2525, %v2526
        %v2528 = vrot.slane %v2527, 4
        %v2529 = vmax.f32 %v2527, %v2528
        %v2530 = vrot.slane %v2529, 2
        %v2531 = vmax.f32 %v2529, %v2530
        %v2532 = vrot.slane %v2531, 1
        %v2533 = vmax.f32 %v2531, %v2532
        %v2534 = vsel %vm2335, %v2315, -inf
        %v2535 = vsel %vm2335, %v2316, -inf
        %v2536 = vmax.f32 %v2534, %v2535
        %v2537 = vrot.slane %v2536, 4
        %v2538 = vmax.f32 %v2536, %v2537
        %v2539 = vrot.slane %v2538, 2
        %v2540 = vmax.f32 %v2538, %v2539
        %v2541 = vrot.slane %v2540, 1
        %v2542 = vmax.f32 %v2540, %v2541
        %v2543 = vsel %vm2335, %v2317, -inf
        %v2544 = vsel %vm2335, %v2318, -inf
        %v2545 = vmax.f32 %v2543, %v2544
        %v2546 = vrot.slane %v2545, 4
        %v2547 = vmax.f32 %v2545, %v2546
        %v2548 = vrot.slane %v2547, 2
        %v2549 = vmax.f32 %v2547, %v2548
        %v2550 = vrot.slane %v2549, 1
        %v2551 = vmax.f32 %v2549, %v2550
        %v2552 = vsel %vm2335, %v2319, -inf
        %v2553 = vsel %vm2335, %v2320, -inf
        %v2554 = vmax.f32 %v2552, %v2553
        %v2555 = vrot.slane %v2554, 4
        %v2556 = vmax.f32 %v2554, %v2555
        %v2557 = vrot.slane %v2556, 2
        %v2558 = vmax.f32 %v2556, %v2557
        %v2559 = vrot.slane %v2558, 1
        %v2560 = vmax.f32 %v2558, %v2559
        %v2561 = vsel %vm2335, %v2321, -inf
        %v2562 = vsel %vm2335, %v2322, -inf
        %v2563 = vmax.f32 %v2561, %v2562
        %v2564 = vrot.slane %v2563, 4
        %v2565 = vmax.f32 %v2563, %v2564
        %v2566 = vrot.slane %v2565, 2
        %v2567 = vmax.f32 %v2565, %v2566
        %v2568 = vrot.slane %v2567, 1
        %v2569 = vmax.f32 %v2567, %v2568
        %v2570 = vsel %vm2335, %v2323, -inf
        %v2571 = vsel %vm2335, %v2324, -inf
        %v2572 = vmax.f32 %v2570, %v2571
        %v2573 = vrot.slane %v2572, 4
        %v2574 = vmax.f32 %v2572, %v2573
        %v2575 = vrot.slane %v2574, 2
        %v2576 = vmax.f32 %v2574, %v2575
        %v2577 = vrot.slane %v2576, 1
        %v2578 = vmax.f32 %v2576, %v2577
        %v2579 = vsel %vm2335, %v2325, -inf
        %v2580 = vsel %vm2335, %v2326, -inf
        %v2581 = vmax.f32 %v2579, %v2580
        %v2582 = vrot.slane %v2581, 4
        %v2583 = vmax.f32 %v2581, %v2582
        %v2584 = vrot.slane %v2583, 2
        %v2585 = vmax.f32 %v2583, %v2584
        %v2586 = vrot.slane %v2585, 1
        %v2587 = vmax.f32 %v2585, %v2586
        %v2588 = vsel %vm2335, %v2327, -inf
        %v2589 = vsel %vm2335, %v2328, -inf
        %v2590 = vmax.f32 %v2588, %v2589
        %v2591 = vrot.slane %v2590, 4
        %v2592 = vmax.f32 %v2590, %v2591
        %v2593 = vrot.slane %v2592, 2
        %v2594 = vmax.f32 %v2592, %v2593
        %v2595 = vrot.slane %v2594, 1
        %v2596 = vmax.f32 %v2594, %v2595
        %v2597 = vsel %vm2335, %v2329, -inf
        %v2598 = vsel %vm2335, %v2330, -inf
        %v2599 = vmax.f32 %v2597, %v2598
        %v2600 = vrot.slane %v2599, 4
        %v2601 = vmax.f32 %v2599, %v2600
        %v2602 = vrot.slane %v2601, 2
        %v2603 = vmax.f32 %v2601, %v2602
        %v2604 = vrot.slane %v2603, 1
        %v2605 = vmax.f32 %v2603, %v2604
        %v2606 = vsel %vm2335, %v2331, -inf
        %v2607 = vsel %vm2335, %v2332, -inf
        %v2608 = vmax.f32 %v2606, %v2607
        %v2609 = vrot.slane %v2608, 4
        %v2610 = vmax.f32 %v2608, %v2609
        %v2611 = vrot.slane %v2610, 2
        %v2612 = vmax.f32 %v2610, %v2611
        %v2613 = vrot.slane %v2612, 1
        %v2614 = vmax.f32 %v2612, %v2613
        %v2615 = vsel %vm2335, %v2333, -inf
        %v2616 = vsel %vm2335, %v2334, -inf
        %v2617 = vmax.f32 %v2615, %v2616
        %v2618 = vrot.slane %v2617, 4
        %v2619 = vmax.f32 %v2617, %v2618
        %v2620 = vrot.slane %v2619, 2
        %v2621 = vmax.f32 %v2619, %v2620
        %v2622 = vrot.slane %v2621, 1
        %v2623 = vmax.f32 %v2621, %v2622
        %v2624 = vld [vmem:[%s814] sm:$0xff]
        %v2625 = vld [vmem:[%s814 + $0x8] sm:$0xff]
        %v2626 = vld [vmem:[%s814 + $0x10] sm:$0xff]
        %v2627 = vld [vmem:[%s814 + $0x18] sm:$0xff]
        %v2628 = vld [vmem:[%s814 + $0x20] sm:$0xff]
        %v2629 = vld [vmem:[%s814 + $0x28] sm:$0xff]
        %v2630 = vld [vmem:[%s814 + $0x30] sm:$0xff]
        %v2631 = vld [vmem:[%s814 + $0x38] sm:$0xff]
        %v2632 = vld [vmem:[%s814 + $0x40] sm:$0xff]
        %v2633 = vld [vmem:[%s814 + $0x48] sm:$0xff]
        %v2634 = vld [vmem:[%s814 + $0x50] sm:$0xff]
        %v2635 = vld [vmem:[%s814 + $0x58] sm:$0xff]
        %v2636 = vld [vmem:[%s814 + $0x60] sm:$0xff]
        %v2637 = vld [vmem:[%s814 + $0x68] sm:$0xff]
        %v2638 = vld [vmem:[%s814 + $0x70] sm:$0xff]
        %v2639 = vld [vmem:[%s814 + $0x78] sm:$0xff]
        %v2640 = vld [vmem:[%s814 + $0x80] sm:$0xff]
        %v2641 = vld [vmem:[%s814 + $0x88] sm:$0xff]
        %v2642 = vld [vmem:[%s814 + $0x90] sm:$0xff]
        %v2643 = vld [vmem:[%s814 + $0x98] sm:$0xff]
        %v2644 = vld [vmem:[%s814 + $0xa0] sm:$0xff]
        %v2645 = vld [vmem:[%s814 + $0xa8] sm:$0xff]
        %v2646 = vld [vmem:[%s814 + $0xb0] sm:$0xff]
        %v2647 = vld [vmem:[%s814 + $0xb8] sm:$0xff]
        %v2648 = vld [vmem:[%s814 + $0xc0] sm:$0xff]
        %v2649 = vld [vmem:[%s814 + $0xc8] sm:$0xff]
        %v2650 = vld [vmem:[%s814 + $0xd0] sm:$0xff]
        %v2651 = vld [vmem:[%s814 + $0xd8] sm:$0xff]
        %v2652 = vld [vmem:[%s814 + $0xe0] sm:$0xff]
        %v2653 = vld [vmem:[%s814 + $0xe8] sm:$0xff]
        %v2654 = vld [vmem:[%s814 + $0xf0] sm:$0xff]
        %v2655 = vld [vmem:[%s814 + $0xf8] sm:$0xff]
        %v2656 = vld [vmem:[%s814 + $0x100] sm:$0xff]
        %v2657 = vld [vmem:[%s814 + $0x108] sm:$0xff]
        %v2658 = vld [vmem:[%s814 + $0x110] sm:$0xff]
        %v2659 = vld [vmem:[%s814 + $0x118] sm:$0xff]
        %v2660 = vld [vmem:[%s814 + $0x120] sm:$0xff]
        %v2661 = vld [vmem:[%s814 + $0x128] sm:$0xff]
        %v2662 = vld [vmem:[%s814 + $0x130] sm:$0xff]
        %v2663 = vld [vmem:[%s814 + $0x138] sm:$0xff]
        %v2664 = vld [vmem:[%s814 + $0x140] sm:$0xff]
        %v2665 = vld [vmem:[%s814 + $0x148] sm:$0xff]
        %v2666 = vld [vmem:[%s814 + $0x150] sm:$0xff]
        %v2667 = vld [vmem:[%s814 + $0x158] sm:$0xff]
        %v2668 = vld [vmem:[%s814 + $0x160] sm:$0xff]
        %v2669 = vld [vmem:[%s814 + $0x168] sm:$0xff]
        %v2670 = vld [vmem:[%s814 + $0x170] sm:$0xff]
        %v2671 = vld [vmem:[%s814 + $0x178] sm:$0xff]
        %v2672 = vld [vmem:[%s814 + $0x180] sm:$0xff]
        %v2673 = vld [vmem:[%s814 + $0x188] sm:$0xff]
        %v2674 = vld [vmem:[%s814 + $0x190] sm:$0xff]
        %v2675 = vld [vmem:[%s814 + $0x198] sm:$0xff]
        %v2676 = vld [vmem:[%s814 + $0x1a0] sm:$0xff]
        %v2677 = vld [vmem:[%s814 + $0x1a8] sm:$0xff]
        %v2678 = vld [vmem:[%s814 + $0x1b0] sm:$0xff]
        %v2679 = vld [vmem:[%s814 + $0x1b8] sm:$0xff]
        %v2680 = vld [vmem:[%s814 + $0x1c0] sm:$0xff]
        %v2681 = vld [vmem:[%s814 + $0x1c8] sm:$0xff]
        %v2682 = vld [vmem:[%s814 + $0x1d0] sm:$0xff]
        %v2683 = vld [vmem:[%s814 + $0x1d8] sm:$0xff]
        %v2684 = vld [vmem:[%s814 + $0x1e0] sm:$0xff]
        %v2685 = vld [vmem:[%s814 + $0x1e8] sm:$0xff]
        %v2686 = vld [vmem:[%s814 + $0x1f0] sm:$0xff]
        %v2687 = vld [vmem:[%s814 + $0x1f8] sm:$0xff]
        %v2688 = vld [vmem:[%s8] sm:$0xff]
        %v2689 = vld [vmem:[%s8 + $0x8] sm:$0xff]
        %v2690 = vld [vmem:[%s8 + $0x10] sm:$0x7]
        %v2691 = vld [vmem:[%s9] sm:$0x1]
        %v2693 = vlaneseq
        %v2694 = vshrl.u32 %v2693, 7
        %v2695 = vsub.s32 0, %v2694
        %v2696 = vrot.slane %v2691, %v2695
        %vm2698 = vcmask 154624
        %v2700 = vsel %vm2698, %v2624, 0
        %v2703 = vsel %vm2698, %v2625, 0
        %v2706 = vsel %vm2698, %v2626, 0
        %v2709 = vsel %vm2698, %v2627, 0
        %v2712 = vsel %vm2698, %v2628, 0
        %v2715 = vsel %vm2698, %v2629, 0
        %v2718 = vsel %vm2698, %v2630, 0
        %v2721 = vsel %vm2698, %v2631, 0
        %v2724 = vsel %vm2698, %v2632, 0
        %v2727 = vsel %vm2698, %v2633, 0
        %v2730 = vsel %vm2698, %v2634, 0
        %v2733 = vsel %vm2698, %v2635, 0
        %v2736 = vsel %vm2698, %v2636, 0
        %v2739 = vsel %vm2698, %v2637, 0
        %v2742 = vsel %vm2698, %v2638, 0
        %v2745 = vsel %vm2698, %v2639, 0
        %v2748 = vsel %vm2698, %v2640, 0
        %v2751 = vsel %vm2698, %v2641, 0
        %v2754 = vsel %vm2698, %v2642, 0
        %v2757 = vsel %vm2698, %v2643, 0
        %v2760 = vsel %vm2698, %v2644, 0
        %v2763 = vsel %vm2698, %v2645, 0
        %v2766 = vsel %vm2698, %v2646, 0
        %v2769 = vsel %vm2698, %v2647, 0
        %v2772 = vsel %vm2698, %v2648, 0
        %v2775 = vsel %vm2698, %v2649, 0
        %v2778 = vsel %vm2698, %v2650, 0
        %v2781 = vsel %vm2698, %v2651, 0
        %v2784 = vsel %vm2698, %v2652, 0
        %v2787 = vsel %vm2698, %v2653, 0
        %v2790 = vsel %vm2698, %v2654, 0
        %v2793 = vsel %vm2698, %v2655, 0
        %v2796 = vsel %vm2698, %v2656, 0
        %v2799 = vsel %vm2698, %v2657, 0
        %v2802 = vsel %vm2698, %v2658, 0
        %v2805 = vsel %vm2698, %v2659, 0
        %v2808 = vsel %vm2698, %v2660, 0
        %v2811 = vsel %vm2698, %v2661, 0
        %v2814 = vsel %vm2698, %v2662, 0
        %v2817 = vsel %vm2698, %v2663, 0
        %v2820 = vsel %vm2698, %v2664, 0
        %v2823 = vsel %vm2698, %v2665, 0
        %v2826 = vsel %vm2698, %v2666, 0
        %v2829 = vsel %vm2698, %v2667, 0
        %v2832 = vsel %vm2698, %v2668, 0
        %v2835 = vsel %vm2698, %v2669, 0
        %v2838 = vsel %vm2698, %v2670, 0
        %v2841 = vsel %vm2698, %v2671, 0
        %v2844 = vsel %vm2698, %v2672, 0
        %v2847 = vsel %vm2698, %v2673, 0
        %v2850 = vsel %vm2698, %v2674, 0
        %v2853 = vsel %vm2698, %v2675, 0
        %v2856 = vsel %vm2698, %v2676, 0
        %v2859 = vsel %vm2698, %v2677, 0
        %v2862 = vsel %vm2698, %v2678, 0
        %v2865 = vsel %vm2698, %v2679, 0
        %v2868 = vsel %vm2698, %v2680, 0
        %v2871 = vsel %vm2698, %v2681, 0
        %v2874 = vsel %vm2698, %v2682, 0
        %v2877 = vsel %vm2698, %v2683, 0
        %v2880 = vsel %vm2698, %v2684, 0
        %v2883 = vsel %vm2698, %v2685, 0
        %v2886 = vsel %vm2698, %v2686, 0
        %v2889 = vsel %vm2698, %v2687, 0
        %vm2891 = vcmask 1042432
        %v2893 = vsel %vm2891, %v2690, 0
        %2895 = vmatprep.subr.mxu0 0.0
        %2896 = vmatpush1.msra.mxu0 0.0
        %2897 = vmatprep.subr.mxu0 0.0
        %2898 = vmatpush1.msra.mxu0 0.0
        %2899 = vmatprep.subr.mxu0 0.0
        %2900 = vmatpush1.msra.mxu0 0.0
        %2901 = vmatprep.subr.mxu0 0.0
        %2902 = vmatpush1.msra.mxu0 0.0
        %2903 = vmatprep.subr.mxu0 0.0
        %2904 = vmatpush1.msra.mxu0 0.0
        %2905 = vmatprep.subr.mxu0 0.0
        %2906 = vmatpush1.msra.mxu0 0.0
        %2907 = vmatprep.subr.mxu0 0.0
        %2908 = vmatpush1.msra.mxu0 0.0
        %2909 = vmatprep.subr.mxu0 0.0
        %2910 = vmatpush1.msra.mxu0 0.0
        %2911 = vmatprep.subr.mxu0 0.0
        %2912 = vmatpush1.msra.mxu0 0.0
        %2913 = vmatprep.subr.mxu0 0.0
        %2914 = vmatpush1.msra.mxu0 0.0
        %2915 = vmatprep.subr.mxu0 0.0
        %2916 = vmatpush1.msra.mxu0 0.0
        %2917 = vmatprep.subr.mxu0 0.0
        %2918 = vmatpush1.msra.mxu0 0.0
        %2919 = vmatprep.subr.mxu0 0.0
        %2920 = vmatpush1.msra.mxu0 0.0
        %2921 = vmatprep.subr.mxu0 0.0
        %2922 = vmatpush1.msra.mxu0 %v2893
        %2923 = vmatprep.subr.mxu0 0.0
        %2924 = vmatpush1.msra.mxu0 %v2689
        %2925 = vmatprep.subr.mxu0 0.0
        %2926 = vmatpush1.msra.mxu0 %v2688
        %2927 = vmatprep.subr.mxu0 0.0
        %2928 = vmatpush2.msra.mxu0 0.0
        %2929 = vmatprep.subr.mxu0 0.0
        %2930 = vmatpush2.msra.mxu0 0.0
        %2931 = vmatprep.subr.mxu0 0.0
        %2932 = vmatpush2.msra.mxu0 0.0
        %2933 = vmatprep.subr.mxu0 0.0
        %2934 = vmatpush2.msra.mxu0 0.0
        %2935 = vmatprep.subr.mxu0 0.0
        %2936 = vmatpush2.msra.mxu0 0.0
        %2937 = vmatprep.subr.mxu0 0.0
        %2938 = vmatpush2.msra.mxu0 0.0
        %2939 = vmatprep.subr.mxu0 0.0
        %2940 = vmatpush2.msra.mxu0 0.0
        %2941 = vmatprep.subr.mxu0 0.0
        %2942 = vmatpush2.msra.mxu0 0.0
        %2943 = vmatprep.subr.mxu0 0.0
        %2944 = vmatpush2.msra.mxu0 0.0
        %2945 = vmatprep.subr.mxu0 0.0
        %2946 = vmatpush2.msra.mxu0 0.0
        %2947 = vmatprep.subr.mxu0 0.0
        %2948 = vmatpush2.msra.mxu0 0.0
        %2949 = vmatprep.subr.mxu0 0.0
        %2950 = vmatpush2.msra.mxu0 0.0
        %2951 = vmatprep.subr.mxu0 0.0
        %2952 = vmatpush2.msra.mxu0 0.0
        %2953 = vmatprep.subr.mxu0 0.0
        %2954 = vmatpush2.msra.mxu0 0.0
        %2955 = vmatprep.subr.mxu0 0.0
        %2956 = vmatpush2.msra.mxu0 0.0
        %2957 = vmatprep.subr.mxu0 0.0
        %2958 = vmatpush2.msra.mxu0 0.0
        %2959 = vmatprep.mubr.f32.mxu0 0.0
        %2960 = vmatmul.mubr.f32.gmra.mxu0 %v2700
        %v2961 = vpop.f32.mrf.mxu0
        %v2962 = vadd.f32 %v2696, %v2961
        %v2963 = vpop.f32.mrf.mxu0
        %2964 = vmatprep.mubr.f32.mxu0 0.0
        %2965 = vmatmul.mubr.f32.gmra.mxu0 %v2703
        %v2966 = vpop.f32.mrf.mxu0
        %v2967 = vadd.f32 %v2696, %v2966
        %v2968 = vpop.f32.mrf.mxu0
        %2969 = vmatprep.mubr.f32.mxu0 0.0
        %2970 = vmatmul.mubr.f32.gmra.mxu0 %v2706
        %v2971 = vpop.f32.mrf.mxu0
        %v2972 = vadd.f32 %v2696, %v2971
        %v2973 = vpop.f32.mrf.mxu0
        %2974 = vmatprep.mubr.f32.mxu0 0.0
        %2975 = vmatmul.mubr.f32.gmra.mxu0 %v2709
        %v2976 = vpop.f32.mrf.mxu0
        %v2977 = vadd.f32 %v2696, %v2976
        %v2978 = vpop.f32.mrf.mxu0
        %2979 = vmatprep.mubr.f32.mxu0 0.0
        %2980 = vmatmul.mubr.f32.gmra.mxu0 %v2712
        %v2981 = vpop.f32.mrf.mxu0
        %v2982 = vadd.f32 %v2696, %v2981
        %v2983 = vpop.f32.mrf.mxu0
        %2984 = vmatprep.mubr.f32.mxu0 0.0
        %2985 = vmatmul.mubr.f32.gmra.mxu0 %v2715
        %v2986 = vpop.f32.mrf.mxu0
        %v2987 = vadd.f32 %v2696, %v2986
        %v2988 = vpop.f32.mrf.mxu0
        %2989 = vmatprep.mubr.f32.mxu0 0.0
        %2990 = vmatmul.mubr.f32.gmra.mxu0 %v2718
        %v2991 = vpop.f32.mrf.mxu0
        %v2992 = vadd.f32 %v2696, %v2991
        %v2993 = vpop.f32.mrf.mxu0
        %2994 = vmatprep.mubr.f32.mxu0 0.0
        %2995 = vmatmul.mubr.f32.gmra.mxu0 %v2721
        %v2996 = vpop.f32.mrf.mxu0
        %v2997 = vadd.f32 %v2696, %v2996
        %v2998 = vpop.f32.mrf.mxu0
        %2999 = vmatprep.mubr.f32.mxu0 0.0
        %3000 = vmatmul.mubr.f32.gmra.mxu0 %v2724
        %v3001 = vpop.f32.mrf.mxu0
        %v3002 = vadd.f32 %v2696, %v3001
        %v3003 = vpop.f32.mrf.mxu0
        %3004 = vmatprep.mubr.f32.mxu0 0.0
        %3005 = vmatmul.mubr.f32.gmra.mxu0 %v2727
        %v3006 = vpop.f32.mrf.mxu0
        %v3007 = vadd.f32 %v2696, %v3006
        %v3008 = vpop.f32.mrf.mxu0
        %3009 = vmatprep.mubr.f32.mxu0 0.0
        %3010 = vmatmul.mubr.f32.gmra.mxu0 %v2730
        %v3011 = vpop.f32.mrf.mxu0
        %v3012 = vadd.f32 %v2696, %v3011
        %v3013 = vpop.f32.mrf.mxu0
        %3014 = vmatprep.mubr.f32.mxu0 0.0
        %3015 = vmatmul.mubr.f32.gmra.mxu0 %v2733
        %v3016 = vpop.f32.mrf.mxu0
        %v3017 = vadd.f32 %v2696, %v3016
        %v3018 = vpop.f32.mrf.mxu0
        %3019 = vmatprep.mubr.f32.mxu0 0.0
        %3020 = vmatmul.mubr.f32.gmra.mxu0 %v2736
        %v3021 = vpop.f32.mrf.mxu0
        %v3022 = vadd.f32 %v2696, %v3021
        %v3023 = vpop.f32.mrf.mxu0
        %3024 = vmatprep.mubr.f32.mxu0 0.0
        %3025 = vmatmul.mubr.f32.gmra.mxu0 %v2739
        %v3026 = vpop.f32.mrf.mxu0
        %v3027 = vadd.f32 %v2696, %v3026
        %v3028 = vpop.f32.mrf.mxu0
        %3029 = vmatprep.mubr.f32.mxu0 0.0
        %3030 = vmatmul.mubr.f32.gmra.mxu0 %v2742
        %v3031 = vpop.f32.mrf.mxu0
        %v3032 = vadd.f32 %v2696, %v3031
        %v3033 = vpop.f32.mrf.mxu0
        %3034 = vmatprep.mubr.f32.mxu0 0.0
        %3035 = vmatmul.mubr.f32.gmra.mxu0 %v2745
        %v3036 = vpop.f32.mrf.mxu0
        %v3037 = vadd.f32 %v2696, %v3036
        %v3038 = vpop.f32.mrf.mxu0
        %3039 = vmatprep.mubr.f32.mxu0 0.0
        %3040 = vmatmul.mubr.f32.gmra.mxu0 %v2748
        %v3041 = vpop.f32.mrf.mxu0
        %v3042 = vadd.f32 %v2696, %v3041
        %v3043 = vpop.f32.mrf.mxu0
        %3044 = vmatprep.mubr.f32.mxu0 0.0
        %3045 = vmatmul.mubr.f32.gmra.mxu0 %v2751
        %v3046 = vpop.f32.mrf.mxu0
        %v3047 = vadd.f32 %v2696, %v3046
        %v3048 = vpop.f32.mrf.mxu0
        %3049 = vmatprep.mubr.f32.mxu0 0.0
        %3050 = vmatmul.mubr.f32.gmra.mxu0 %v2754
        %v3051 = vpop.f32.mrf.mxu0
        %v3052 = vadd.f32 %v2696, %v3051
        %v3053 = vpop.f32.mrf.mxu0
        %3054 = vmatprep.mubr.f32.mxu0 0.0
        %3055 = vmatmul.mubr.f32.gmra.mxu0 %v2757
        %v3056 = vpop.f32.mrf.mxu0
        %v3057 = vadd.f32 %v2696, %v3056
        %v3058 = vpop.f32.mrf.mxu0
        %3059 = vmatprep.mubr.f32.mxu0 0.0
        %3060 = vmatmul.mubr.f32.gmra.mxu0 %v2760
        %v3061 = vpop.f32.mrf.mxu0
        %v3062 = vadd.f32 %v2696, %v3061
        %v3063 = vpop.f32.mrf.mxu0
        %3064 = vmatprep.mubr.f32.mxu0 0.0
        %3065 = vmatmul.mubr.f32.gmra.mxu0 %v2763
        %v3066 = vpop.f32.mrf.mxu0
        %v3067 = vadd.f32 %v2696, %v3066
        %v3068 = vpop.f32.mrf.mxu0
        %3069 = vmatprep.mubr.f32.mxu0 0.0
        %3070 = vmatmul.mubr.f32.gmra.mxu0 %v2766
        %v3071 = vpop.f32.mrf.mxu0
        %v3072 = vadd.f32 %v2696, %v3071
        %v3073 = vpop.f32.mrf.mxu0
        %3074 = vmatprep.mubr.f32.mxu0 0.0
        %3075 = vmatmul.mubr.f32.gmra.mxu0 %v2769
        %v3076 = vpop.f32.mrf.mxu0
        %v3077 = vadd.f32 %v2696, %v3076
        %v3078 = vpop.f32.mrf.mxu0
        %3079 = vmatprep.mubr.f32.mxu0 0.0
        %3080 = vmatmul.mubr.f32.gmra.mxu0 %v2772
        %v3081 = vpop.f32.mrf.mxu0
        %v3082 = vadd.f32 %v2696, %v3081
        %v3083 = vpop.f32.mrf.mxu0
        %3084 = vmatprep.mubr.f32.mxu0 0.0
        %3085 = vmatmul.mubr.f32.gmra.mxu0 %v2775
        %v3086 = vpop.f32.mrf.mxu0
        %v3087 = vadd.f32 %v2696, %v3086
        %v3088 = vpop.f32.mrf.mxu0
        %3089 = vmatprep.mubr.f32.mxu0 0.0
        %3090 = vmatmul.mubr.f32.gmra.mxu0 %v2778
        %v3091 = vpop.f32.mrf.mxu0
        %v3092 = vadd.f32 %v2696, %v3091
        %v3093 = vpop.f32.mrf.mxu0
        %3094 = vmatprep.mubr.f32.mxu0 0.0
        %3095 = vmatmul.mubr.f32.gmra.mxu0 %v2781
        %v3096 = vpop.f32.mrf.mxu0
        %v3097 = vadd.f32 %v2696, %v3096
        %v3098 = vpop.f32.mrf.mxu0
        %3099 = vmatprep.mubr.f32.mxu0 0.0
        %3100 = vmatmul.mubr.f32.gmra.mxu0 %v2784
        %v3101 = vpop.f32.mrf.mxu0
        %v3102 = vadd.f32 %v2696, %v3101
        %v3103 = vpop.f32.mrf.mxu0
        %3104 = vmatprep.mubr.f32.mxu0 0.0
        %3105 = vmatmul.mubr.f32.gmra.mxu0 %v2787
        %v3106 = vpop.f32.mrf.mxu0
        %v3107 = vadd.f32 %v2696, %v3106
        %v3108 = vpop.f32.mrf.mxu0
        %3109 = vmatprep.mubr.f32.mxu0 0.0
        %3110 = vmatmul.mubr.f32.gmra.mxu0 %v2790
        %v3111 = vpop.f32.mrf.mxu0
        %v3112 = vadd.f32 %v2696, %v3111
        %v3113 = vpop.f32.mrf.mxu0
        %3114 = vmatprep.mubr.f32.mxu0 0.0
        %3115 = vmatmul.mubr.f32.gmra.mxu0 %v2793
        %v3116 = vpop.f32.mrf.mxu0
        %v3117 = vadd.f32 %v2696, %v3116
        %v3118 = vpop.f32.mrf.mxu0
        %3119 = vmatprep.mubr.f32.mxu0 0.0
        %3120 = vmatmul.mubr.f32.gmra.mxu0 %v2796
        %v3121 = vpop.f32.mrf.mxu0
        %v3122 = vadd.f32 %v2696, %v3121
        %v3123 = vpop.f32.mrf.mxu0
        %3124 = vmatprep.mubr.f32.mxu0 0.0
        %3125 = vmatmul.mubr.f32.gmra.mxu0 %v2799
        %v3126 = vpop.f32.mrf.mxu0
        %v3127 = vadd.f32 %v2696, %v3126
        %v3128 = vpop.f32.mrf.mxu0
        %3129 = vmatprep.mubr.f32.mxu0 0.0
        %3130 = vmatmul.mubr.f32.gmra.mxu0 %v2802
        %v3131 = vpop.f32.mrf.mxu0
        %v3132 = vadd.f32 %v2696, %v3131
        %v3133 = vpop.f32.mrf.mxu0
        %3134 = vmatprep.mubr.f32.mxu0 0.0
        %3135 = vmatmul.mubr.f32.gmra.mxu0 %v2805
        %v3136 = vpop.f32.mrf.mxu0
        %v3137 = vadd.f32 %v2696, %v3136
        %v3138 = vpop.f32.mrf.mxu0
        %3139 = vmatprep.mubr.f32.mxu0 0.0
        %3140 = vmatmul.mubr.f32.gmra.mxu0 %v2808
        %v3141 = vpop.f32.mrf.mxu0
        %v3142 = vadd.f32 %v2696, %v3141
        %v3143 = vpop.f32.mrf.mxu0
        %3144 = vmatprep.mubr.f32.mxu0 0.0
        %3145 = vmatmul.mubr.f32.gmra.mxu0 %v2811
        %v3146 = vpop.f32.mrf.mxu0
        %v3147 = vadd.f32 %v2696, %v3146
        %v3148 = vpop.f32.mrf.mxu0
        %3149 = vmatprep.mubr.f32.mxu0 0.0
        %3150 = vmatmul.mubr.f32.gmra.mxu0 %v2814
        %v3151 = vpop.f32.mrf.mxu0
        %v3152 = vadd.f32 %v2696, %v3151
        %v3153 = vpop.f32.mrf.mxu0
        %3154 = vmatprep.mubr.f32.mxu0 0.0
        %3155 = vmatmul.mubr.f32.gmra.mxu0 %v2817
        %v3156 = vpop.f32.mrf.mxu0
        %v3157 = vadd.f32 %v2696, %v3156
        %v3158 = vpop.f32.mrf.mxu0
        %3159 = vmatprep.mubr.f32.mxu0 0.0
        %3160 = vmatmul.mubr.f32.gmra.mxu0 %v2820
        %v3161 = vpop.f32.mrf.mxu0
        %v3162 = vadd.f32 %v2696, %v3161
        %v3163 = vpop.f32.mrf.mxu0
        %3164 = vmatprep.mubr.f32.mxu0 0.0
        %3165 = vmatmul.mubr.f32.gmra.mxu0 %v2823
        %v3166 = vpop.f32.mrf.mxu0
        %v3167 = vadd.f32 %v2696, %v3166
        %v3168 = vpop.f32.mrf.mxu0
        %3169 = vmatprep.mubr.f32.mxu0 0.0
        %3170 = vmatmul.mubr.f32.gmra.mxu0 %v2826
        %v3171 = vpop.f32.mrf.mxu0
        %v3172 = vadd.f32 %v2696, %v3171
        %v3173 = vpop.f32.mrf.mxu0
        %3174 = vmatprep.mubr.f32.mxu0 0.0
        %3175 = vmatmul.mubr.f32.gmra.mxu0 %v2829
        %v3176 = vpop.f32.mrf.mxu0
        %v3177 = vadd.f32 %v2696, %v3176
        %v3178 = vpop.f32.mrf.mxu0
        %3179 = vmatprep.mubr.f32.mxu0 0.0
        %3180 = vmatmul.mubr.f32.gmra.mxu0 %v2832
        %v3181 = vpop.f32.mrf.mxu0
        %v3182 = vadd.f32 %v2696, %v3181
        %v3183 = vpop.f32.mrf.mxu0
        %3184 = vmatprep.mubr.f32.mxu0 0.0
        %3185 = vmatmul.mubr.f32.gmra.mxu0 %v2835
        %v3186 = vpop.f32.mrf.mxu0
        %v3187 = vadd.f32 %v2696, %v3186
        %v3188 = vpop.f32.mrf.mxu0
        %3189 = vmatprep.mubr.f32.mxu0 0.0
        %3190 = vmatmul.mubr.f32.gmra.mxu0 %v2838
        %v3191 = vpop.f32.mrf.mxu0
        %v3192 = vadd.f32 %v2696, %v3191
        %v3193 = vpop.f32.mrf.mxu0
        %3194 = vmatprep.mubr.f32.mxu0 0.0
        %3195 = vmatmul.mubr.f32.gmra.mxu0 %v2841
        %v3196 = vpop.f32.mrf.mxu0
        %v3197 = vadd.f32 %v2696, %v3196
        %v3198 = vpop.f32.mrf.mxu0
        %3199 = vmatprep.mubr.f32.mxu0 0.0
        %3200 = vmatmul.mubr.f32.gmra.mxu0 %v2844
        %v3201 = vpop.f32.mrf.mxu0
        %v3202 = vadd.f32 %v2696, %v3201
        %v3203 = vpop.f32.mrf.mxu0
        %3204 = vmatprep.mubr.f32.mxu0 0.0
        %3205 = vmatmul.mubr.f32.gmra.mxu0 %v2847
        %v3206 = vpop.f32.mrf.mxu0
        %v3207 = vadd.f32 %v2696, %v3206
        %v3208 = vpop.f32.mrf.mxu0
        %3209 = vmatprep.mubr.f32.mxu0 0.0
        %3210 = vmatmul.mubr.f32.gmra.mxu0 %v2850
        %v3211 = vpop.f32.mrf.mxu0
        %v3212 = vadd.f32 %v2696, %v3211
        %v3213 = vpop.f32.mrf.mxu0
        %3214 = vmatprep.mubr.f32.mxu0 0.0
        %3215 = vmatmul.mubr.f32.gmra.mxu0 %v2853
        %v3216 = vpop.f32.mrf.mxu0
        %v3217 = vadd.f32 %v2696, %v3216
        %v3218 = vpop.f32.mrf.mxu0
        %3219 = vmatprep.mubr.f32.mxu0 0.0
        %3220 = vmatmul.mubr.f32.gmra.mxu0 %v2856
        %v3221 = vpop.f32.mrf.mxu0
        %v3222 = vadd.f32 %v2696, %v3221
        %v3223 = vpop.f32.mrf.mxu0
        %3224 = vmatprep.mubr.f32.mxu0 0.0
        %3225 = vmatmul.mubr.f32.gmra.mxu0 %v2859
        %v3226 = vpop.f32.mrf.mxu0
        %v3227 = vadd.f32 %v2696, %v3226
        %v3228 = vpop.f32.mrf.mxu0
        %3229 = vmatprep.mubr.f32.mxu0 0.0
        %3230 = vmatmul.mubr.f32.gmra.mxu0 %v2862
        %v3231 = vpop.f32.mrf.mxu0
        %v3232 = vadd.f32 %v2696, %v3231
        %v3233 = vpop.f32.mrf.mxu0
        %3234 = vmatprep.mubr.f32.mxu0 0.0
        %3235 = vmatmul.mubr.f32.gmra.mxu0 %v2865
        %v3236 = vpop.f32.mrf.mxu0
        %v3237 = vadd.f32 %v2696, %v3236
        %v3238 = vpop.f32.mrf.mxu0
        %3239 = vmatprep.mubr.f32.mxu0 0.0
        %3240 = vmatmul.mubr.f32.gmra.mxu0 %v2868
        %v3241 = vpop.f32.mrf.mxu0
        %v3242 = vadd.f32 %v2696, %v3241
        %v3243 = vpop.f32.mrf.mxu0
        %3244 = vmatprep.mubr.f32.mxu0 0.0
        %3245 = vmatmul.mubr.f32.gmra.mxu0 %v2871
        %v3246 = vpop.f32.mrf.mxu0
        %v3247 = vadd.f32 %v2696, %v3246
        %v3248 = vpop.f32.mrf.mxu0
        %3249 = vmatprep.mubr.f32.mxu0 0.0
        %3250 = vmatmul.mubr.f32.gmra.mxu0 %v2874
        %v3251 = vpop.f32.mrf.mxu0
        %v3252 = vadd.f32 %v2696, %v3251
        %v3253 = vpop.f32.mrf.mxu0
        %3254 = vmatprep.mubr.f32.mxu0 0.0
        %3255 = vmatmul.mubr.f32.gmra.mxu0 %v2877
        %v3256 = vpop.f32.mrf.mxu0
        %v3257 = vadd.f32 %v2696, %v3256
        %v3258 = vpop.f32.mrf.mxu0
        %3259 = vmatprep.mubr.f32.mxu0 0.0
        %3260 = vmatmul.mubr.f32.gmra.mxu0 %v2880
        %v3261 = vpop.f32.mrf.mxu0
        %v3262 = vadd.f32 %v2696, %v3261
        %v3263 = vpop.f32.mrf.mxu0
        %3264 = vmatprep.mubr.f32.mxu0 0.0
        %3265 = vmatmul.mubr.f32.gmra.mxu0 %v2883
        %v3266 = vpop.f32.mrf.mxu0
        %v3267 = vadd.f32 %v2696, %v3266
        %v3268 = vpop.f32.mrf.mxu0
        %3269 = vmatprep.mubr.f32.mxu0 0.0
        %3270 = vmatmul.mubr.f32.gmra.mxu0 %v2886
        %v3271 = vpop.f32.mrf.mxu0
        %v3272 = vadd.f32 %v2696, %v3271
        %v3273 = vpop.f32.mrf.mxu0
        %3274 = vmatprep.mubr.f32.mxu0 0.0
        %3275 = vmatmul.mubr.f32.gmra.mxu0 %v2889
        %v3276 = vpop.f32.mrf.mxu0
        %v3277 = vadd.f32 %v2696, %v3276
        %v3278 = vpop.f32.mrf.mxu0
        %3279 = vdwg.mxu0
        %v3280 = vmax.f32 %v2962, 0.0
        %v3281 = vmax.f32 %v2967, 0.0
        %v3282 = vmax.f32 %v2972, 0.0
        %v3283 = vmax.f32 %v2977, 0.0
        %v3284 = vmax.f32 %v2982, 0.0
        %v3285 = vmax.f32 %v2987, 0.0
        %v3286 = vmax.f32 %v2992, 0.0
        %v3287 = vmax.f32 %v2997, 0.0
        %v3288 = vmax.f32 %v3002, 0.0
        %v3289 = vmax.f32 %v3007, 0.0
        %v3290 = vmax.f32 %v3012, 0.0
        %v3291 = vmax.f32 %v3017, 0.0
        %v3292 = vmax.f32 %v3022, 0.0
        %v3293 = vmax.f32 %v3027, 0.0
        %v3294 = vmax.f32 %v3032, 0.0
        %v3295 = vmax.f32 %v3037, 0.0
        %v3296 = vmax.f32 %v3042, 0.0
        %v3297 = vmax.f32 %v3047, 0.0
        %v3298 = vmax.f32 %v3052, 0.0
        %v3299 = vmax.f32 %v3057, 0.0
        %v3300 = vmax.f32 %v3062, 0.0
        %v3301 = vmax.f32 %v3067, 0.0
        %v3302 = vmax.f32 %v3072, 0.0
        %v3303 = vmax.f32 %v3077, 0.0
        %v3304 = vmax.f32 %v3082, 0.0
        %v3305 = vmax.f32 %v3087, 0.0
        %v3306 = vmax.f32 %v3092, 0.0
        %v3307 = vmax.f32 %v3097, 0.0
        %v3308 = vmax.f32 %v3102, 0.0
        %v3309 = vmax.f32 %v3107, 0.0
        %v3310 = vmax.f32 %v3112, 0.0
        %v3311 = vmax.f32 %v3117, 0.0
        %v3312 = vmax.f32 %v3122, 0.0
        %v3313 = vmax.f32 %v3127, 0.0
        %v3314 = vmax.f32 %v3132, 0.0
        %v3315 = vmax.f32 %v3137, 0.0
        %v3316 = vmax.f32 %v3142, 0.0
        %v3317 = vmax.f32 %v3147, 0.0
        %v3318 = vmax.f32 %v3152, 0.0
        %v3319 = vmax.f32 %v3157, 0.0
        %v3320 = vmax.f32 %v3162, 0.0
        %v3321 = vmax.f32 %v3167, 0.0
        %v3322 = vmax.f32 %v3172, 0.0
        %v3323 = vmax.f32 %v3177, 0.0
        %v3324 = vmax.f32 %v3182, 0.0
        %v3325 = vmax.f32 %v3187, 0.0
        %v3326 = vmax.f32 %v3192, 0.0
        %v3327 = vmax.f32 %v3197, 0.0
        %v3328 = vmax.f32 %v3202, 0.0
        %v3329 = vmax.f32 %v3207, 0.0
        %v3330 = vmax.f32 %v3212, 0.0
        %v3331 = vmax.f32 %v3217, 0.0
        %v3332 = vmax.f32 %v3222, 0.0
        %v3333 = vmax.f32 %v3227, 0.0
        %v3334 = vmax.f32 %v3232, 0.0
        %v3335 = vmax.f32 %v3237, 0.0
        %v3336 = vmax.f32 %v3242, 0.0
        %v3337 = vmax.f32 %v3247, 0.0
        %v3338 = vmax.f32 %v3252, 0.0
        %v3339 = vmax.f32 %v3257, 0.0
        %v3340 = vmax.f32 %v3262, 0.0
        %v3341 = vmax.f32 %v3267, 0.0
        %v3342 = vmax.f32 %v3272, 0.0
        %v3343 = vmax.f32 %v3277, 0.0
        %v3344 = vld [vmem:[%s10] sm:$0xff]
        %v3345 = vld [vmem:[%s10 + $0x8] sm:$0xff]
        %v3346 = vld [vmem:[%s10 + $0x10] sm:$0xff]
        %v3347 = vld [vmem:[%s10 + $0x18] sm:$0xff]
        %v3348 = vld [vmem:[%s11] sm:$0x1]
        %v3350 = vlaneseq
        %v3351 = vshrl.u32 %v3350, 7
        %v3352 = vsub.s32 0, %v3351
        %v3353 = vrot.slane %v3348, %v3352
        %v3356 = vsel %vm1693, %v3280, 0
        %v3359 = vsel %vm1693, %v3281, 0
        %v3362 = vsel %vm1693, %v3282, 0
        %v3365 = vsel %vm1693, %v3283, 0
        %v3368 = vsel %vm1693, %v3284, 0
        %v3371 = vsel %vm1693, %v3285, 0
        %v3374 = vsel %vm1693, %v3286, 0
        %v3377 = vsel %vm1693, %v3287, 0
        %v3380 = vsel %vm1693, %v3288, 0
        %v3383 = vsel %vm1693, %v3289, 0
        %v3386 = vsel %vm1693, %v3290, 0
        %v3389 = vsel %vm1693, %v3291, 0
        %v3392 = vsel %vm1693, %v3292, 0
        %v3395 = vsel %vm1693, %v3293, 0
        %v3398 = vsel %vm1693, %v3294, 0
        %v3401 = vsel %vm1693, %v3295, 0
        %v3404 = vsel %vm1693, %v3296, 0
        %v3407 = vsel %vm1693, %v3297, 0
        %v3410 = vsel %vm1693, %v3298, 0
        %v3413 = vsel %vm1693, %v3299, 0
        %v3416 = vsel %vm1693, %v3300, 0
        %v3419 = vsel %vm1693, %v3301, 0
        %v3422 = vsel %vm1693, %v3302, 0
        %v3425 = vsel %vm1693, %v3303, 0
        %v3428 = vsel %vm1693, %v3304, 0
        %v3431 = vsel %vm1693, %v3305, 0
        %v3434 = vsel %vm1693, %v3306, 0
        %v3437 = vsel %vm1693, %v3307, 0
        %v3440 = vsel %vm1693, %v3308, 0
        %v3443 = vsel %vm1693, %v3309, 0
        %v3446 = vsel %vm1693, %v3310, 0
        %v3449 = vsel %vm1693, %v3311, 0
        %v3452 = vsel %vm1693, %v3312, 0
        %v3455 = vsel %vm1693, %v3313, 0
        %v3458 = vsel %vm1693, %v3314, 0
        %v3461 = vsel %vm1693, %v3315, 0
        %v3464 = vsel %vm1693, %v3316, 0
        %v3467 = vsel %vm1693, %v3317, 0
        %v3470 = vsel %vm1693, %v3318, 0
        %v3473 = vsel %vm1693, %v3319, 0
        %v3476 = vsel %vm1693, %v3320, 0
        %v3479 = vsel %vm1693, %v3321, 0
        %v3482 = vsel %vm1693, %v3322, 0
        %v3485 = vsel %vm1693, %v3323, 0
        %v3488 = vsel %vm1693, %v3324, 0
        %v3491 = vsel %vm1693, %v3325, 0
        %v3494 = vsel %vm1693, %v3326, 0
        %v3497 = vsel %vm1693, %v3327, 0
        %v3500 = vsel %vm1693, %v3328, 0
        %v3503 = vsel %vm1693, %v3329, 0
        %v3506 = vsel %vm1693, %v3330, 0
        %v3509 = vsel %vm1693, %v3331, 0
        %v3512 = vsel %vm1693, %v3332, 0
        %v3515 = vsel %vm1693, %v3333, 0
        %v3518 = vsel %vm1693, %v3334, 0
        %v3521 = vsel %vm1693, %v3335, 0
        %v3524 = vsel %vm1693, %v3336, 0
        %v3527 = vsel %vm1693, %v3337, 0
        %v3530 = vsel %vm1693, %v3338, 0
        %v3533 = vsel %vm1693, %v3339, 0
        %v3536 = vsel %vm1693, %v3340, 0
        %v3539 = vsel %vm1693, %v3341, 0
        %v3542 = vsel %vm1693, %v3342, 0
        %v3545 = vsel %vm1693, %v3343, 0
        %3547 = vmatprep.subr.mxu0 0.0
        %3548 = vmatpush1.msra.mxu0 0.0
        %3549 = vmatprep.subr.mxu0 0.0
        %3550 = vmatpush1.msra.mxu0 0.0
        %3551 = vmatprep.subr.mxu0 0.0
        %3552 = vmatpush1.msra.mxu0 0.0
        %3553 = vmatprep.subr.mxu0 0.0
        %3554 = vmatpush1.msra.mxu0 0.0
        %3555 = vmatprep.subr.mxu0 0.0
        %3556 = vmatpush1.msra.mxu0 0.0
        %3557 = vmatprep.subr.mxu0 0.0
        %3558 = vmatpush1.msra.mxu0 0.0
        %3559 = vmatprep.subr.mxu0 0.0
        %3560 = vmatpush1.msra.mxu0 0.0
        %3561 = vmatprep.subr.mxu0 0.0
        %3562 = vmatpush1.msra.mxu0 0.0
        %3563 = vmatprep.subr.mxu0 0.0
        %3564 = vmatpush1.msra.mxu0 0.0
        %3565 = vmatprep.subr.mxu0 0.0
        %3566 = vmatpush1.msra.mxu0 0.0
        %3567 = vmatprep.subr.mxu0 0.0
        %3568 = vmatpush1.msra.mxu0 0.0
        %3569 = vmatprep.subr.mxu0 0.0
        %3570 = vmatpush1.msra.mxu0 0.0
        %3571 = vmatprep.subr.mxu0 0.0
        %3572 = vmatpush1.msra.mxu0 %v3347
        %3573 = vmatprep.subr.mxu0 0.0
        %3574 = vmatpush1.msra.mxu0 %v3346
        %3575 = vmatprep.subr.mxu0 0.0
        %3576 = vmatpush1.msra.mxu0 %v3345
        %3577 = vmatprep.subr.mxu0 0.0
        %3578 = vmatpush1.msra.mxu0 %v3344
        %3579 = vmatprep.subr.mxu0 0.0
        %3580 = vmatpush2.msra.mxu0 0.0
        %3581 = vmatprep.subr.mxu0 0.0
        %3582 = vmatpush2.msra.mxu0 0.0
        %3583 = vmatprep.subr.mxu0 0.0
        %3584 = vmatpush2.msra.mxu0 0.0
        %3585 = vmatprep.subr.mxu0 0.0
        %3586 = vmatpush2.msra.mxu0 0.0
        %3587 = vmatprep.subr.mxu0 0.0
        %3588 = vmatpush2.msra.mxu0 0.0
        %3589 = vmatprep.subr.mxu0 0.0
        %3590 = vmatpush2.msra.mxu0 0.0
        %3591 = vmatprep.subr.mxu0 0.0
        %3592 = vmatpush2.msra.mxu0 0.0
        %3593 = vmatprep.subr.mxu0 0.0
        %3594 = vmatpush2.msra.mxu0 0.0
        %3595 = vmatprep.subr.mxu0 0.0
        %3596 = vmatpush2.msra.mxu0 0.0
        %3597 = vmatprep.subr.mxu0 0.0
        %3598 = vmatpush2.msra.mxu0 0.0
        %3599 = vmatprep.subr.mxu0 0.0
        %3600 = vmatpush2.msra.mxu0 0.0
        %3601 = vmatprep.subr.mxu0 0.0
        %3602 = vmatpush2.msra.mxu0 0.0
        %3603 = vmatprep.subr.mxu0 0.0
        %3604 = vmatpush2.msra.mxu0 0.0
        %3605 = vmatprep.subr.mxu0 0.0
        %3606 = vmatpush2.msra.mxu0 0.0
        %3607 = vmatprep.subr.mxu0 0.0
        %3608 = vmatpush2.msra.mxu0 0.0
        %3609 = vmatprep.subr.mxu0 0.0
        %3610 = vmatpush2.msra.mxu0 0.0
        %3611 = vmatprep.mubr.f32.mxu0 0.0
        %3612 = vmatmul.mubr.f32.gmra.mxu0 %v3356
        %v3613 = vpop.f32.mrf.mxu0
        %v3614 = vadd.f32 %v3353, %v3613
        %v3615 = vpop.f32.mrf.mxu0
        %3616 = vmatprep.mubr.f32.mxu0 0.0
        %3617 = vmatmul.mubr.f32.gmra.mxu0 %v3359
        %v3618 = vpop.f32.mrf.mxu0
        %v3619 = vadd.f32 %v3353, %v3618
        %v3620 = vpop.f32.mrf.mxu0
        %3621 = vmatprep.mubr.f32.mxu0 0.0
        %3622 = vmatmul.mubr.f32.gmra.mxu0 %v3362
        %v3623 = vpop.f32.mrf.mxu0
        %v3624 = vadd.f32 %v3353, %v3623
        %v3625 = vpop.f32.mrf.mxu0
        %3626 = vmatprep.mubr.f32.mxu0 0.0
        %3627 = vmatmul.mubr.f32.gmra.mxu0 %v3365
        %v3628 = vpop.f32.mrf.mxu0
        %v3629 = vadd.f32 %v3353, %v3628
        %v3630 = vpop.f32.mrf.mxu0
        %3631 = vmatprep.mubr.f32.mxu0 0.0
        %3632 = vmatmul.mubr.f32.gmra.mxu0 %v3368
        %v3633 = vpop.f32.mrf.mxu0
        %v3634 = vadd.f32 %v3353, %v3633
        %v3635 = vpop.f32.mrf.mxu0
        %3636 = vmatprep.mubr.f32.mxu0 0.0
        %3637 = vmatmul.mubr.f32.gmra.mxu0 %v3371
        %v3638 = vpop.f32.mrf.mxu0
        %v3639 = vadd.f32 %v3353, %v3638
        %v3640 = vpop.f32.mrf.mxu0
        %3641 = vmatprep.mubr.f32.mxu0 0.0
        %3642 = vmatmul.mubr.f32.gmra.mxu0 %v3374
        %v3643 = vpop.f32.mrf.mxu0
        %v3644 = vadd.f32 %v3353, %v3643
        %v3645 = vpop.f32.mrf.mxu0
        %3646 = vmatprep.mubr.f32.mxu0 0.0
        %3647 = vmatmul.mubr.f32.gmra.mxu0 %v3377
        %v3648 = vpop.f32.mrf.mxu0
        %v3649 = vadd.f32 %v3353, %v3648
        %v3650 = vpop.f32.mrf.mxu0
        %3651 = vmatprep.mubr.f32.mxu0 0.0
        %3652 = vmatmul.mubr.f32.gmra.mxu0 %v3380
        %v3653 = vpop.f32.mrf.mxu0
        %v3654 = vadd.f32 %v3353, %v3653
        %v3655 = vpop.f32.mrf.mxu0
        %3656 = vmatprep.mubr.f32.mxu0 0.0
        %3657 = vmatmul.mubr.f32.gmra.mxu0 %v3383
        %v3658 = vpop.f32.mrf.mxu0
        %v3659 = vadd.f32 %v3353, %v3658
        %v3660 = vpop.f32.mrf.mxu0
        %3661 = vmatprep.mubr.f32.mxu0 0.0
        %3662 = vmatmul.mubr.f32.gmra.mxu0 %v3386
        %v3663 = vpop.f32.mrf.mxu0
        %v3664 = vadd.f32 %v3353, %v3663
        %v3665 = vpop.f32.mrf.mxu0
        %3666 = vmatprep.mubr.f32.mxu0 0.0
        %3667 = vmatmul.mubr.f32.gmra.mxu0 %v3389
        %v3668 = vpop.f32.mrf.mxu0
        %v3669 = vadd.f32 %v3353, %v3668
        %v3670 = vpop.f32.mrf.mxu0
        %3671 = vmatprep.mubr.f32.mxu0 0.0
        %3672 = vmatmul.mubr.f32.gmra.mxu0 %v3392
        %v3673 = vpop.f32.mrf.mxu0
        %v3674 = vadd.f32 %v3353, %v3673
        %v3675 = vpop.f32.mrf.mxu0
        %3676 = vmatprep.mubr.f32.mxu0 0.0
        %3677 = vmatmul.mubr.f32.gmra.mxu0 %v3395
        %v3678 = vpop.f32.mrf.mxu0
        %v3679 = vadd.f32 %v3353, %v3678
        %v3680 = vpop.f32.mrf.mxu0
        %3681 = vmatprep.mubr.f32.mxu0 0.0
        %3682 = vmatmul.mubr.f32.gmra.mxu0 %v3398
        %v3683 = vpop.f32.mrf.mxu0
        %v3684 = vadd.f32 %v3353, %v3683
        %v3685 = vpop.f32.mrf.mxu0
        %3686 = vmatprep.mubr.f32.mxu0 0.0
        %3687 = vmatmul.mubr.f32.gmra.mxu0 %v3401
        %v3688 = vpop.f32.mrf.mxu0
        %v3689 = vadd.f32 %v3353, %v3688
        %v3690 = vpop.f32.mrf.mxu0
        %3691 = vmatprep.mubr.f32.mxu0 0.0
        %3692 = vmatmul.mubr.f32.gmra.mxu0 %v3404
        %v3693 = vpop.f32.mrf.mxu0
        %v3694 = vadd.f32 %v3353, %v3693
        %v3695 = vpop.f32.mrf.mxu0
        %3696 = vmatprep.mubr.f32.mxu0 0.0
        %3697 = vmatmul.mubr.f32.gmra.mxu0 %v3407
        %v3698 = vpop.f32.mrf.mxu0
        %v3699 = vadd.f32 %v3353, %v3698
        %v3700 = vpop.f32.mrf.mxu0
        %3701 = vmatprep.mubr.f32.mxu0 0.0
        %3702 = vmatmul.mubr.f32.gmra.mxu0 %v3410
        %v3703 = vpop.f32.mrf.mxu0
        %v3704 = vadd.f32 %v3353, %v3703
        %v3705 = vpop.f32.mrf.mxu0
        %3706 = vmatprep.mubr.f32.mxu0 0.0
        %3707 = vmatmul.mubr.f32.gmra.mxu0 %v3413
        %v3708 = vpop.f32.mrf.mxu0
        %v3709 = vadd.f32 %v3353, %v3708
        %v3710 = vpop.f32.mrf.mxu0
        %3711 = vmatprep.mubr.f32.mxu0 0.0
        %3712 = vmatmul.mubr.f32.gmra.mxu0 %v3416
        %v3713 = vpop.f32.mrf.mxu0
        %v3714 = vadd.f32 %v3353, %v3713
        %v3715 = vpop.f32.mrf.mxu0
        %3716 = vmatprep.mubr.f32.mxu0 0.0
        %3717 = vmatmul.mubr.f32.gmra.mxu0 %v3419
        %v3718 = vpop.f32.mrf.mxu0
        %v3719 = vadd.f32 %v3353, %v3718
        %v3720 = vpop.f32.mrf.mxu0
        %3721 = vmatprep.mubr.f32.mxu0 0.0
        %3722 = vmatmul.mubr.f32.gmra.mxu0 %v3422
        %v3723 = vpop.f32.mrf.mxu0
        %v3724 = vadd.f32 %v3353, %v3723
        %v3725 = vpop.f32.mrf.mxu0
        %3726 = vmatprep.mubr.f32.mxu0 0.0
        %3727 = vmatmul.mubr.f32.gmra.mxu0 %v3425
        %v3728 = vpop.f32.mrf.mxu0
        %v3729 = vadd.f32 %v3353, %v3728
        %v3730 = vpop.f32.mrf.mxu0
        %3731 = vmatprep.mubr.f32.mxu0 0.0
        %3732 = vmatmul.mubr.f32.gmra.mxu0 %v3428
        %v3733 = vpop.f32.mrf.mxu0
        %v3734 = vadd.f32 %v3353, %v3733
        %v3735 = vpop.f32.mrf.mxu0
        %3736 = vmatprep.mubr.f32.mxu0 0.0
        %3737 = vmatmul.mubr.f32.gmra.mxu0 %v3431
        %v3738 = vpop.f32.mrf.mxu0
        %v3739 = vadd.f32 %v3353, %v3738
        %v3740 = vpop.f32.mrf.mxu0
        %3741 = vmatprep.mubr.f32.mxu0 0.0
        %3742 = vmatmul.mubr.f32.gmra.mxu0 %v3434
        %v3743 = vpop.f32.mrf.mxu0
        %v3744 = vadd.f32 %v3353, %v3743
        %v3745 = vpop.f32.mrf.mxu0
        %3746 = vmatprep.mubr.f32.mxu0 0.0
        %3747 = vmatmul.mubr.f32.gmra.mxu0 %v3437
        %v3748 = vpop.f32.mrf.mxu0
        %v3749 = vadd.f32 %v3353, %v3748
        %v3750 = vpop.f32.mrf.mxu0
        %3751 = vmatprep.mubr.f32.mxu0 0.0
        %3752 = vmatmul.mubr.f32.gmra.mxu0 %v3440
        %v3753 = vpop.f32.mrf.mxu0
        %v3754 = vadd.f32 %v3353, %v3753
        %v3755 = vpop.f32.mrf.mxu0
        %3756 = vmatprep.mubr.f32.mxu0 0.0
        %3757 = vmatmul.mubr.f32.gmra.mxu0 %v3443
        %v3758 = vpop.f32.mrf.mxu0
        %v3759 = vadd.f32 %v3353, %v3758
        %v3760 = vpop.f32.mrf.mxu0
        %3761 = vmatprep.mubr.f32.mxu0 0.0
        %3762 = vmatmul.mubr.f32.gmra.mxu0 %v3446
        %v3763 = vpop.f32.mrf.mxu0
        %v3764 = vadd.f32 %v3353, %v3763
        %v3765 = vpop.f32.mrf.mxu0
        %3766 = vmatprep.mubr.f32.mxu0 0.0
        %3767 = vmatmul.mubr.f32.gmra.mxu0 %v3449
        %v3768 = vpop.f32.mrf.mxu0
        %v3769 = vadd.f32 %v3353, %v3768
        %v3770 = vpop.f32.mrf.mxu0
        %3771 = vmatprep.mubr.f32.mxu0 0.0
        %3772 = vmatmul.mubr.f32.gmra.mxu0 %v3452
        %v3773 = vpop.f32.mrf.mxu0
        %v3774 = vadd.f32 %v3353, %v3773
        %v3775 = vpop.f32.mrf.mxu0
        %3776 = vmatprep.mubr.f32.mxu0 0.0
        %3777 = vmatmul.mubr.f32.gmra.mxu0 %v3455
        %v3778 = vpop.f32.mrf.mxu0
        %v3779 = vadd.f32 %v3353, %v3778
        %v3780 = vpop.f32.mrf.mxu0
        %3781 = vmatprep.mubr.f32.mxu0 0.0
        %3782 = vmatmul.mubr.f32.gmra.mxu0 %v3458
        %v3783 = vpop.f32.mrf.mxu0
        %v3784 = vadd.f32 %v3353, %v3783
        %v3785 = vpop.f32.mrf.mxu0
        %3786 = vmatprep.mubr.f32.mxu0 0.0
        %3787 = vmatmul.mubr.f32.gmra.mxu0 %v3461
        %v3788 = vpop.f32.mrf.mxu0
        %v3789 = vadd.f32 %v3353, %v3788
        %v3790 = vpop.f32.mrf.mxu0
        %3791 = vmatprep.mubr.f32.mxu0 0.0
        %3792 = vmatmul.mubr.f32.gmra.mxu0 %v3464
        %v3793 = vpop.f32.mrf.mxu0
        %v3794 = vadd.f32 %v3353, %v3793
        %v3795 = vpop.f32.mrf.mxu0
        %3796 = vmatprep.mubr.f32.mxu0 0.0
        %3797 = vmatmul.mubr.f32.gmra.mxu0 %v3467
        %v3798 = vpop.f32.mrf.mxu0
        %v3799 = vadd.f32 %v3353, %v3798
        %v3800 = vpop.f32.mrf.mxu0
        %3801 = vmatprep.mubr.f32.mxu0 0.0
        %3802 = vmatmul.mubr.f32.gmra.mxu0 %v3470
        %v3803 = vpop.f32.mrf.mxu0
        %v3804 = vadd.f32 %v3353, %v3803
        %v3805 = vpop.f32.mrf.mxu0
        %3806 = vmatprep.mubr.f32.mxu0 0.0
        %3807 = vmatmul.mubr.f32.gmra.mxu0 %v3473
        %v3808 = vpop.f32.mrf.mxu0
        %v3809 = vadd.f32 %v3353, %v3808
        %v3810 = vpop.f32.mrf.mxu0
        %3811 = vmatprep.mubr.f32.mxu0 0.0
        %3812 = vmatmul.mubr.f32.gmra.mxu0 %v3476
        %v3813 = vpop.f32.mrf.mxu0
        %v3814 = vadd.f32 %v3353, %v3813
        %v3815 = vpop.f32.mrf.mxu0
        %3816 = vmatprep.mubr.f32.mxu0 0.0
        %3817 = vmatmul.mubr.f32.gmra.mxu0 %v3479
        %v3818 = vpop.f32.mrf.mxu0
        %v3819 = vadd.f32 %v3353, %v3818
        %v3820 = vpop.f32.mrf.mxu0
        %3821 = vmatprep.mubr.f32.mxu0 0.0
        %3822 = vmatmul.mubr.f32.gmra.mxu0 %v3482
        %v3823 = vpop.f32.mrf.mxu0
        %v3824 = vadd.f32 %v3353, %v3823
        %v3825 = vpop.f32.mrf.mxu0
        %3826 = vmatprep.mubr.f32.mxu0 0.0
        %3827 = vmatmul.mubr.f32.gmra.mxu0 %v3485
        %v3828 = vpop.f32.mrf.mxu0
        %v3829 = vadd.f32 %v3353, %v3828
        %v3830 = vpop.f32.mrf.mxu0
        %3831 = vmatprep.mubr.f32.mxu0 0.0
        %3832 = vmatmul.mubr.f32.gmra.mxu0 %v3488
        %v3833 = vpop.f32.mrf.mxu0
        %v3834 = vadd.f32 %v3353, %v3833
        %v3835 = vpop.f32.mrf.mxu0
        %3836 = vmatprep.mubr.f32.mxu0 0.0
        %3837 = vmatmul.mubr.f32.gmra.mxu0 %v3491
        %v3838 = vpop.f32.mrf.mxu0
        %v3839 = vadd.f32 %v3353, %v3838
        %v3840 = vpop.f32.mrf.mxu0
        %3841 = vmatprep.mubr.f32.mxu0 0.0
        %3842 = vmatmul.mubr.f32.gmra.mxu0 %v3494
        %v3843 = vpop.f32.mrf.mxu0
        %v3844 = vadd.f32 %v3353, %v3843
        %v3845 = vpop.f32.mrf.mxu0
        %3846 = vmatprep.mubr.f32.mxu0 0.0
        %3847 = vmatmul.mubr.f32.gmra.mxu0 %v3497
        %v3848 = vpop.f32.mrf.mxu0
        %v3849 = vadd.f32 %v3353, %v3848
        %v3850 = vpop.f32.mrf.mxu0
        %3851 = vmatprep.mubr.f32.mxu0 0.0
        %3852 = vmatmul.mubr.f32.gmra.mxu0 %v3500
        %v3853 = vpop.f32.mrf.mxu0
        %v3854 = vadd.f32 %v3353, %v3853
        %v3855 = vpop.f32.mrf.mxu0
        %3856 = vmatprep.mubr.f32.mxu0 0.0
        %3857 = vmatmul.mubr.f32.gmra.mxu0 %v3503
        %v3858 = vpop.f32.mrf.mxu0
        %v3859 = vadd.f32 %v3353, %v3858
        %v3860 = vpop.f32.mrf.mxu0
        %3861 = vmatprep.mubr.f32.mxu0 0.0
        %3862 = vmatmul.mubr.f32.gmra.mxu0 %v3506
        %v3863 = vpop.f32.mrf.mxu0
        %v3864 = vadd.f32 %v3353, %v3863
        %v3865 = vpop.f32.mrf.mxu0
        %3866 = vmatprep.mubr.f32.mxu0 0.0
        %3867 = vmatmul.mubr.f32.gmra.mxu0 %v3509
        %v3868 = vpop.f32.mrf.mxu0
        %v3869 = vadd.f32 %v3353, %v3868
        %v3870 = vpop.f32.mrf.mxu0
        %3871 = vmatprep.mubr.f32.mxu0 0.0
        %3872 = vmatmul.mubr.f32.gmra.mxu0 %v3512
        %v3873 = vpop.f32.mrf.mxu0
        %v3874 = vadd.f32 %v3353, %v3873
        %v3875 = vpop.f32.mrf.mxu0
        %3876 = vmatprep.mubr.f32.mxu0 0.0
        %3877 = vmatmul.mubr.f32.gmra.mxu0 %v3515
        %v3878 = vpop.f32.mrf.mxu0
        %v3879 = vadd.f32 %v3353, %v3878
        %v3880 = vpop.f32.mrf.mxu0
        %3881 = vmatprep.mubr.f32.mxu0 0.0
        %3882 = vmatmul.mubr.f32.gmra.mxu0 %v3518
        %v3883 = vpop.f32.mrf.mxu0
        %v3884 = vadd.f32 %v3353, %v3883
        %v3885 = vpop.f32.mrf.mxu0
        %3886 = vmatprep.mubr.f32.mxu0 0.0
        %3887 = vmatmul.mubr.f32.gmra.mxu0 %v3521
        %v3888 = vpop.f32.mrf.mxu0
        %v3889 = vadd.f32 %v3353, %v3888
        %v3890 = vpop.f32.mrf.mxu0
        %3891 = vmatprep.mubr.f32.mxu0 0.0
        %3892 = vmatmul.mubr.f32.gmra.mxu0 %v3524
        %v3893 = vpop.f32.mrf.mxu0
        %v3894 = vadd.f32 %v3353, %v3893
        %v3895 = vpop.f32.mrf.mxu0
        %3896 = vmatprep.mubr.f32.mxu0 0.0
        %3897 = vmatmul.mubr.f32.gmra.mxu0 %v3527
        %v3898 = vpop.f32.mrf.mxu0
        %v3899 = vadd.f32 %v3353, %v3898
        %v3900 = vpop.f32.mrf.mxu0
        %3901 = vmatprep.mubr.f32.mxu0 0.0
        %3902 = vmatmul.mubr.f32.gmra.mxu0 %v3530
        %v3903 = vpop.f32.mrf.mxu0
        %v3904 = vadd.f32 %v3353, %v3903
        %v3905 = vpop.f32.mrf.mxu0
        %3906 = vmatprep.mubr.f32.mxu0 0.0
        %3907 = vmatmul.mubr.f32.gmra.mxu0 %v3533
        %v3908 = vpop.f32.mrf.mxu0
        %v3909 = vadd.f32 %v3353, %v3908
        %v3910 = vpop.f32.mrf.mxu0
        %3911 = vmatprep.mubr.f32.mxu0 0.0
        %3912 = vmatmul.mubr.f32.gmra.mxu0 %v3536
        %v3913 = vpop.f32.mrf.mxu0
        %v3914 = vadd.f32 %v3353, %v3913
        %v3915 = vpop.f32.mrf.mxu0
        %3916 = vmatprep.mubr.f32.mxu0 0.0
        %3917 = vmatmul.mubr.f32.gmra.mxu0 %v3539
        %v3918 = vpop.f32.mrf.mxu0
        %v3919 = vadd.f32 %v3353, %v3918
        %v3920 = vpop.f32.mrf.mxu0
        %3921 = vmatprep.mubr.f32.mxu0 0.0
        %3922 = vmatmul.mubr.f32.gmra.mxu0 %v3542
        %v3923 = vpop.f32.mrf.mxu0
        %v3924 = vadd.f32 %v3353, %v3923
        %v3925 = vpop.f32.mrf.mxu0
        %3926 = vmatprep.mubr.f32.mxu0 0.0
        %3927 = vmatmul.mubr.f32.gmra.mxu0 %v3545
        %v3928 = vpop.f32.mrf.mxu0
        %v3929 = vadd.f32 %v3353, %v3928
        %v3930 = vpop.f32.mrf.mxu0
        %3931 = vdwg.mxu0
        %v3932 = vmax.f32 %v3614, 0.0
        %v3933 = vmax.f32 %v3619, 0.0
        %v3934 = vmax.f32 %v3624, 0.0
        %v3935 = vmax.f32 %v3629, 0.0
        %v3936 = vmax.f32 %v3634, 0.0
        %v3937 = vmax.f32 %v3639, 0.0
        %v3938 = vmax.f32 %v3644, 0.0
        %v3939 = vmax.f32 %v3649, 0.0
        %v3940 = vmax.f32 %v3654, 0.0
        %v3941 = vmax.f32 %v3659, 0.0
        %v3942 = vmax.f32 %v3664, 0.0
        %v3943 = vmax.f32 %v3669, 0.0
        %v3944 = vmax.f32 %v3674, 0.0
        %v3945 = vmax.f32 %v3679, 0.0
        %v3946 = vmax.f32 %v3684, 0.0
        %v3947 = vmax.f32 %v3689, 0.0
        %v3948 = vmax.f32 %v3694, 0.0
        %v3949 = vmax.f32 %v3699, 0.0
        %v3950 = vmax.f32 %v3704, 0.0
        %v3951 = vmax.f32 %v3709, 0.0
        %v3952 = vmax.f32 %v3714, 0.0
        %v3953 = vmax.f32 %v3719, 0.0
        %v3954 = vmax.f32 %v3724, 0.0
        %v3955 = vmax.f32 %v3729, 0.0
        %v3956 = vmax.f32 %v3734, 0.0
        %v3957 = vmax.f32 %v3739, 0.0
        %v3958 = vmax.f32 %v3744, 0.0
        %v3959 = vmax.f32 %v3749, 0.0
        %v3960 = vmax.f32 %v3754, 0.0
        %v3961 = vmax.f32 %v3759, 0.0
        %v3962 = vmax.f32 %v3764, 0.0
        %v3963 = vmax.f32 %v3769, 0.0
        %v3964 = vmax.f32 %v3774, 0.0
        %v3965 = vmax.f32 %v3779, 0.0
        %v3966 = vmax.f32 %v3784, 0.0
        %v3967 = vmax.f32 %v3789, 0.0
        %v3968 = vmax.f32 %v3794, 0.0
        %v3969 = vmax.f32 %v3799, 0.0
        %v3970 = vmax.f32 %v3804, 0.0
        %v3971 = vmax.f32 %v3809, 0.0
        %v3972 = vmax.f32 %v3814, 0.0
        %v3973 = vmax.f32 %v3819, 0.0
        %v3974 = vmax.f32 %v3824, 0.0
        %v3975 = vmax.f32 %v3829, 0.0
        %v3976 = vmax.f32 %v3834, 0.0
        %v3977 = vmax.f32 %v3839, 0.0
        %v3978 = vmax.f32 %v3844, 0.0
        %v3979 = vmax.f32 %v3849, 0.0
        %v3980 = vmax.f32 %v3854, 0.0
        %v3981 = vmax.f32 %v3859, 0.0
        %v3982 = vmax.f32 %v3864, 0.0
        %v3983 = vmax.f32 %v3869, 0.0
        %v3984 = vmax.f32 %v3874, 0.0
        %v3985 = vmax.f32 %v3879, 0.0
        %v3986 = vmax.f32 %v3884, 0.0
        %v3987 = vmax.f32 %v3889, 0.0
        %v3988 = vmax.f32 %v3894, 0.0
        %v3989 = vmax.f32 %v3899, 0.0
        %v3990 = vmax.f32 %v3904, 0.0
        %v3991 = vmax.f32 %v3909, 0.0
        %v3992 = vmax.f32 %v3914, 0.0
        %v3993 = vmax.f32 %v3919, 0.0
        %v3994 = vmax.f32 %v3924, 0.0
        %v3995 = vmax.f32 %v3929, 0.0
        %v3996 = vsel %vm2335, %v3932, -inf
        %v3997 = vsel %vm2335, %v3933, -inf
        %v3998 = vmax.f32 %v3996, %v3997
        %v3999 = vrot.slane %v3998, 4
        %v4000 = vmax.f32 %v3998, %v3999
        %v4001 = vrot.slane %v4000, 2
        %v4002 = vmax.f32 %v4000, %v4001
        %v4003 = vrot.slane %v4002, 1
        %v4004 = vmax.f32 %v4002, %v4003
        %v4005 = vsel %vm2335, %v3934, -inf
        %v4006 = vsel %vm2335, %v3935, -inf
        %v4007 = vmax.f32 %v4005, %v4006
        %v4008 = vrot.slane %v4007, 4
        %v4009 = vmax.f32 %v4007, %v4008
        %v4010 = vrot.slane %v4009, 2
        %v4011 = vmax.f32 %v4009, %v4010
        %v4012 = vrot.slane %v4011, 1
        %v4013 = vmax.f32 %v4011, %v4012
        %v4014 = vsel %vm2335, %v3936, -inf
        %v4015 = vsel %vm2335, %v3937, -inf
        %v4016 = vmax.f32 %v4014, %v4015
        %v4017 = vrot.slane %v4016, 4
        %v4018 = vmax.f32 %v4016, %v4017
        %v4019 = vrot.slane %v4018, 2
        %v4020 = vmax.f32 %v4018, %v4019
        %v4021 = vrot.slane %v4020, 1
        %v4022 = vmax.f32 %v4020, %v4021
        %v4023 = vsel %vm2335, %v3938, -inf
        %v4024 = vsel %vm2335, %v3939, -inf
        %v4025 = vmax.f32 %v4023, %v4024
        %v4026 = vrot.slane %v4025, 4
        %v4027 = vmax.f32 %v4025, %v4026
        %v4028 = vrot.slane %v4027, 2
        %v4029 = vmax.f32 %v4027, %v4028
        %v4030 = vrot.slane %v4029, 1
        %v4031 = vmax.f32 %v4029, %v4030
        %v4032 = vsel %vm2335, %v3940, -inf
        %v4033 = vsel %vm2335, %v3941, -inf
        %v4034 = vmax.f32 %v4032, %v4033
        %v4035 = vrot.slane %v4034, 4
        %v4036 = vmax.f32 %v4034, %v4035
        %v4037 = vrot.slane %v4036, 2
        %v4038 = vmax.f32 %v4036, %v4037
        %v4039 = vrot.slane %v4038, 1
        %v4040 = vmax.f32 %v4038, %v4039
        %v4041 = vsel %vm2335, %v3942, -inf
        %v4042 = vsel %vm2335, %v3943, -inf
        %v4043 = vmax.f32 %v4041, %v4042
        %v4044 = vrot.slane %v4043, 4
        %v4045 = vmax.f32 %v4043, %v4044
        %v4046 = vrot.slane %v4045, 2
        %v4047 = vmax.f32 %v4045, %v4046
        %v4048 = vrot.slane %v4047, 1
        %v4049 = vmax.f32 %v4047, %v4048
        %v4050 = vsel %vm2335, %v3944, -inf
        %v4051 = vsel %vm2335, %v3945, -inf
        %v4052 = vmax.f32 %v4050, %v4051
        %v4053 = vrot.slane %v4052, 4
        %v4054 = vmax.f32 %v4052, %v4053
        %v4055 = vrot.slane %v4054, 2
        %v4056 = vmax.f32 %v4054, %v4055
        %v4057 = vrot.slane %v4056, 1
        %v4058 = vmax.f32 %v4056, %v4057
        %v4059 = vsel %vm2335, %v3946, -inf
        %v4060 = vsel %vm2335, %v3947, -inf
        %v4061 = vmax.f32 %v4059, %v4060
        %v4062 = vrot.slane %v4061, 4
        %v4063 = vmax.f32 %v4061, %v4062
        %v4064 = vrot.slane %v4063, 2
        %v4065 = vmax.f32 %v4063, %v4064
        %v4066 = vrot.slane %v4065, 1
        %v4067 = vmax.f32 %v4065, %v4066
        %v4068 = vsel %vm2335, %v3948, -inf
        %v4069 = vsel %vm2335, %v3949, -inf
        %v4070 = vmax.f32 %v4068, %v4069
        %v4071 = vrot.slane %v4070, 4
        %v4072 = vmax.f32 %v4070, %v4071
        %v4073 = vrot.slane %v4072, 2
        %v4074 = vmax.f32 %v4072, %v4073
        %v4075 = vrot.slane %v4074, 1
        %v4076 = vmax.f32 %v4074, %v4075
        %v4077 = vsel %vm2335, %v3950, -inf
        %v4078 = vsel %vm2335, %v3951, -inf
        %v4079 = vmax.f32 %v4077, %v4078
        %v4080 = vrot.slane %v4079, 4
        %v4081 = vmax.f32 %v4079, %v4080
        %v4082 = vrot.slane %v4081, 2
        %v4083 = vmax.f32 %v4081, %v4082
        %v4084 = vrot.slane %v4083, 1
        %v4085 = vmax.f32 %v4083, %v4084
        %v4086 = vsel %vm2335, %v3952, -inf
        %v4087 = vsel %vm2335, %v3953, -inf
        %v4088 = vmax.f32 %v4086, %v4087
        %v4089 = vrot.slane %v4088, 4
        %v4090 = vmax.f32 %v4088, %v4089
        %v4091 = vrot.slane %v4090, 2
        %v4092 = vmax.f32 %v4090, %v4091
        %v4093 = vrot.slane %v4092, 1
        %v4094 = vmax.f32 %v4092, %v4093
        %v4095 = vsel %vm2335, %v3954, -inf
        %v4096 = vsel %vm2335, %v3955, -inf
        %v4097 = vmax.f32 %v4095, %v4096
        %v4098 = vrot.slane %v4097, 4
        %v4099 = vmax.f32 %v4097, %v4098
        %v4100 = vrot.slane %v4099, 2
        %v4101 = vmax.f32 %v4099, %v4100
        %v4102 = vrot.slane %v4101, 1
        %v4103 = vmax.f32 %v4101, %v4102
        %v4104 = vsel %vm2335, %v3956, -inf
        %v4105 = vsel %vm2335, %v3957, -inf
        %v4106 = vmax.f32 %v4104, %v4105
        %v4107 = vrot.slane %v4106, 4
        %v4108 = vmax.f32 %v4106, %v4107
        %v4109 = vrot.slane %v4108, 2
        %v4110 = vmax.f32 %v4108, %v4109
        %v4111 = vrot.slane %v4110, 1
        %v4112 = vmax.f32 %v4110, %v4111
        %v4113 = vsel %vm2335, %v3958, -inf
        %v4114 = vsel %vm2335, %v3959, -inf
        %v4115 = vmax.f32 %v4113, %v4114
        %v4116 = vrot.slane %v4115, 4
        %v4117 = vmax.f32 %v4115, %v4116
        %v4118 = vrot.slane %v4117, 2
        %v4119 = vmax.f32 %v4117, %v4118
        %v4120 = vrot.slane %v4119, 1
        %v4121 = vmax.f32 %v4119, %v4120
        %v4122 = vsel %vm2335, %v3960, -inf
        %v4123 = vsel %vm2335, %v3961, -inf
        %v4124 = vmax.f32 %v4122, %v4123
        %v4125 = vrot.slane %v4124, 4
        %v4126 = vmax.f32 %v4124, %v4125
        %v4127 = vrot.slane %v4126, 2
        %v4128 = vmax.f32 %v4126, %v4127
        %v4129 = vrot.slane %v4128, 1
        %v4130 = vmax.f32 %v4128, %v4129
        %v4131 = vsel %vm2335, %v3962, -inf
        %v4132 = vsel %vm2335, %v3963, -inf
        %v4133 = vmax.f32 %v4131, %v4132
        %v4134 = vrot.slane %v4133, 4
        %v4135 = vmax.f32 %v4133, %v4134
        %v4136 = vrot.slane %v4135, 2
        %v4137 = vmax.f32 %v4135, %v4136
        %v4138 = vrot.slane %v4137, 1
        %v4139 = vmax.f32 %v4137, %v4138
        %v4140 = vsel %vm2335, %v3964, -inf
        %v4141 = vsel %vm2335, %v3965, -inf
        %v4142 = vmax.f32 %v4140, %v4141
        %v4143 = vrot.slane %v4142, 4
        %v4144 = vmax.f32 %v4142, %v4143
        %v4145 = vrot.slane %v4144, 2
        %v4146 = vmax.f32 %v4144, %v4145
        %v4147 = vrot.slane %v4146, 1
        %v4148 = vmax.f32 %v4146, %v4147
        %v4149 = vsel %vm2335, %v3966, -inf
        %v4150 = vsel %vm2335, %v3967, -inf
        %v4151 = vmax.f32 %v4149, %v4150
        %v4152 = vrot.slane %v4151, 4
        %v4153 = vmax.f32 %v4151, %v4152
        %v4154 = vrot.slane %v4153, 2
        %v4155 = vmax.f32 %v4153, %v4154
        %v4156 = vrot.slane %v4155, 1
        %v4157 = vmax.f32 %v4155, %v4156
        %v4158 = vsel %vm2335, %v3968, -inf
        %v4159 = vsel %vm2335, %v3969, -inf
        %v4160 = vmax.f32 %v4158, %v4159
        %v4161 = vrot.slane %v4160, 4
        %v4162 = vmax.f32 %v4160, %v4161
        %v4163 = vrot.slane %v4162, 2
        %v4164 = vmax.f32 %v4162, %v4163
        %v4165 = vrot.slane %v4164, 1
        %v4166 = vmax.f32 %v4164, %v4165
        %v4167 = vsel %vm2335, %v3970, -inf
        %v4168 = vsel %vm2335, %v3971, -inf
        %v4169 = vmax.f32 %v4167, %v4168
        %v4170 = vrot.slane %v4169, 4
        %v4171 = vmax.f32 %v4169, %v4170
        %v4172 = vrot.slane %v4171, 2
        %v4173 = vmax.f32 %v4171, %v4172
        %v4174 = vrot.slane %v4173, 1
        %v4175 = vmax.f32 %v4173, %v4174
        %v4176 = vsel %vm2335, %v3972, -inf
        %v4177 = vsel %vm2335, %v3973, -inf
        %v4178 = vmax.f32 %v4176, %v4177
        %v4179 = vrot.slane %v4178, 4
        %v4180 = vmax.f32 %v4178, %v4179
        %v4181 = vrot.slane %v4180, 2
        %v4182 = vmax.f32 %v4180, %v4181
        %v4183 = vrot.slane %v4182, 1
        %v4184 = vmax.f32 %v4182, %v4183
        %v4185 = vsel %vm2335, %v3974, -inf
        %v4186 = vsel %vm2335, %v3975, -inf
        %v4187 = vmax.f32 %v4185, %v4186
        %v4188 = vrot.slane %v4187, 4
        %v4189 = vmax.f32 %v4187, %v4188
        %v4190 = vrot.slane %v4189, 2
        %v4191 = vmax.f32 %v4189, %v4190
        %v4192 = vrot.slane %v4191, 1
        %v4193 = vmax.f32 %v4191, %v4192
        %v4194 = vsel %vm2335, %v3976, -inf
        %v4195 = vsel %vm2335, %v3977, -inf
        %v4196 = vmax.f32 %v4194, %v4195
        %v4197 = vrot.slane %v4196, 4
        %v4198 = vmax.f32 %v4196, %v4197
        %v4199 = vrot.slane %v4198, 2
        %v4200 = vmax.f32 %v4198, %v4199
        %v4201 = vrot.slane %v4200, 1
        %v4202 = vmax.f32 %v4200, %v4201
        %v4203 = vsel %vm2335, %v3978, -inf
        %v4204 = vsel %vm2335, %v3979, -inf
        %v4205 = vmax.f32 %v4203, %v4204
        %v4206 = vrot.slane %v4205, 4
        %v4207 = vmax.f32 %v4205, %v4206
        %v4208 = vrot.slane %v4207, 2
        %v4209 = vmax.f32 %v4207, %v4208
        %v4210 = vrot.slane %v4209, 1
        %v4211 = vmax.f32 %v4209, %v4210
        %v4212 = vsel %vm2335, %v3980, -inf
        %v4213 = vsel %vm2335, %v3981, -inf
        %v4214 = vmax.f32 %v4212, %v4213
        %v4215 = vrot.slane %v4214, 4
        %v4216 = vmax.f32 %v4214, %v4215
        %v4217 = vrot.slane %v4216, 2
        %v4218 = vmax.f32 %v4216, %v4217
        %v4219 = vrot.slane %v4218, 1
        %v4220 = vmax.f32 %v4218, %v4219
        %v4221 = vsel %vm2335, %v3982, -inf
        %v4222 = vsel %vm2335, %v3983, -inf
        %v4223 = vmax.f32 %v4221, %v4222
        %v4224 = vrot.slane %v4223, 4
        %v4225 = vmax.f32 %v4223, %v4224
        %v4226 = vrot.slane %v4225, 2
        %v4227 = vmax.f32 %v4225, %v4226
        %v4228 = vrot.slane %v4227, 1
        %v4229 = vmax.f32 %v4227, %v4228
        %v4230 = vsel %vm2335, %v3984, -inf
        %v4231 = vsel %vm2335, %v3985, -inf
        %v4232 = vmax.f32 %v4230, %v4231
        %v4233 = vrot.slane %v4232, 4
        %v4234 = vmax.f32 %v4232, %v4233
        %v4235 = vrot.slane %v4234, 2
        %v4236 = vmax.f32 %v4234, %v4235
        %v4237 = vrot.slane %v4236, 1
        %v4238 = vmax.f32 %v4236, %v4237
        %v4239 = vsel %vm2335, %v3986, -inf
        %v4240 = vsel %vm2335, %v3987, -inf
        %v4241 = vmax.f32 %v4239, %v4240
        %v4242 = vrot.slane %v4241, 4
        %v4243 = vmax.f32 %v4241, %v4242
        %v4244 = vrot.slane %v4243, 2
        %v4245 = vmax.f32 %v4243, %v4244
        %v4246 = vrot.slane %v4245, 1
        %v4247 = vmax.f32 %v4245, %v4246
        %v4248 = vsel %vm2335, %v3988, -inf
        %v4249 = vsel %vm2335, %v3989, -inf
        %v4250 = vmax.f32 %v4248, %v4249
        %v4251 = vrot.slane %v4250, 4
        %v4252 = vmax.f32 %v4250, %v4251
        %v4253 = vrot.slane %v4252, 2
        %v4254 = vmax.f32 %v4252, %v4253
        %v4255 = vrot.slane %v4254, 1
        %v4256 = vmax.f32 %v4254, %v4255
        %v4257 = vsel %vm2335, %v3990, -inf
        %v4258 = vsel %vm2335, %v3991, -inf
        %v4259 = vmax.f32 %v4257, %v4258
        %v4260 = vrot.slane %v4259, 4
        %v4261 = vmax.f32 %v4259, %v4260
        %v4262 = vrot.slane %v4261, 2
        %v4263 = vmax.f32 %v4261, %v4262
        %v4264 = vrot.slane %v4263, 1
        %v4265 = vmax.f32 %v4263, %v4264
        %v4266 = vsel %vm2335, %v3992, -inf
        %v4267 = vsel %vm2335, %v3993, -inf
        %v4268 = vmax.f32 %v4266, %v4267
        %v4269 = vrot.slane %v4268, 4
        %v4270 = vmax.f32 %v4268, %v4269
        %v4271 = vrot.slane %v4270, 2
        %v4272 = vmax.f32 %v4270, %v4271
        %v4273 = vrot.slane %v4272, 1
        %v4274 = vmax.f32 %v4272, %v4273
        %v4275 = vsel %vm2335, %v3994, -inf
        %v4276 = vsel %vm2335, %v3995, -inf
        %v4277 = vmax.f32 %v4275, %v4276
        %v4278 = vrot.slane %v4277, 4
        %v4279 = vmax.f32 %v4277, %v4278
        %v4280 = vrot.slane %v4279, 2
        %v4281 = vmax.f32 %v4279, %v4280
        %v4282 = vrot.slane %v4281, 1
        %v4283 = vmax.f32 %v4281, %v4282
        %v4284 = vld [vmem:[%s12] sm:$0xff]
        %v4285 = vld [vmem:[%s12 + $0x8] sm:$0xff]
        %v4286 = vld [vmem:[%s12 + $0x10] sm:$0xff]
        %v4287 = vld [vmem:[%s12 + $0x18] sm:$0xff]
        %v4288 = vld [vmem:[%s13] sm:$0xff]
        %v4289 = vld [vmem:[%s13 + $0x8] sm:$0xff]
        %v4290 = vld [vmem:[%s13 + $0x10] sm:$0xff]
        %v4291 = vld [vmem:[%s13 + $0x18] sm:$0xff]
        %v4292 = vld [vmem:[%s13 + $0x20] sm:$0xff]
        %v4293 = vld [vmem:[%s13 + $0x28] sm:$0xff]
        %v4294 = vld [vmem:[%s13 + $0x30] sm:$0xff]
        %v4295 = vld [vmem:[%s13 + $0x38] sm:$0xff]
        %vm4328 = vcmask 1041409
        %v4329 = vsel %vm4328, %v2353, %v2344
        %vm4330 = vcmask 1042434
        %v4331 = vsel %vm4330, %v2362, %v4329
        %vm4332 = vcmask 1043459
        %v4333 = vsel %vm4332, %v2371, %v4331
        %vm4334 = vcmask 1044484
        %v4335 = vsel %vm4334, %v2380, %v4333
        %vm4336 = vcmask 1045509
        %v4337 = vsel %vm4336, %v2389, %v4335
        %vm4338 = vcmask 1046534
        %v4339 = vsel %vm4338, %v2398, %v4337
        %vm4340 = vcmask 1047559
        %v4341 = vsel %vm4340, %v2407, %v4339
        %v4342 = vsel %vm4328, %v2425, %v2416
        %v4343 = vsel %vm4330, %v2434, %v4342
        %v4344 = vsel %vm4332, %v2443, %v4343
        %v4345 = vsel %vm4334, %v2452, %v4344
        %v4346 = vsel %vm4336, %v2461, %v4345
        %v4347 = vsel %vm4338, %v2470, %v4346
        %v4348 = vsel %vm4340, %v2479, %v4347
        %v4349 = vsel %vm4328, %v2497, %v2488
        %v4350 = vsel %vm4330, %v2506, %v4349
        %v4351 = vsel %vm4332, %v2515, %v4350
        %v4352 = vsel %vm4334, %v2524, %v4351
        %v4353 = vsel %vm4336, %v2533, %v4352
        %v4354 = vsel %vm4338, %v2542, %v4353
        %v4355 = vsel %vm4340, %v2551, %v4354
        %v4356 = vsel %vm4328, %v2569, %v2560
        %v4357 = vsel %vm4330, %v2578, %v4356
        %v4358 = vsel %vm4332, %v2587, %v4357
        %v4359 = vsel %vm4334, %v2596, %v4358
        %v4360 = vsel %vm4336, %v2605, %v4359
        %v4361 = vsel %vm4338, %v2614, %v4360
        %v4362 = vsel %vm4340, %v2623, %v4361
        %v4363 = vsel %vm2335, %v4341, 0
        %v4365 = vsel %vm2335, %v4348, 0
        %v4367 = vsel %vm2335, %v4355, 0
        %v4369 = vsel %vm2335, %v4362, 0
        %4371 = vmatprep.subr.mxu0 0.0
        %4372 = vmatpush1.msra.mxu0 0.0
        %4373 = vmatprep.subr.mxu0 0.0
        %4374 = vmatpush1.msra.mxu0 0.0
        %4375 = vmatprep.subr.mxu0 0.0
        %4376 = vmatpush1.msra.mxu0 0.0
        %4377 = vmatprep.subr.mxu0 0.0
        %4378 = vmatpush1.msra.mxu0 0.0
        %4379 = vmatprep.subr.mxu0 0.0
        %4380 = vmatpush1.msra.mxu0 0.0
        %4381 = vmatprep.subr.mxu0 0.0
        %4382 = vmatpush1.msra.mxu0 0.0
        %4383 = vmatprep.subr.mxu0 0.0
        %4384 = vmatpush1.msra.mxu0 0.0
        %4385 = vmatprep.subr.mxu0 0.0
        %4386 = vmatpush1.msra.mxu0 0.0
        %4387 = vmatprep.subr.mxu0 0.0
        %4388 = vmatpush1.msra.mxu0 %v4295
        %4389 = vmatprep.subr.mxu0 0.0
        %4390 = vmatpush1.msra.mxu0 %v4294
        %4391 = vmatprep.subr.mxu0 0.0
        %4392 = vmatpush1.msra.mxu0 %v4293
        %4393 = vmatprep.subr.mxu0 0.0
        %4394 = vmatpush1.msra.mxu0 %v4292
        %4395 = vmatprep.subr.mxu0 0.0
        %4396 = vmatpush1.msra.mxu0 %v4291
        %4397 = vmatprep.subr.mxu0 0.0
        %4398 = vmatpush1.msra.mxu0 %v4290
        %4399 = vmatprep.subr.mxu0 0.0
        %4400 = vmatpush1.msra.mxu0 %v4289
        %4401 = vmatprep.subr.mxu0 0.0
        %4402 = vmatpush1.msra.mxu0 %v4288
        %4403 = vmatprep.subr.mxu0 0.0
        %4404 = vmatpush2.msra.mxu0 0.0
        %4405 = vmatprep.subr.mxu0 0.0
        %4406 = vmatpush2.msra.mxu0 0.0
        %4407 = vmatprep.subr.mxu0 0.0
        %4408 = vmatpush2.msra.mxu0 0.0
        %4409 = vmatprep.subr.mxu0 0.0
        %4410 = vmatpush2.msra.mxu0 0.0
        %4411 = vmatprep.subr.mxu0 0.0
        %4412 = vmatpush2.msra.mxu0 0.0
        %4413 = vmatprep.subr.mxu0 0.0
        %4414 = vmatpush2.msra.mxu0 0.0
        %4415 = vmatprep.subr.mxu0 0.0
        %4416 = vmatpush2.msra.mxu0 0.0
        %4417 = vmatprep.subr.mxu0 0.0
        %4418 = vmatpush2.msra.mxu0 0.0
        %4419 = vmatprep.subr.mxu0 0.0
        %4420 = vmatpush2.msra.mxu0 0.0
        %4421 = vmatprep.subr.mxu0 0.0
        %4422 = vmatpush2.msra.mxu0 0.0
        %4423 = vmatprep.subr.mxu0 0.0
        %4424 = vmatpush2.msra.mxu0 0.0
        %4425 = vmatprep.subr.mxu0 0.0
        %4426 = vmatpush2.msra.mxu0 0.0
        %4427 = vmatprep.subr.mxu0 0.0
        %4428 = vmatpush2.msra.mxu0 0.0
        %4429 = vmatprep.subr.mxu0 0.0
        %4430 = vmatpush2.msra.mxu0 0.0
        %4431 = vmatprep.subr.mxu0 0.0
        %4432 = vmatpush2.msra.mxu0 0.0
        %4433 = vmatprep.subr.mxu0 0.0
        %4434 = vmatpush2.msra.mxu0 0.0
        %4435 = vmatprep.mubr.f32.mxu0 0.0
        %4436 = vmatmul.mubr.f32.gmra.mxu0 %v4363
        %v4437 = vpop.f32.mrf.mxu0
        %v4438 = vadd.f32 0.0, %v4437
        %v4439 = vpop.f32.mrf.mxu0
        %4440 = vmatprep.mubr.f32.mxu0 0.0
        %4441 = vmatmul.mubr.f32.gmra.mxu0 %v4365
        %v4442 = vpop.f32.mrf.mxu0
        %v4443 = vadd.f32 0.0, %v4442
        %v4444 = vpop.f32.mrf.mxu0
        %4445 = vmatprep.mubr.f32.mxu0 0.0
        %4446 = vmatmul.mubr.f32.gmra.mxu0 %v4367
        %v4447 = vpop.f32.mrf.mxu0
        %v4448 = vadd.f32 0.0, %v4447
        %v4449 = vpop.f32.mrf.mxu0
        %4450 = vmatprep.mubr.f32.mxu0 0.0
        %4451 = vmatmul.mubr.f32.gmra.mxu0 %v4369
        %v4452 = vpop.f32.mrf.mxu0
        %v4453 = vadd.f32 0.0, %v4452
        %v4454 = vpop.f32.mrf.mxu0
        %4455 = vdwg.mxu0
        %v4457 = vsel %vm1693, %v960, 0
        %v4460 = vsel %vm1693, %v961, 0
        %v4463 = vsel %vm1693, %v962, 0
        %v4466 = vsel %vm1693, %v963, 0
        %4468 = vmatprep.subr.mxu0 0.0
        %4469 = vmatpush1.msra.mxu0 0.0
        %4470 = vmatprep.subr.mxu0 0.0
        %4471 = vmatpush1.msra.mxu0 0.0
        %4472 = vmatprep.subr.mxu0 0.0
        %4473 = vmatpush1.msra.mxu0 0.0
        %4474 = vmatprep.subr.mxu0 0.0
        %4475 = vmatpush1.msra.mxu0 0.0
        %4476 = vmatprep.subr.mxu0 0.0
        %4477 = vmatpush1.msra.mxu0 0.0
        %4478 = vmatprep.subr.mxu0 0.0
        %4479 = vmatpush1.msra.mxu0 0.0
        %4480 = vmatprep.subr.mxu0 0.0
        %4481 = vmatpush1.msra.mxu0 0.0
        %4482 = vmatprep.subr.mxu0 0.0
        %4483 = vmatpush1.msra.mxu0 0.0
        %4484 = vmatprep.subr.mxu0 0.0
        %4485 = vmatpush1.msra.mxu0 0.0
        %4486 = vmatprep.subr.mxu0 0.0
        %4487 = vmatpush1.msra.mxu0 0.0
        %4488 = vmatprep.subr.mxu0 0.0
        %4489 = vmatpush1.msra.mxu0 0.0
        %4490 = vmatprep.subr.mxu0 0.0
        %4491 = vmatpush1.msra.mxu0 0.0
        %4492 = vmatprep.subr.mxu0 0.0
        %4493 = vmatpush1.msra.mxu0 %v4287
        %4494 = vmatprep.subr.mxu0 0.0
        %4495 = vmatpush1.msra.mxu0 %v4286
        %4496 = vmatprep.subr.mxu0 0.0
        %4497 = vmatpush1.msra.mxu0 %v4285
        %4498 = vmatprep.subr.mxu0 0.0
        %4499 = vmatpush1.msra.mxu0 %v4284
        %4500 = vmatprep.subr.mxu0 0.0
        %4501 = vmatpush2.msra.mxu0 0.0
        %4502 = vmatprep.subr.mxu0 0.0
        %4503 = vmatpush2.msra.mxu0 0.0
        %4504 = vmatprep.subr.mxu0 0.0
        %4505 = vmatpush2.msra.mxu0 0.0
        %4506 = vmatprep.subr.mxu0 0.0
        %4507 = vmatpush2.msra.mxu0 0.0
        %4508 = vmatprep.subr.mxu0 0.0
        %4509 = vmatpush2.msra.mxu0 0.0
        %4510 = vmatprep.subr.mxu0 0.0
        %4511 = vmatpush2.msra.mxu0 0.0
        %4512 = vmatprep.subr.mxu0 0.0
        %4513 = vmatpush2.msra.mxu0 0.0
        %4514 = vmatprep.subr.mxu0 0.0
        %4515 = vmatpush2.msra.mxu0 0.0
        %4516 = vmatprep.subr.mxu0 0.0
        %4517 = vmatpush2.msra.mxu0 0.0
        %4518 = vmatprep.subr.mxu0 0.0
        %4519 = vmatpush2.msra.mxu0 0.0
        %4520 = vmatprep.subr.mxu0 0.0
        %4521 = vmatpush2.msra.mxu0 0.0
        %4522 = vmatprep.subr.mxu0 0.0
        %4523 = vmatpush2.msra.mxu0 0.0
        %4524 = vmatprep.subr.mxu0 0.0
        %4525 = vmatpush2.msra.mxu0 0.0
        %4526 = vmatprep.subr.mxu0 0.0
        %4527 = vmatpush2.msra.mxu0 0.0
        %4528 = vmatprep.subr.mxu0 0.0
        %4529 = vmatpush2.msra.mxu0 0.0
        %4530 = vmatprep.subr.mxu0 0.0
        %4531 = vmatpush2.msra.mxu0 0.0
        %4532 = vmatprep.mubr.f32.mxu0 0.0
        %4533 = vmatmul.mubr.f32.gmra.mxu0 %v4457
        %v4534 = vpop.f32.mrf.mxu0
        %v4535 = vadd.f32 %v4438, %v4534
        %v4536 = vpop.f32.mrf.mxu0
        %4537 = vmatprep.mubr.f32.mxu0 0.0
        %4538 = vmatmul.mubr.f32.gmra.mxu0 %v4460
        %v4539 = vpop.f32.mrf.mxu0
        %v4540 = vadd.f32 %v4443, %v4539
        %v4541 = vpop.f32.mrf.mxu0
        %4542 = vmatprep.mubr.f32.mxu0 0.0
        %4543 = vmatmul.mubr.f32.gmra.mxu0 %v4463
        %v4544 = vpop.f32.mrf.mxu0
        %v4545 = vadd.f32 %v4448, %v4544
        %v4546 = vpop.f32.mrf.mxu0
        %4547 = vmatprep.mubr.f32.mxu0 0.0
        %4548 = vmatmul.mubr.f32.gmra.mxu0 %v4466
        %v4549 = vpop.f32.mrf.mxu0
        %v4550 = vadd.f32 %v4453, %v4549
        %v4551 = vpop.f32.mrf.mxu0
        %4552 = vdwg.mxu0
        %v4553 = vld [vmem:[%s14] sm:$0xff]
        %v4554 = vld [vmem:[%s14 + $0x8] sm:$0xff]
        %v4555 = vld [vmem:[%s14 + $0x10] sm:$0xff]
        %v4556 = vld [vmem:[%s14 + $0x18] sm:$0xff]
        %v4557 = vld [vmem:[%s14 + $0x20] sm:$0xff]
        %v4558 = vld [vmem:[%s14 + $0x28] sm:$0xff]
        %v4559 = vld [vmem:[%s14 + $0x30] sm:$0xff]
        %v4560 = vld [vmem:[%s14 + $0x38] sm:$0xff]
        %v4593 = vsel %vm4328, %v4013, %v4004
        %v4594 = vsel %vm4330, %v4022, %v4593
        %v4595 = vsel %vm4332, %v4031, %v4594
        %v4596 = vsel %vm4334, %v4040, %v4595
        %v4597 = vsel %vm4336, %v4049, %v4596
        %v4598 = vsel %vm4338, %v4058, %v4597
        %v4599 = vsel %vm4340, %v4067, %v4598
        %v4600 = vsel %vm4328, %v4085, %v4076
        %v4601 = vsel %vm4330, %v4094, %v4600
        %v4602 = vsel %vm4332, %v4103, %v4601
        %v4603 = vsel %vm4334, %v4112, %v4602
        %v4604 = vsel %vm4336, %v4121, %v4603
        %v4605 = vsel %vm4338, %v4130, %v4604
        %v4606 = vsel %vm4340, %v4139, %v4605
        %v4607 = vsel %vm4328, %v4157, %v4148
        %v4608 = vsel %vm4330, %v4166, %v4607
        %v4609 = vsel %vm4332, %v4175, %v4608
        %v4610 = vsel %vm4334, %v4184, %v4609
        %v4611 = vsel %vm4336, %v4193, %v4610
        %v4612 = vsel %vm4338, %v4202, %v4611
        %v4613 = vsel %vm4340, %v4211, %v4612
        %v4614 = vsel %vm4328, %v4229, %v4220
        %v4615 = vsel %vm4330, %v4238, %v4614
        %v4616 = vsel %vm4332, %v4247, %v4615
        %v4617 = vsel %vm4334, %v4256, %v4616
        %v4618 = vsel %vm4336, %v4265, %v4617
        %v4619 = vsel %vm4338, %v4274, %v4618
        %v4620 = vsel %vm4340, %v4283, %v4619
        %v4621 = vsel %vm2335, %v4599, 0
        %v4623 = vsel %vm2335, %v4606, 0
        %v4625 = vsel %vm2335, %v4613, 0
        %v4627 = vsel %vm2335, %v4620, 0
        %4629 = vmatprep.subr.mxu0 0.0
        %4630 = vmatpush1.msra.mxu0 0.0
        %4631 = vmatprep.subr.mxu0 0.0
        %4632 = vmatpush1.msra.mxu0 0.0
        %4633 = vmatprep.subr.mxu0 0.0
        %4634 = vmatpush1.msra.mxu0 0.0
        %4635 = vmatprep.subr.mxu0 0.0
        %4636 = vmatpush1.msra.mxu0 0.0
        %4637 = vmatprep.subr.mxu0 0.0
        %4638 = vmatpush1.msra.mxu0 0.0
        %4639 = vmatprep.subr.mxu0 0.0
        %4640 = vmatpush1.msra.mxu0 0.0
        %4641 = vmatprep.subr.mxu0 0.0
        %4642 = vmatpush1.msra.mxu0 0.0
        %4643 = vmatprep.subr.mxu0 0.0
        %4644 = vmatpush1.msra.mxu0 0.0
        %4645 = vmatprep.subr.mxu0 0.0
        %4646 = vmatpush1.msra.mxu0 %v4560
        %4647 = vmatprep.subr.mxu0 0.0
        %4648 = vmatpush1.msra.mxu0 %v4559
        %4649 = vmatprep.subr.mxu0 0.0
        %4650 = vmatpush1.msra.mxu0 %v4558
        %4651 = vmatprep.subr.mxu0 0.0
        %4652 = vmatpush1.msra.mxu0 %v4557
        %4653 = vmatprep.subr.mxu0 0.0
        %4654 = vmatpush1.msra.mxu0 %v4556
        %4655 = vmatprep.subr.mxu0 0.0
        %4656 = vmatpush1.msra.mxu0 %v4555
        %4657 = vmatprep.subr.mxu0 0.0
        %4658 = vmatpush1.msra.mxu0 %v4554
        %4659 = vmatprep.subr.mxu0 0.0
        %4660 = vmatpush1.msra.mxu0 %v4553
        %4661 = vmatprep.subr.mxu0 0.0
        %4662 = vmatpush2.msra.mxu0 0.0
        %4663 = vmatprep.subr.mxu0 0.0
        %4664 = vmatpush2.msra.mxu0 0.0
        %4665 = vmatprep.subr.mxu0 0.0
        %4666 = vmatpush2.msra.mxu0 0.0
        %4667 = vmatprep.subr.mxu0 0.0
        %4668 = vmatpush2.msra.mxu0 0.0
        %4669 = vmatprep.subr.mxu0 0.0
        %4670 = vmatpush2.msra.mxu0 0.0
        %4671 = vmatprep.subr.mxu0 0.0
        %4672 = vmatpush2.msra.mxu0 0.0
        %4673 = vmatprep.subr.mxu0 0.0
        %4674 = vmatpush2.msra.mxu0 0.0
        %4675 = vmatprep.subr.mxu0 0.0
        %4676 = vmatpush2.msra.mxu0 0.0
        %4677 = vmatprep.subr.mxu0 0.0
        %4678 = vmatpush2.msra.mxu0 0.0
        %4679 = vmatprep.subr.mxu0 0.0
        %4680 = vmatpush2.msra.mxu0 0.0
        %4681 = vmatprep.subr.mxu0 0.0
        %4682 = vmatpush2.msra.mxu0 0.0
        %4683 = vmatprep.subr.mxu0 0.0
        %4684 = vmatpush2.msra.mxu0 0.0
        %4685 = vmatprep.subr.mxu0 0.0
        %4686 = vmatpush2.msra.mxu0 0.0
        %4687 = vmatprep.subr.mxu0 0.0
        %4688 = vmatpush2.msra.mxu0 0.0
        %4689 = vmatprep.subr.mxu0 0.0
        %4690 = vmatpush2.msra.mxu0 0.0
        %4691 = vmatprep.subr.mxu0 0.0
        %4692 = vmatpush2.msra.mxu0 0.0
        %4693 = vmatprep.mubr.f32.mxu0 0.0
        %4694 = vmatmul.mubr.f32.gmra.mxu0 %v4621
        %v4695 = vpop.f32.mrf.mxu0
        %v4696 = vadd.f32 0.0, %v4695
        %v4697 = vpop.f32.mrf.mxu0
        %4698 = vmatprep.mubr.f32.mxu0 0.0
        %4699 = vmatmul.mubr.f32.gmra.mxu0 %v4623
        %v4700 = vpop.f32.mrf.mxu0
        %v4701 = vadd.f32 0.0, %v4700
        %v4702 = vpop.f32.mrf.mxu0
        %4703 = vmatprep.mubr.f32.mxu0 0.0
        %4704 = vmatmul.mubr.f32.gmra.mxu0 %v4625
        %v4705 = vpop.f32.mrf.mxu0
        %v4706 = vadd.f32 0.0, %v4705
        %v4707 = vpop.f32.mrf.mxu0
        %4708 = vmatprep.mubr.f32.mxu0 0.0
        %4709 = vmatmul.mubr.f32.gmra.mxu0 %v4627
        %v4710 = vpop.f32.mrf.mxu0
        %v4711 = vadd.f32 0.0, %v4710
        %v4712 = vpop.f32.mrf.mxu0
        %4713 = vdwg.mxu0
        %v4714 = vadd.f32 %v4535, %v4696
        %v4715 = vadd.f32 %v4540, %v4701
        %v4716 = vadd.f32 %v4545, %v4706
        %v4717 = vadd.f32 %v4550, %v4711
        %v4718 = vld [vmem:[%s15] sm:$0x1]
        %v4720 = vlaneseq
        %v4721 = vshrl.u32 %v4720, 7
        %v4722 = vsub.s32 0, %v4721
        %v4723 = vrot.slane %v4718, %v4722
        %v4725 = vadd.f32 %v4714, %v4723
        %v4726 = vadd.f32 %v4715, %v4723
        %v4727 = vadd.f32 %v4716, %v4723
        %v4728 = vadd.f32 %v4717, %v4723
        %v4729 = vmax.f32 %v4725, 0.0
        %v4730 = vmax.f32 %v4726, 0.0
        %v4731 = vmax.f32 %v4727, 0.0
        %v4732 = vmax.f32 %v4728, 0.0
        %4733 = vst [vmem:[%s801] sm:$0xff] %v4729
        %4734 = vst [vmem:[%s801 + $0x8] sm:$0xff] %v4730
        %4735 = vst [vmem:[%s801 + $0x10] sm:$0xff] %v4731
        %4736 = vst [vmem:[%s801 + $0x18] sm:$0xff] %v4732
        %4737 = vst.msk [vmem:[%s794] sm:$0xff] %vm1693, %v960
        %4738 = vst.msk [vmem:[%s794 + $0x10] sm:$0xff] %vm1693, %v961
        %4739 = vst.msk [vmem:[%s794 + $0x20] sm:$0xff] %vm1693, %v962
        %4740 = vst.msk [vmem:[%s794 + $0x30] sm:$0xff] %vm1693, %v963
        %4741 = vrot.lane.b32.xlu0 %v4341, 32
        %v4742 = vpop.permute.xlu0 %4741
        %4743 = vrot.lane.b32.xlu0 %v4348, 32
        %v4744 = vpop.permute.xlu0 %4743
        %4745 = vrot.lane.b32.xlu0 %v4355, 32
        %v4746 = vpop.permute.xlu0 %4745
        %4747 = vrot.lane.b32.xlu0 %v4362, 32
        %v4748 = vpop.permute.xlu0 %4747
        %vm4753 = vcmask 785664
        %4754 = vst.msk [vmem:[%s794] sm:$0xff] %vm4753, %v4742
        %4755 = vst.msk [vmem:[%s794 + $0x10] sm:$0xff] %vm4753, %v4744
        %4756 = vst.msk [vmem:[%s794 + $0x20] sm:$0xff] %vm4753, %v4746
        %4757 = vst.msk [vmem:[%s794 + $0x30] sm:$0xff] %vm4753, %v4748
        %4758 = vrot.lane.b32.xlu0 %v4599, 96
        %v4759 = vpop.permute.xlu0 %4758
        %4760 = vrot.lane.b32.xlu0 %v4606, 96
        %v4761 = vpop.permute.xlu0 %4760
        %4762 = vrot.lane.b32.xlu0 %v4613, 96
        %v4763 = vpop.permute.xlu0 %4762
        %4764 = vrot.lane.b32.xlu0 %v4620, 96
        %v4765 = vpop.permute.xlu0 %4764
        %vm4770 = vcmask 1048320
        %4771 = vst.msk [vmem:[%s794] sm:$0xff] %vm4770, %v4759
        %4772 = vst.msk [vmem:[%s794 + $0x8] sm:$0xff] %vm1693, %v4759
        %4773 = vst.msk [vmem:[%s794 + $0x10] sm:$0xff] %vm4770, %v4761
        %4774 = vst.msk [vmem:[%s794 + $0x18] sm:$0xff] %vm1693, %v4761
        %4775 = vst.msk [vmem:[%s794 + $0x20] sm:$0xff] %vm4770, %v4763
        %4776 = vst.msk [vmem:[%s794 + $0x28] sm:$0xff] %vm1693, %v4763
        %4777 = vst.msk [vmem:[%s794 + $0x30] sm:$0xff] %vm4770, %v4765
        %4778 = vst.msk [vmem:[%s794 + $0x38] sm:$0xff] %vm1693, %v4765
        %s4779 = sand.u32 %s399, 1
        %s4780 = scalar_lea.sflag [#allocation5], %s4779
        %s4781 = sand.u32 %s399, 1
        %s4782 = smul.addr %s4781, 64
        %s4783 = scalar_lea.vmem [#allocation4], %s4782
        %s4784 = sand.u32 %s425, 1
        %s4785 = scalar_lea.sflag [#allocation7], %s4784
        %s4786 = sand.u32 %s425, 1
        %s4787 = smul.addr %s4786, 32
        %s4788 = scalar_lea.vmem [#allocation6], %s4787
        // Predicated region
        $region161: #{tpu_custom_call.1} parent=151 // pred_check
          %p4789 = pneg %p409
        $region162: #{tpu_custom_call.1} parent=151 // pred_check_branch
          %4791 = sbr.rel (%p4789) target = $region164
        $region163: #{tpu_custom_call.1} parent=151 // pred_region
          %s4792 = smul.u32 4, %s35
          %s4794 = ssub.s32 1024, 1024
          %4795 = vsyncadd %s4780, %s4794
          %s4796 = smul.addr %s4792, 2
          %s4797 = smul.addr %s4796, 128
          %s4798 = scalar_lea.hbm %s16, %s4797
          %s4799 = sshll.u32 %s4783, 4
          %s4800 = int_to_ptr.vmem [resolvable:$true] %s4799
          %4805 = dma.vmem_to_hbm [thread:$0]  %s4800, 1024, %s4798, %s4780, 256, 256, 16
        $region164: #{tpu_custom_call.1} parent=151 // pred_fallthru
          _
        // Predicated region
        $region165: #{tpu_custom_call.1} parent=151 // pred_check
          %p4806 = pneg %p435
        $region166: #{tpu_custom_call.1} parent=151 // pred_check_branch
          %4808 = sbr.rel (%p4806) target = $region168
        $region167: #{tpu_custom_call.1} parent=151 // pred_region
          %s4809 = smul.u32 4, %s35
          %s4811 = ssub.s32 512, 512
          %4812 = vsyncadd %s4785, %s4811
          %s4813 = smul.addr %s4809, 128
          %s4814 = scalar_lea.hbm %s17, %s4813
          %s4815 = sshll.u32 %s4788, 4
          %s4816 = int_to_ptr.vmem [resolvable:$true] %s4815
          %4821 = dma.vmem_to_hbm [thread:$0]  %s4816, 512, %s4814, %s4785, 128, 128, 8
        $region168: #{tpu_custom_call.1} parent=151 // pred_fallthru
          _
      $region152: #{tpu_custom_call.1} parent=5 // pred_fallthru
        _
      %p4822 = scmp.le.s32.totalorder 2, %s30
      // Predicated region
      $region169: #{tpu_custom_call.1} parent=5 // pred_check
        %p4823 = pneg %p4822
      $region170: #{tpu_custom_call.1} parent=5 // pred_check_branch
        %4825 = sbr.rel (%p4823) target = $region172
      $region171: #{tpu_custom_call.1} parent=5 // pred_region
        %s4826 = ssub.s32 %s30, 2
        // Predicated region
        $region173: #{tpu_custom_call.1} parent=171 // pred_check
          %p4827 = pneg %p415
        $region174: #{tpu_custom_call.1} parent=171 // pred_check_branch
          %4829 = sbr.rel (%p4827) target = $region176
        $region175: #{tpu_custom_call.1} parent=171 // pred_region
          %s4830 = sand.u32 %s400, 1
          %s4831 = scalar_lea.sflag [#allocation5], %s4830
          %s4832 = sand.u32 %s400, 1
          %s4833 = smul.addr %s4832, 64
          %s4834 = scalar_lea.vmem [#allocation4], %s4833
          %4835 = dma.done %s4831, 1024
        $region176: #{tpu_custom_call.1} parent=171 // pred_fallthru
          _
        // Predicated region
        $region177: #{tpu_custom_call.1} parent=171 // pred_check
          %p4836 = pneg %p441
        $region178: #{tpu_custom_call.1} parent=171 // pred_check_branch
          %4838 = sbr.rel (%p4836) target = $region180
        $region179: #{tpu_custom_call.1} parent=171 // pred_region
          %s4839 = sand.u32 %s426, 1
          %s4840 = scalar_lea.sflag [#allocation7], %s4839
          %s4841 = sand.u32 %s426, 1
          %s4842 = smul.addr %s4841, 32
          %s4843 = scalar_lea.vmem [#allocation6], %s4842
          %4844 = dma.done %s4840, 512
        $region180: #{tpu_custom_call.1} parent=171 // pred_fallthru
          _
      $region172: #{tpu_custom_call.1} parent=5 // pred_fallthru
        _
    $region6: #{tpu_custom_call.1} parent=1 // loop_footer
      %s34 = sadd.s32 1, %s30
    $region7: #{tpu_custom_call.1} parent=1 // loop_footer_branch
      %29 = sbr.rel target = $region3
    $region8: #{tpu_custom_call.1} parent=1 // loop_exit
      _
    %4845 = vsyncpa [#allocation5], 1
    %s4846 = scalar_lea.sflag [#allocation5], 1
    %4847 = vsyncpa %s4846, 1
    %4848 = vsyncpa [#allocation7], 1
    %s4849 = scalar_lea.sflag [#allocation7], 1
    %4850 = vsyncpa %s4849, 1

</llo_original>
